<compile_context>
chip_gen: v5e
topology: v5e:2x2
jax: 0.10.0
libtpu: 0.0.40
codegen_flags: <defaults>
</compile_context>

<pallas_src>
import jax
import jax.numpy as jnp
from jax.experimental import pallas as pl
from jax.experimental.pallas import tpu as pltpu

LANE = 128


def _round_up(n, m):
    return ((n + m - 1) // m) * m


def vae_kernel(x_ref, eps_ref,
               w1_ref, b1_ref, w23_ref, b23_ref,
               w4_ref, b4_ref, w5_ref, b5_ref,
               xr_ref, mulv_ref):
    x = x_ref[...].astype(jnp.bfloat16)   # f32 [TB, x_dim] streamed, cast in-kernel
    eps = eps_ref[...]                     # f32 [TB, 128]  (lanes >= z_dim are zero)
    z_blk = eps_ref.shape[-1]              # 128

    # ---- encode: h = relu(x @ W1 + b1) ----
    h = jnp.dot(x, w1_ref[...], preferred_element_type=jnp.float32) + b1_ref[...]
    h = jnp.maximum(h, 0.0)

    # ---- fused mu|log_var projection (one MXU pass, lane-dense [TB, 256] output) ----
    mulv = jnp.dot(h.astype(jnp.bfloat16), w23_ref[...],
                   preferred_element_type=jnp.float32) + b23_ref[...]
    mulv_ref[...] = mulv

    mu = mulv[:, :z_blk]           # lanes [0, 128)
    log_var = mulv[:, z_blk:]      # lanes [128, 256)

    # ---- reparameterize at full 128-lane width (padded lanes: mu=0, eps=0 -> z=0) ----
    z = mu + eps * jnp.exp(log_var * 0.5)

    # ---- decode: xr = sigmoid(relu(z @ W4 + b4) @ W5 + b5) ----
    h2 = jnp.dot(z.astype(jnp.bfloat16), w4_ref[...],
                 preferred_element_type=jnp.float32) + b4_ref[...]
    h2 = jnp.maximum(h2, 0.0)
    logits = jnp.dot(h2.astype(jnp.bfloat16), w5_ref[...],
                     preferred_element_type=jnp.float32) + b5_ref[...]
    xr_ref[...] = jax.nn.sigmoid(logits).astype(xr_ref.dtype)


def prepare_params(params, x_dim, z_dim):
    """One-time packing: bf16 weights, h_dim padded to 512, fused+128-padded
    mu/log_var projection, W4 padded to a full 128-row (z) block. All pads zero."""
    h_dim = params["w1"].shape[1]
    h_pad = _round_up(h_dim, 256)          # 400 -> 512: MXU/vreg remainder-free
    z_blk = _round_up(z_dim, LANE)         # 20  -> 128
    bf, f32 = jnp.bfloat16, jnp.float32

    w1 = jnp.zeros((x_dim, h_pad), bf).at[:, :h_dim].set(params["w1"].astype(bf))
    b1 = jnp.zeros((1, h_pad), f32).at[:, :h_dim].set(params["b1"])

    w23 = jnp.zeros((h_pad, 2 * z_blk), bf)
    w23 = w23.at[:h_dim, :z_dim].set(params["w2"].astype(bf))
    w23 = w23.at[:h_dim, z_blk:z_blk + z_dim].set(params["w3"].astype(bf))
    b23 = jnp.zeros((1, 2 * z_blk), f32)
    b23 = b23.at[:, :z_dim].set(params["b2"])
    b23 = b23.at[:, z_blk:z_blk + z_dim].set(params["b3"])

    w4 = jnp.zeros((z_blk, h_pad), bf).at[:z_dim, :h_dim].set(params["w4"].astype(bf))
    b4 = jnp.zeros((1, h_pad), f32).at[:, :h_dim].set(params["b4"])

    w5 = jnp.zeros((h_pad, x_dim), bf).at[:h_dim].set(params["w5"].astype(bf))
    b5 = params["b5"].astype(f32)

    return dict(w1=w1, b1=b1, w23=w23, b23=b23, w4=w4, b4=b4, w5=w5, b5=b5,
                h_pad=h_pad, z_blk=z_blk)


def vae_forward(x, eps, packed, *, tile_b=512, out_dtype=jnp.bfloat16):
    """x: [B, x_dim] f32, eps: [B, z_dim] f32, packed: output of prepare_params.
    Returns (x_reconst, mu, log_var)."""
    B, x_dim = x.shape
    z_dim = eps.shape[1]
    z_blk = packed["z_blk"]
    mulv_w = 2 * z_blk

    # eps zero-padded to a full 128-lane group (tiny f32 array) so the reparam and
    # z@W4 path is lane-dense; padded z lanes stay exactly zero (mu_pad=0, eps_pad=0).
    eps_p = jnp.zeros((B, z_blk), jnp.float32).at[:, :z_dim].set(eps.astype(jnp.float32))

    # Batch tiling:
    #   B <= 64           -> single full-array block (no padding, minimal overhead)
    #   64 < B <= 2*tile_b -> 2 grid steps so v7x's second TensorCore is used
    #   else              -> tile_b-row tiles (deep pipeline, ~85% HBM roofline class)
    if B <= 64:
        tb = B
    elif B <= 2 * tile_b:
        tb = _round_up(pl.cdiv(B, 2), 16)
    else:
        tb = tile_b
    n_blocks = pl.cdiv(B, tb)   # partial last block handled by Pallas (masked writes)

    def row_spec(cols):
        return pl.BlockSpec((tb, cols), lambda i: (i, 0))

    def resident_spec(shape):
        # Constant index_map: weight tile stays resident in VMEM across grid steps.
        return pl.BlockSpec(shape, lambda i: (0, 0))

    xr, mulv = pl.pallas_call(
        vae_kernel,
        grid=(n_blocks,),
        in_specs=[
            row_spec(x_dim),                       # x  (f32, full-width rows)
            row_spec(z_blk),                       # eps (f32, 128 lanes)
            resident_spec(packed["w1"].shape),
            resident_spec(packed["b1"].shape),
            resident_spec(packed["w23"].shape),
            resident_spec(packed["b23"].shape),
            resident_spec(packed["w4"].shape),
            resident_spec(packed["b4"].shape),
            resident_spec(packed["w5"].shape),
            resident_spec(packed["b5"].shape),
        ],
        out_specs=(row_spec(x_dim), row_spec(mulv_w)),
        out_shape=(jax.ShapeDtypeStruct((B, x_dim), out_dtype),     # xr (bf16)
                   jax.ShapeDtypeStruct((B, mulv_w), jnp.float32)), # mu|log_var
        compiler_params=pltpu.CompilerParams(
            dimension_semantics=("parallel",),
            vmem_limit_bytes=32 << 20),
    )(x.astype(jnp.float32), eps_p,
      packed["w1"], packed["b1"], packed["w23"], packed["b23"],
      packed["w4"], packed["b4"], packed["w5"], packed["b5"])

    mu = mulv[:, :z_dim]
    log_var = mulv[:, z_blk:z_blk + z_dim]
    return xr, mu, log_var


def init_params(key, x_dim, h_dim, z_dim):
    """Deterministic synthetic parameter init (shapes match the nn.Linear layers)."""
    ks = jax.random.split(key, 10)

    def lin(kw, kb, fan_in, fan_out):
        bound = 1.0 / jnp.sqrt(fan_in)
        w = jax.random.uniform(kw, (fan_in, fan_out), jnp.float32, -bound, bound)
        b = jax.random.uniform(kb, (1, fan_out), jnp.float32, -bound, bound)
        return w, b

    w1, b1 = lin(ks[0], ks[1], x_dim, h_dim)   # fc1
    w2, b2 = lin(ks[2], ks[3], h_dim, z_dim)   # fc2 (mu)
    w3, b3 = lin(ks[4], ks[5], h_dim, z_dim)   # fc3 (log_var)
    w4, b4 = lin(ks[6], ks[7], z_dim, h_dim)   # fc4
    w5, b5 = lin(ks[8], ks[9], h_dim, x_dim)   # fc5
    return dict(w1=w1, b1=b1, w2=w2, b2=b2, w3=w3, b3=b3,
                w4=w4, b4=b4, w5=w5, b5=b5)


def vae_ref(x, eps, p):
    """Pure-JAX reference matching the PyTorch forward semantics, mirroring the
    bf16-weight / bf16-operand, f32-accumulate matmul precision of the kernel."""
    bf, f32 = jnp.bfloat16, jnp.float32
    mm = lambda a, w: jnp.dot(a.astype(bf), w.astype(bf), preferred_element_type=f32)
    h = jax.nn.relu(mm(x, p["w1"]) + p["b1"])
    mu = mm(h, p["w2"]) + p["b2"]
    lv = mm(h, p["w3"]) + p["b3"]
    z = mu + eps * jnp.exp(lv / 2.0)
    h2 = jax.nn.relu(mm(z, p["w4"]) + p["b4"])
    xr = jax.nn.sigmoid(mm(h2, p["w5"]) + p["b5"])
    return xr, mu, lv


if __name__ == "__main__":
    # Default module dims, small batch.
    B, X_DIM, H_DIM, Z_DIM = 8, 28 * 28, 400, 20

    key = jax.random.PRNGKey(0)
    kx, keps, kp = jax.random.split(key, 3)

    x = jax.random.uniform(kx, (B, X_DIM), jnp.float32)       # image-like input in [0,1)
    eps = jax.random.normal(keps, (B, Z_DIM), jnp.float32)    # reparameterization noise
    params = init_params(kp, X_DIM, H_DIM, Z_DIM)

    packed = prepare_params(params, X_DIM, Z_DIM)

    # jit so the (tiny) wrapper prep/slice ops fuse into the caller's program.
    fwd = jax.jit(lambda xx, ee: vae_forward(xx, ee, packed))
    xr, mu, lv = fwd(x, eps)
    jax.block_until_ready((xr, mu, lv))

    # correctness check against bf16-mirrored pure-JAX reference
    xr_r, mu_r, lv_r = vae_ref(x, eps, params)
    xr_f32 = xr.astype(jnp.float32)
    # xr is stored in bf16 -> loosen tolerance accordingly; mu/log_var stay f32.
    assert jnp.allclose(xr_f32, xr_r, atol=1e-2, rtol=1e-2), float(jnp.max(jnp.abs(xr_f32 - xr_r)))
    assert jnp.allclose(mu, mu_r, atol=2e-3, rtol=2e-3), float(jnp.max(jnp.abs(mu - mu_r)))
    assert jnp.allclose(lv, lv_r, atol=2e-3, rtol=2e-3), float(jnp.max(jnp.abs(lv - lv_r)))

    print("KERNEL_OK")
</pallas_src>

<mosaic_0001>
module attributes {stable_mosaic.version = 11 : i64} {
  func.func @vae_kernel(%arg0: i32, %arg1: memref<8x784xf32, #tpu.memory_space<vmem>>, %arg2: memref<8x128xf32, #tpu.memory_space<vmem>>, %arg3: memref<784x512xbf16, #tpu.memory_space<vmem>>, %arg4: memref<1x512xf32, #tpu.memory_space<vmem>>, %arg5: memref<512x256xbf16, #tpu.memory_space<vmem>>, %arg6: memref<1x256xf32, #tpu.memory_space<vmem>>, %arg7: memref<128x512xbf16, #tpu.memory_space<vmem>>, %arg8: memref<1x512xf32, #tpu.memory_space<vmem>>, %arg9: memref<512x784xbf16, #tpu.memory_space<vmem>>, %arg10: memref<1x784xf32, #tpu.memory_space<vmem>>, %arg11: memref<8x784xbf16, #tpu.memory_space<vmem>>, %arg12: memref<8x256xf32, #tpu.memory_space<vmem>>) attributes {dimension_semantics = [#tpu.dimension_semantics<parallel>], iteration_bounds = array<i64: 1>, scalar_prefetch = 0 : i64, scratch_operands = 0 : i64, tpu.core_type = #tpu.core_type<tc>, window_params = [{transform_indices = @transform_0, window_bounds = array<i64: 8, 784>}, {transform_indices = @transform_1, window_bounds = array<i64: 8, 128>}, {pipeline_mode = #tpu.pipeline_mode<synchronous>, transform_indices = @transform_2, window_bounds = array<i64: 784, 512>}, {pipeline_mode = #tpu.pipeline_mode<synchronous>, transform_indices = @transform_3, window_bounds = array<i64: 1, 512>}, {pipeline_mode = #tpu.pipeline_mode<synchronous>, transform_indices = @transform_4, window_bounds = array<i64: 512, 256>}, {pipeline_mode = #tpu.pipeline_mode<synchronous>, transform_indices = @transform_5, window_bounds = array<i64: 1, 256>}, {pipeline_mode = #tpu.pipeline_mode<synchronous>, transform_indices = @transform_6, window_bounds = array<i64: 128, 512>}, {pipeline_mode = #tpu.pipeline_mode<synchronous>, transform_indices = @transform_7, window_bounds = array<i64: 1, 512>}, {pipeline_mode = #tpu.pipeline_mode<synchronous>, transform_indices = @transform_8, window_bounds = array<i64: 512, 784>}, {pipeline_mode = #tpu.pipeline_mode<synchronous>, transform_indices = @transform_9, window_bounds = array<i64: 1, 784>}, {transform_indices = @transform_10, window_bounds = array<i64: 8, 784>}, {transform_indices = @transform_11, window_bounds = array<i64: 8, 256>}]} {
    %c0 = arith.constant 0 : index
    %c0_0 = arith.constant 0 : index
    %0 = vector.load %arg1[%c0, %c0_0] : memref<8x784xf32, #tpu.memory_space<vmem>>, vector<8x784xf32>
    %1 = arith.truncf %0 : vector<8x784xf32> to vector<8x784xbf16>
    %c0_1 = arith.constant 0 : index
    %c0_2 = arith.constant 0 : index
    %2 = vector.load %arg2[%c0_1, %c0_2] : memref<8x128xf32, #tpu.memory_space<vmem>>, vector<8x128xf32>
    %c0_3 = arith.constant 0 : index
    %c0_4 = arith.constant 0 : index
    %3 = vector.load %arg3[%c0_3, %c0_4] : memref<784x512xbf16, #tpu.memory_space<vmem>>, vector<784x512xbf16>
    %cst = arith.constant dense<0.000000e+00> : vector<8x512xf32>
    %4 = tpu.matmul %1, %3, %cst {dimension_numbers = #tpu.dot_dimension_numbers<[1], [0], [0], [1], [0, 0, 1, 1], [], []>} : vector<8x784xbf16>, vector<784x512xbf16>, vector<8x512xf32> -> vector<8x512xf32>
    %c0_5 = arith.constant 0 : index
    %c0_6 = arith.constant 0 : index
    %5 = vector.load %arg4[%c0_5, %c0_6] : memref<1x512xf32, #tpu.memory_space<vmem>>, vector<1x512xf32>
    %6 = vector.broadcast %5 : vector<1x512xf32> to vector<8x512xf32>
    %7 = arith.addf %4, %6 : vector<8x512xf32>
    %cst_7 = arith.constant 0.000000e+00 : f32
    %8 = vector.broadcast %cst_7 : f32 to vector<8x512xf32>
    %9 = arith.maximumf %7, %8 : vector<8x512xf32>
    %10 = arith.truncf %9 : vector<8x512xf32> to vector<8x512xbf16>
    %c0_8 = arith.constant 0 : index
    %c0_9 = arith.constant 0 : index
    %11 = vector.load %arg5[%c0_8, %c0_9] : memref<512x256xbf16, #tpu.memory_space<vmem>>, vector<512x256xbf16>
    %cst_10 = arith.constant dense<0.000000e+00> : vector<8x256xf32>
    %12 = tpu.matmul %10, %11, %cst_10 {dimension_numbers = #tpu.dot_dimension_numbers<[1], [0], [0], [1], [0, 0, 1, 1], [], []>} : vector<8x512xbf16>, vector<512x256xbf16>, vector<8x256xf32> -> vector<8x256xf32>
    %c0_11 = arith.constant 0 : index
    %c0_12 = arith.constant 0 : index
    %13 = vector.load %arg6[%c0_11, %c0_12] : memref<1x256xf32, #tpu.memory_space<vmem>>, vector<1x256xf32>
    %14 = vector.broadcast %13 : vector<1x256xf32> to vector<8x256xf32>
    %15 = arith.addf %12, %14 : vector<8x256xf32>
    %c0_13 = arith.constant 0 : index
    %c0_14 = arith.constant 0 : index
    %16 = vector.load %arg12[%c0_13, %c0_14] : memref<8x256xf32, #tpu.memory_space<vmem>>, vector<8x256xf32>
    tpu.vector_store %arg12[%c0_13, %c0_14], %15 {strides = array<i32>} : memref<8x256xf32, #tpu.memory_space<vmem>>, vector<8x256xf32>,
    %17 = vector.extract_strided_slice %15 {offsets = [0, 0], sizes = [8, 128], strides = [1, 1]} : vector<8x256xf32> to vector<8x128xf32>
    %18 = vector.extract_strided_slice %15 {offsets = [0, 128], sizes = [8, 128], strides = [1, 1]} : vector<8x256xf32> to vector<8x128xf32>
    %cst_15 = arith.constant 5.000000e-01 : f32
    %19 = vector.broadcast %cst_15 : f32 to vector<8x128xf32>
    %20 = arith.mulf %18, %19 : vector<8x128xf32>
    %21 = math.exp %20 : vector<8x128xf32>
    %22 = arith.mulf %2, %21 : vector<8x128xf32>
    %23 = arith.addf %17, %22 : vector<8x128xf32>
    %24 = arith.truncf %23 : vector<8x128xf32> to vector<8x128xbf16>
    %c0_16 = arith.constant 0 : index
    %c0_17 = arith.constant 0 : index
    %25 = vector.load %arg7[%c0_16, %c0_17] : memref<128x512xbf16, #tpu.memory_space<vmem>>, vector<128x512xbf16>
    %cst_18 = arith.constant dense<0.000000e+00> : vector<8x512xf32>
    %26 = tpu.matmul %24, %25, %cst_18 {dimension_numbers = #tpu.dot_dimension_numbers<[1], [0], [0], [1], [0, 0, 1, 1], [], []>} : vector<8x128xbf16>, vector<128x512xbf16>, vector<8x512xf32> -> vector<8x512xf32>
    %c0_19 = arith.constant 0 : index
    %c0_20 = arith.constant 0 : index
    %27 = vector.load %arg8[%c0_19, %c0_20] : memref<1x512xf32, #tpu.memory_space<vmem>>, vector<1x512xf32>
    %28 = vector.broadcast %27 : vector<1x512xf32> to vector<8x512xf32>
    %29 = arith.addf %26, %28 : vector<8x512xf32>
    %cst_21 = arith.constant 0.000000e+00 : f32
    %30 = vector.broadcast %cst_21 : f32 to vector<8x512xf32>
    %31 = arith.maximumf %29, %30 : vector<8x512xf32>
    %32 = arith.truncf %31 : vector<8x512xf32> to vector<8x512xbf16>
    %c0_22 = arith.constant 0 : index
    %c0_23 = arith.constant 0 : index
    %33 = vector.load %arg9[%c0_22, %c0_23] : memref<512x784xbf16, #tpu.memory_space<vmem>>, vector<512x784xbf16>
    %cst_24 = arith.constant dense<0.000000e+00> : vector<8x784xf32>
    %34 = tpu.matmul %32, %33, %cst_24 {dimension_numbers = #tpu.dot_dimension_numbers<[1], [0], [0], [1], [0, 0, 1, 1], [], []>} : vector<8x512xbf16>, vector<512x784xbf16>, vector<8x784xf32> -> vector<8x784xf32>
    %c0_25 = arith.constant 0 : index
    %c0_26 = arith.constant 0 : index
    %35 = vector.load %arg10[%c0_25, %c0_26] : memref<1x784xf32, #tpu.memory_space<vmem>>, vector<1x784xf32>
    %36 = vector.broadcast %35 : vector<1x784xf32> to vector<8x784xf32>
    %37 = arith.addf %34, %36 : vector<8x784xf32>
    %38 = arith.negf %37 : vector<8x784xf32>
    %39 = math.exp %38 : vector<8x784xf32>
    %cst_27 = arith.constant 1.000000e+00 : f32
    %40 = vector.broadcast %cst_27 : f32 to vector<8x784xf32>
    %41 = arith.addf %40, %39 : vector<8x784xf32>
    %42 = arith.divf %40, %41 : vector<8x784xf32>
    %43 = arith.truncf %42 : vector<8x784xf32> to vector<8x784xbf16>
    %c0_28 = arith.constant 0 : index
    %c0_29 = arith.constant 0 : index
    %44 = vector.load %arg11[%c0_28, %c0_29] : memref<8x784xbf16, #tpu.memory_space<vmem>>, vector<8x784xbf16>
    tpu.vector_store %arg11[%c0_28, %c0_29], %43 {strides = array<i32>} : memref<8x784xbf16, #tpu.memory_space<vmem>>, vector<8x784xbf16>,
    return
  }
  func.func @transform_0(%arg0: i32) -> (i32, i32) {
    %c0_i32 = arith.constant 0 : i32
    %c0_i32_0 = arith.constant 0 : i32
    return %arg0, %c0_i32 : i32, i32
  }
  func.func @transform_1(%arg0: i32) -> (i32, i32) {
    %c0_i32 = arith.constant 0 : i32
    %c0_i32_0 = arith.constant 0 : i32
    return %arg0, %c0_i32 : i32, i32
  }
  func.func @transform_2(%arg0: i32) -> (i32, i32) {
    %c0_i32 = arith.constant 0 : i32
    %c0_i32_0 = arith.constant 0 : i32
    %c0_i32_1 = arith.constant 0 : i32
    return %c0_i32, %c0_i32_0 : i32, i32
  }
  func.func @transform_3(%arg0: i32) -> (i32, i32) {
    %c0_i32 = arith.constant 0 : i32
    %c0_i32_0 = arith.constant 0 : i32
    %c0_i32_1 = arith.constant 0 : i32
    return %c0_i32, %c0_i32_0 : i32, i32
  }
  func.func @transform_4(%arg0: i32) -> (i32, i32) {
    %c0_i32 = arith.constant 0 : i32
    %c0_i32_0 = arith.constant 0 : i32
    %c0_i32_1 = arith.constant 0 : i32
    return %c0_i32, %c0_i32_0 : i32, i32
  }
  func.func @transform_5(%arg0: i32) -> (i32, i32) {
    %c0_i32 = arith.constant 0 : i32
    %c0_i32_0 = arith.constant 0 : i32
    %c0_i32_1 = arith.constant 0 : i32
    return %c0_i32, %c0_i32_0 : i32, i32
  }
  func.func @transform_6(%arg0: i32) -> (i32, i32) {
    %c0_i32 = arith.constant 0 : i32
    %c0_i32_0 = arith.constant 0 : i32
    %c0_i32_1 = arith.constant 0 : i32
    return %c0_i32, %c0_i32_0 : i32, i32
  }
  func.func @transform_7(%arg0: i32) -> (i32, i32) {
    %c0_i32 = arith.constant 0 : i32
    %c0_i32_0 = arith.constant 0 : i32
    %c0_i32_1 = arith.constant 0 : i32
    return %c0_i32, %c0_i32_0 : i32, i32
  }
  func.func @transform_8(%arg0: i32) -> (i32, i32) {
    %c0_i32 = arith.constant 0 : i32
    %c0_i32_0 = arith.constant 0 : i32
    %c0_i32_1 = arith.constant 0 : i32
    return %c0_i32, %c0_i32_0 : i32, i32
  }
  func.func @transform_9(%arg0: i32) -> (i32, i32) {
    %c0_i32 = arith.constant 0 : i32
    %c0_i32_0 = arith.constant 0 : i32
    %c0_i32_1 = arith.constant 0 : i32
    return %c0_i32, %c0_i32_0 : i32, i32
  }
  func.func @transform_10(%arg0: i32) -> (i32, i32) {
    %c0_i32 = arith.constant 0 : i32
    %c0_i32_0 = arith.constant 0 : i32
    return %arg0, %c0_i32 : i32, i32
  }
  func.func @transform_11(%arg0: i32) -> (i32, i32) {
    %c0_i32 = arith.constant 0 : i32
    %c0_i32_0 = arith.constant 0 : i32
    return %arg0, %c0_i32 : i32, i32
  }
}

</mosaic_0001>

<llo_original>
// kernel: _lambda_.1
$region0: #{_lambda_.1}
  #allocation0 [shape = 'u32[]', space=smem, size = 0x4, offset = 0x4, fixed_abs, tag = 'smem constant byte address 0x4 - core index']
  #allocation1 [shape = 'u32[72,128]{1,0:T(1,128)}', space=vmem, size = 0x9000, scoped, tag = 'internal scratch']
  %s0 = inlined_call_operand.hbm [shape: f32[8,784], index: 0, kind: input, shape index: {}]
  %s1 = inlined_call_operand.vmem [shape: f32[8,128], index: 1, kind: input, shape index: {}]
  %s2 = inlined_call_operand.hbm [shape: bf16[784,512], index: 2, kind: input, shape index: {}]
  %s3 = inlined_call_operand.vmem [shape: f32[1,512], index: 3, kind: input, shape index: {}]
  %s4 = inlined_call_operand.hbm [shape: bf16[512,256], index: 4, kind: input, shape index: {}]
  %s5 = inlined_call_operand.vmem [shape: f32[1,256], index: 5, kind: input, shape index: {}]
  %s6 = inlined_call_operand.hbm [shape: bf16[128,512], index: 6, kind: input, shape index: {}]
  %s7 = inlined_call_operand.vmem [shape: f32[1,512], index: 7, kind: input, shape index: {}]
  %s8 = inlined_call_operand.hbm [shape: bf16[512,784], index: 8, kind: input, shape index: {}]
  %s9 = inlined_call_operand.vmem [shape: f32[1,784], index: 9, kind: input, shape index: {}]
  %s10 = inlined_call_operand.hbm [shape: bf16[8,784], index: 10, kind: output, shape index: {0}]
  %s11 = inlined_call_operand.vmem [shape: f32[8,256], index: 11, kind: output, shape index: {1}]
  %12 = xla_tuple %s10, %s11
  %s13 = sld [smem:[#allocation0]]
  $region78: #{_lambda_.1} parent=0
    _
  %s15 = ssub.s32 1, %s13
  %s16 = scalar_select 0, %s15, %s13
  $region1: #{_lambda_.1} parent=0
    #allocation2 [shape = 'u8[28672]{0}', space=vmem, size = 0x7000, scoped, tag = 'input window, operand 0, single buffered']
    #allocation3 [shape = 's32[1]{0}', space=sflag, size = 0x4, scoped, tag = 'scoped memory for _lambda_.1']
    #allocation4 [shape = 's32[1]{0}', space=sflag, size = 0x4, scoped, tag = 'scoped memory for _lambda_.1']
    #allocation5 [shape = 'u8[802816]{0}', space=vmem, size = 0xc4000, scoped, tag = 'input window, operand 2, single buffered']
    #allocation6 [shape = 's32[1]{0}', space=sflag, size = 0x4, scoped, tag = 'scoped memory for _lambda_.1']
    #allocation7 [shape = 'u8[262144]{0}', space=vmem, size = 0x40000, scoped, tag = 'input window, operand 4, single buffered']
    #allocation8 [shape = 'u8[131072]{0}', space=vmem, size = 0x20000, scoped, tag = 'input window, operand 6, single buffered']
    #allocation9 [shape = 's32[1]{0}', space=sflag, size = 0x4, scoped, tag = 'scoped memory for _lambda_.1']
    #allocation10 [shape = 'u8[917504]{0}', space=vmem, size = 0xe0000, scoped, tag = 'input window, operand 8, single buffered']
    #allocation11 [shape = 'u8[14336]{0}', space=vmem, size = 0x3800, scoped, tag = 'output window, operand 0, single buffered']
    %17 = vsyncpa [#allocation3], 0
    %18 = vsyncpa [#allocation6], 0
    %19 = vsyncpa [#allocation9], 0
    %20 = vsyncpa [#allocation4], 0
    // Predicated region
    $region2: #{_lambda_.1} parent=1 // pred_check
      _
    $region3: #{_lambda_.1} parent=1 // pred_check_branch
      %22 = sbr.rel (0) target = $region5
    $region4: #{_lambda_.1} parent=1 // pred_region
      %24 = vsyncadd [#allocation3], 0
      %s26 = sshll.u32 %s0, 4
      %s27 = int_to_ptr.hbm [resolvable:$true] %s26
      %s28 = sshll.u32 [#allocation2], 4
      %s29 = int_to_ptr.vmem [resolvable:$true] %s28
      %31 = dma.hbm_to_vmem [thread:$0]  %s27, 896, %s29, [#allocation3]
    $region5: #{_lambda_.1} parent=1 // pred_fallthru
      _
    // Predicated region
    $region6: #{_lambda_.1} parent=1 // pred_check
      _
    $region7: #{_lambda_.1} parent=1 // pred_check_branch
      %33 = sbr.rel (0) target = $region9
    $region8: #{_lambda_.1} parent=1 // pred_region
      _
    $region9: #{_lambda_.1} parent=1 // pred_fallthru
      _
    // Predicated region
    $region10: #{_lambda_.1} parent=1 // pred_check
      _
    $region11: #{_lambda_.1} parent=1 // pred_check_branch
      %35 = sbr.rel (0) target = $region13
    $region12: #{_lambda_.1} parent=1 // pred_region
      %37 = vsyncadd [#allocation6], 0
      %s38 = sshll.u32 %s2, 4
      %s39 = int_to_ptr.hbm [resolvable:$true] %s38
      %s40 = sshll.u32 [#allocation5], 4
      %s41 = int_to_ptr.vmem [resolvable:$true] %s40
      %46 = dma.hbm_to_vmem [thread:$0]  %s39, 25088, %s41, [#allocation6], 256, 256, 16
    $region13: #{_lambda_.1} parent=1 // pred_fallthru
      _
    // Predicated region
    $region14: #{_lambda_.1} parent=1 // pred_check
      _
    $region15: #{_lambda_.1} parent=1 // pred_check_branch
      %48 = sbr.rel (0) target = $region17
    $region16: #{_lambda_.1} parent=1 // pred_region
      _
    $region17: #{_lambda_.1} parent=1 // pred_fallthru
      _
    // Predicated region
    $region18: #{_lambda_.1} parent=1 // pred_check
      _
    $region19: #{_lambda_.1} parent=1 // pred_check_branch
      %50 = sbr.rel (0) target = $region21
    $region20: #{_lambda_.1} parent=1 // pred_region
      %52 = vsyncadd [#allocation6], 0
      %s53 = sshll.u32 %s4, 4
      %s54 = int_to_ptr.hbm [resolvable:$true] %s53
      %s55 = sshll.u32 [#allocation7], 4
      %s56 = int_to_ptr.vmem [resolvable:$true] %s55
      %61 = dma.hbm_to_vmem [thread:$0]  %s54, 8192, %s56, [#allocation6], 128, 128, 8
    $region21: #{_lambda_.1} parent=1 // pred_fallthru
      _
    // Predicated region
    $region22: #{_lambda_.1} parent=1 // pred_check
      _
    $region23: #{_lambda_.1} parent=1 // pred_check_branch
      %63 = sbr.rel (0) target = $region25
    $region24: #{_lambda_.1} parent=1 // pred_region
      _
    $region25: #{_lambda_.1} parent=1 // pred_fallthru
      _
    // Predicated region
    $region26: #{_lambda_.1} parent=1 // pred_check
      _
    $region27: #{_lambda_.1} parent=1 // pred_check_branch
      %65 = sbr.rel (0) target = $region29
    $region28: #{_lambda_.1} parent=1 // pred_region
      %67 = vsyncadd [#allocation9], 0
      %s68 = sshll.u32 %s6, 4
      %s69 = int_to_ptr.hbm [resolvable:$true] %s68
      %s70 = sshll.u32 [#allocation8], 4
      %s71 = int_to_ptr.vmem [resolvable:$true] %s70
      %76 = dma.hbm_to_vmem [thread:$0]  %s69, 4096, %s71, [#allocation9], 256, 256, 16
    $region29: #{_lambda_.1} parent=1 // pred_fallthru
      _
    // Predicated region
    $region30: #{_lambda_.1} parent=1 // pred_check
      _
    $region31: #{_lambda_.1} parent=1 // pred_check_branch
      %78 = sbr.rel (0) target = $region33
    $region32: #{_lambda_.1} parent=1 // pred_region
      _
    $region33: #{_lambda_.1} parent=1 // pred_fallthru
      _
    // Predicated region
    $region34: #{_lambda_.1} parent=1 // pred_check
      _
    $region35: #{_lambda_.1} parent=1 // pred_check_branch
      %80 = sbr.rel (0) target = $region37
    $region36: #{_lambda_.1} parent=1 // pred_region
      %82 = vsyncadd [#allocation9], 0
      %s83 = sshll.u32 %s8, 4
      %s84 = int_to_ptr.hbm [resolvable:$true] %s83
      %s85 = sshll.u32 [#allocation10], 4
      %s86 = int_to_ptr.vmem [resolvable:$true] %s85
      %91 = dma.hbm_to_vmem [thread:$0]  %s84, 28672, %s86, [#allocation9], 448, 448, 28
    $region37: #{_lambda_.1} parent=1 // pred_fallthru
      _
    // Predicated region
    $region38: #{_lambda_.1} parent=1 // pred_check
      _
    $region39: #{_lambda_.1} parent=1 // pred_check_branch
      %93 = sbr.rel (0) target = $region41
    $region40: #{_lambda_.1} parent=1 // pred_region
      _
    $region41: #{_lambda_.1} parent=1 // pred_fallthru
      _
    // Predicated region
    $region42: #{_lambda_.1} parent=1 // pred_check
      _
    $region43: #{_lambda_.1} parent=1 // pred_check_branch
      %95 = sbr.rel (0) target = $region45
    $region44: #{_lambda_.1} parent=1 // pred_region
      %97 = dma.done [#allocation3], 896
    $region45: #{_lambda_.1} parent=1 // pred_fallthru
      _
    // Predicated region
    $region46: #{_lambda_.1} parent=1 // pred_check
      _
    $region47: #{_lambda_.1} parent=1 // pred_check_branch
      %99 = sbr.rel (0) target = $region49
    $region48: #{_lambda_.1} parent=1 // pred_region
      %101 = dma.done [#allocation6], 25088
    $region49: #{_lambda_.1} parent=1 // pred_fallthru
      _
    // Predicated region
    $region50: #{_lambda_.1} parent=1 // pred_check
      _
    $region51: #{_lambda_.1} parent=1 // pred_check_branch
      %103 = sbr.rel (0) target = $region53
    $region52: #{_lambda_.1} parent=1 // pred_region
      %105 = dma.done [#allocation6], 8192
    $region53: #{_lambda_.1} parent=1 // pred_fallthru
      _
    // Predicated region
    $region54: #{_lambda_.1} parent=1 // pred_check
      _
    $region55: #{_lambda_.1} parent=1 // pred_check_branch
      %107 = sbr.rel (0) target = $region57
    $region56: #{_lambda_.1} parent=1 // pred_region
      %109 = dma.done [#allocation9], 4096
    $region57: #{_lambda_.1} parent=1 // pred_fallthru
      _
    // Predicated region
    $region58: #{_lambda_.1} parent=1 // pred_check
      _
    $region59: #{_lambda_.1} parent=1 // pred_check_branch
      %111 = sbr.rel (0) target = $region61
    $region60: #{_lambda_.1} parent=1 // pred_region
      %113 = dma.done [#allocation9], 28672
    $region61: #{_lambda_.1} parent=1 // pred_fallthru
      _
    %v115 = vld [vmem:[#allocation2] sm:$0xff]
    %v116 = vld [vmem:[#allocation2 + $0x8] sm:$0xff]
    %v117 = vld [vmem:[#allocation2 + $0x10] sm:$0xff]
    %v118 = vld [vmem:[#allocation2 + $0x18] sm:$0xff]
    %v119 = vld [vmem:[#allocation2 + $0x20] sm:$0xff]
    %v120 = vld [vmem:[#allocation2 + $0x28] sm:$0xff]
    %v121 = vld [vmem:[#allocation2 + $0x30] sm:$0xff]
    %v122 = vpack.c.bf16 %v115, %v115
    %v123 = vpack.c.bf16 %v116, %v116
    %v124 = vpack.c.bf16 %v117, %v117
    %v125 = vpack.c.bf16 %v118, %v118
    %v126 = vpack.c.bf16 %v119, %v119
    %v127 = vpack.c.bf16 %v120, %v120
    %v128 = vpack.c.bf16 %v121, %v121
    %v129 = vld [vmem:[%s1] sm:$0xff]
    %v130 = vld [vmem:[#allocation5] sm:$0xff]
    %v131 = vld [vmem:[#allocation5 + $0x8] sm:$0xff]
    %v132 = vld [vmem:[#allocation5 + $0x10] sm:$0xff]
    %v133 = vld [vmem:[#allocation5 + $0x18] sm:$0xff]
    %v134 = vld [vmem:[#allocation5 + $0x20] sm:$0xff]
    %v135 = vld [vmem:[#allocation5 + $0x28] sm:$0xff]
    %v136 = vld [vmem:[#allocation5 + $0x30] sm:$0xff]
    %v137 = vld [vmem:[#allocation5 + $0x38] sm:$0xff]
    %v138 = vld [vmem:[#allocation5 + $0x40] sm:$0xff]
    %v139 = vld [vmem:[#allocation5 + $0x48] sm:$0xff]
    %v140 = vld [vmem:[#allocation5 + $0x50] sm:$0xff]
    %v141 = vld [vmem:[#allocation5 + $0x58] sm:$0xff]
    %v142 = vld [vmem:[#allocation5 + $0x60] sm:$0xff]
    %v143 = vld [vmem:[#allocation5 + $0x68] sm:$0xff]
    %v144 = vld [vmem:[#allocation5 + $0x70] sm:$0xff]
    %v145 = vld [vmem:[#allocation5 + $0x78] sm:$0xff]
    %v146 = vld [vmem:[#allocation5 + $0x80] sm:$0xff]
    %v147 = vld [vmem:[#allocation5 + $0x88] sm:$0xff]
    %v148 = vld [vmem:[#allocation5 + $0x90] sm:$0xff]
    %v149 = vld [vmem:[#allocation5 + $0x98] sm:$0xff]
    %v150 = vld [vmem:[#allocation5 + $0xa0] sm:$0xff]
    %v151 = vld [vmem:[#allocation5 + $0xa8] sm:$0xff]
    %v152 = vld [vmem:[#allocation5 + $0xb0] sm:$0xff]
    %v153 = vld [vmem:[#allocation5 + $0xb8] sm:$0xff]
    %v154 = vld [vmem:[#allocation5 + $0xc0] sm:$0xff]
    %v155 = vld [vmem:[#allocation5 + $0xc8] sm:$0xff]
    %v156 = vld [vmem:[#allocation5 + $0xd0] sm:$0xff]
    %v157 = vld [vmem:[#allocation5 + $0xd8] sm:$0xff]
    %v158 = vld [vmem:[#allocation5 + $0xe0] sm:$0xff]
    %v159 = vld [vmem:[#allocation5 + $0xe8] sm:$0xff]
    %v160 = vld [vmem:[#allocation5 + $0xf0] sm:$0xff]
    %v161 = vld [vmem:[#allocation5 + $0xf8] sm:$0xff]
    %v162 = vld [vmem:[#allocation5 + $0x100] sm:$0xff]
    %v163 = vld [vmem:[#allocation5 + $0x108] sm:$0xff]
    %v164 = vld [vmem:[#allocation5 + $0x110] sm:$0xff]
    %v165 = vld [vmem:[#allocation5 + $0x118] sm:$0xff]
    %v166 = vld [vmem:[#allocation5 + $0x120] sm:$0xff]
    %v167 = vld [vmem:[#allocation5 + $0x128] sm:$0xff]
    %v168 = vld [vmem:[#allocation5 + $0x130] sm:$0xff]
    %v169 = vld [vmem:[#allocation5 + $0x138] sm:$0xff]
    %v170 = vld [vmem:[#allocation5 + $0x140] sm:$0xff]
    %v171 = vld [vmem:[#allocation5 + $0x148] sm:$0xff]
    %v172 = vld [vmem:[#allocation5 + $0x150] sm:$0xff]
    %v173 = vld [vmem:[#allocation5 + $0x158] sm:$0xff]
    %v174 = vld [vmem:[#allocation5 + $0x160] sm:$0xff]
    %v175 = vld [vmem:[#allocation5 + $0x168] sm:$0xff]
    %v176 = vld [vmem:[#allocation5 + $0x170] sm:$0xff]
    %v177 = vld [vmem:[#allocation5 + $0x178] sm:$0xff]
    %v178 = vld [vmem:[#allocation5 + $0x180] sm:$0xff]
    %v179 = vld [vmem:[#allocation5 + $0x188] sm:$0xff]
    %v180 = vld [vmem:[#allocation5 + $0x190] sm:$0xff]
    %v181 = vld [vmem:[#allocation5 + $0x198] sm:$0xff]
    %v182 = vld [vmem:[#allocation5 + $0x1a0] sm:$0xff]
    %v183 = vld [vmem:[#allocation5 + $0x1a8] sm:$0xff]
    %v184 = vld [vmem:[#allocation5 + $0x1b0] sm:$0xff]
    %v185 = vld [vmem:[#allocation5 + $0x1b8] sm:$0xff]
    %v186 = vld [vmem:[#allocation5 + $0x1c0] sm:$0xff]
    %v187 = vld [vmem:[#allocation5 + $0x1c8] sm:$0xff]
    %v188 = vld [vmem:[#allocation5 + $0x1d0] sm:$0xff]
    %v189 = vld [vmem:[#allocation5 + $0x1d8] sm:$0xff]
    %v190 = vld [vmem:[#allocation5 + $0x1e0] sm:$0xff]
    %v191 = vld [vmem:[#allocation5 + $0x1e8] sm:$0xff]
    %v192 = vld [vmem:[#allocation5 + $0x1f0] sm:$0xff]
    %v193 = vld [vmem:[#allocation5 + $0x1f8] sm:$0xff]
    %v194 = vld [vmem:[#allocation5 + $0x200] sm:$0xff]
    %v195 = vld [vmem:[#allocation5 + $0x208] sm:$0xff]
    %v196 = vld [vmem:[#allocation5 + $0x210] sm:$0xff]
    %v197 = vld [vmem:[#allocation5 + $0x218] sm:$0xff]
    %v198 = vld [vmem:[#allocation5 + $0x220] sm:$0xff]
    %v199 = vld [vmem:[#allocation5 + $0x228] sm:$0xff]
    %v200 = vld [vmem:[#allocation5 + $0x230] sm:$0xff]
    %v201 = vld [vmem:[#allocation5 + $0x238] sm:$0xff]
    %v202 = vld [vmem:[#allocation5 + $0x240] sm:$0xff]
    %v203 = vld [vmem:[#allocation5 + $0x248] sm:$0xff]
    %v204 = vld [vmem:[#allocation5 + $0x250] sm:$0xff]
    %v205 = vld [vmem:[#allocation5 + $0x258] sm:$0xff]
    %v206 = vld [vmem:[#allocation5 + $0x260] sm:$0xff]
    %v207 = vld [vmem:[#allocation5 + $0x268] sm:$0xff]
    %v208 = vld [vmem:[#allocation5 + $0x270] sm:$0xff]
    %v209 = vld [vmem:[#allocation5 + $0x278] sm:$0xff]
    %v210 = vld [vmem:[#allocation5 + $0x280] sm:$0xff]
    %v211 = vld [vmem:[#allocation5 + $0x288] sm:$0xff]
    %v212 = vld [vmem:[#allocation5 + $0x290] sm:$0xff]
    %v213 = vld [vmem:[#allocation5 + $0x298] sm:$0xff]
    %v214 = vld [vmem:[#allocation5 + $0x2a0] sm:$0xff]
    %v215 = vld [vmem:[#allocation5 + $0x2a8] sm:$0xff]
    %v216 = vld [vmem:[#allocation5 + $0x2b0] sm:$0xff]
    %v217 = vld [vmem:[#allocation5 + $0x2b8] sm:$0xff]
    %v218 = vld [vmem:[#allocation5 + $0x2c0] sm:$0xff]
    %v219 = vld [vmem:[#allocation5 + $0x2c8] sm:$0xff]
    %v220 = vld [vmem:[#allocation5 + $0x2d0] sm:$0xff]
    %v221 = vld [vmem:[#allocation5 + $0x2d8] sm:$0xff]
    %v222 = vld [vmem:[#allocation5 + $0x2e0] sm:$0xff]
    %v223 = vld [vmem:[#allocation5 + $0x2e8] sm:$0xff]
    %v224 = vld [vmem:[#allocation5 + $0x2f0] sm:$0xff]
    %v225 = vld [vmem:[#allocation5 + $0x2f8] sm:$0xff]
    %v226 = vld [vmem:[#allocation5 + $0x300] sm:$0xff]
    %v227 = vld [vmem:[#allocation5 + $0x308] sm:$0xff]
    %v228 = vld [vmem:[#allocation5 + $0x310] sm:$0xff]
    %v229 = vld [vmem:[#allocation5 + $0x318] sm:$0xff]
    %v230 = vld [vmem:[#allocation5 + $0x320] sm:$0xff]
    %v231 = vld [vmem:[#allocation5 + $0x328] sm:$0xff]
    %v232 = vld [vmem:[#allocation5 + $0x330] sm:$0xff]
    %v233 = vld [vmem:[#allocation5 + $0x338] sm:$0xff]
    %v234 = vld [vmem:[#allocation5 + $0x340] sm:$0xff]
    %v235 = vld [vmem:[#allocation5 + $0x348] sm:$0xff]
    %v236 = vld [vmem:[#allocation5 + $0x350] sm:$0xff]
    %v237 = vld [vmem:[#allocation5 + $0x358] sm:$0xff]
    %v238 = vld [vmem:[#allocation5 + $0x360] sm:$0xff]
    %v239 = vld [vmem:[#allocation5 + $0x368] sm:$0xff]
    %v240 = vld [vmem:[#allocation5 + $0x370] sm:$0xff]
    %v241 = vld [vmem:[#allocation5 + $0x378] sm:$0xff]
    %v242 = vld [vmem:[#allocation5 + $0x380] sm:$0xff]
    %v243 = vld [vmem:[#allocation5 + $0x388] sm:$0xff]
    %v244 = vld [vmem:[#allocation5 + $0x390] sm:$0xff]
    %v245 = vld [vmem:[#allocation5 + $0x398] sm:$0xff]
    %v246 = vld [vmem:[#allocation5 + $0x3a0] sm:$0xff]
    %v247 = vld [vmem:[#allocation5 + $0x3a8] sm:$0xff]
    %v248 = vld [vmem:[#allocation5 + $0x3b0] sm:$0xff]
    %v249 = vld [vmem:[#allocation5 + $0x3b8] sm:$0xff]
    %v250 = vld [vmem:[#allocation5 + $0x3c0] sm:$0xff]
    %v251 = vld [vmem:[#allocation5 + $0x3c8] sm:$0xff]
    %v252 = vld [vmem:[#allocation5 + $0x3d0] sm:$0xff]
    %v253 = vld [vmem:[#allocation5 + $0x3d8] sm:$0xff]
    %v254 = vld [vmem:[#allocation5 + $0x3e0] sm:$0xff]
    %v255 = vld [vmem:[#allocation5 + $0x3e8] sm:$0xff]
    %v256 = vld [vmem:[#allocation5 + $0x3f0] sm:$0xff]
    %v257 = vld [vmem:[#allocation5 + $0x3f8] sm:$0xff]
    %v258 = vld [vmem:[#allocation5 + $0x400] sm:$0xff]
    %v259 = vld [vmem:[#allocation5 + $0x408] sm:$0xff]
    %v260 = vld [vmem:[#allocation5 + $0x410] sm:$0xff]
    %v261 = vld [vmem:[#allocation5 + $0x418] sm:$0xff]
    %v262 = vld [vmem:[#allocation5 + $0x420] sm:$0xff]
    %v263 = vld [vmem:[#allocation5 + $0x428] sm:$0xff]
    %v264 = vld [vmem:[#allocation5 + $0x430] sm:$0xff]
    %v265 = vld [vmem:[#allocation5 + $0x438] sm:$0xff]
    %v266 = vld [vmem:[#allocation5 + $0x440] sm:$0xff]
    %v267 = vld [vmem:[#allocation5 + $0x448] sm:$0xff]
    %v268 = vld [vmem:[#allocation5 + $0x450] sm:$0xff]
    %v269 = vld [vmem:[#allocation5 + $0x458] sm:$0xff]
    %v270 = vld [vmem:[#allocation5 + $0x460] sm:$0xff]
    %v271 = vld [vmem:[#allocation5 + $0x468] sm:$0xff]
    %v272 = vld [vmem:[#allocation5 + $0x470] sm:$0xff]
    %v273 = vld [vmem:[#allocation5 + $0x478] sm:$0xff]
    %v274 = vld [vmem:[#allocation5 + $0x480] sm:$0xff]
    %v275 = vld [vmem:[#allocation5 + $0x488] sm:$0xff]
    %v276 = vld [vmem:[#allocation5 + $0x490] sm:$0xff]
    %v277 = vld [vmem:[#allocation5 + $0x498] sm:$0xff]
    %v278 = vld [vmem:[#allocation5 + $0x4a0] sm:$0xff]
    %v279 = vld [vmem:[#allocation5 + $0x4a8] sm:$0xff]
    %v280 = vld [vmem:[#allocation5 + $0x4b0] sm:$0xff]
    %v281 = vld [vmem:[#allocation5 + $0x4b8] sm:$0xff]
    %v282 = vld [vmem:[#allocation5 + $0x4c0] sm:$0xff]
    %v283 = vld [vmem:[#allocation5 + $0x4c8] sm:$0xff]
    %v284 = vld [vmem:[#allocation5 + $0x4d0] sm:$0xff]
    %v285 = vld [vmem:[#allocation5 + $0x4d8] sm:$0xff]
    %v286 = vld [vmem:[#allocation5 + $0x4e0] sm:$0xff]
    %v287 = vld [vmem:[#allocation5 + $0x4e8] sm:$0xff]
    %v288 = vld [vmem:[#allocation5 + $0x4f0] sm:$0xff]
    %v289 = vld [vmem:[#allocation5 + $0x4f8] sm:$0xff]
    %v290 = vld [vmem:[#allocation5 + $0x500] sm:$0xff]
    %v291 = vld [vmem:[#allocation5 + $0x508] sm:$0xff]
    %v292 = vld [vmem:[#allocation5 + $0x510] sm:$0xff]
    %v293 = vld [vmem:[#allocation5 + $0x518] sm:$0xff]
    %v294 = vld [vmem:[#allocation5 + $0x520] sm:$0xff]
    %v295 = vld [vmem:[#allocation5 + $0x528] sm:$0xff]
    %v296 = vld [vmem:[#allocation5 + $0x530] sm:$0xff]
    %v297 = vld [vmem:[#allocation5 + $0x538] sm:$0xff]
    %v298 = vld [vmem:[#allocation5 + $0x540] sm:$0xff]
    %v299 = vld [vmem:[#allocation5 + $0x548] sm:$0xff]
    %v300 = vld [vmem:[#allocation5 + $0x550] sm:$0xff]
    %v301 = vld [vmem:[#allocation5 + $0x558] sm:$0xff]
    %v302 = vld [vmem:[#allocation5 + $0x560] sm:$0xff]
    %v303 = vld [vmem:[#allocation5 + $0x568] sm:$0xff]
    %v304 = vld [vmem:[#allocation5 + $0x570] sm:$0xff]
    %v305 = vld [vmem:[#allocation5 + $0x578] sm:$0xff]
    %v306 = vld [vmem:[#allocation5 + $0x580] sm:$0xff]
    %v307 = vld [vmem:[#allocation5 + $0x588] sm:$0xff]
    %v308 = vld [vmem:[#allocation5 + $0x590] sm:$0xff]
    %v309 = vld [vmem:[#allocation5 + $0x598] sm:$0xff]
    %v310 = vld [vmem:[#allocation5 + $0x5a0] sm:$0xff]
    %v311 = vld [vmem:[#allocation5 + $0x5a8] sm:$0xff]
    %v312 = vld [vmem:[#allocation5 + $0x5b0] sm:$0xff]
    %v313 = vld [vmem:[#allocation5 + $0x5b8] sm:$0xff]
    %v314 = vld [vmem:[#allocation5 + $0x5c0] sm:$0xff]
    %v315 = vld [vmem:[#allocation5 + $0x5c8] sm:$0xff]
    %v316 = vld [vmem:[#allocation5 + $0x5d0] sm:$0xff]
    %v317 = vld [vmem:[#allocation5 + $0x5d8] sm:$0xff]
    %v318 = vld [vmem:[#allocation5 + $0x5e0] sm:$0xff]
    %v319 = vld [vmem:[#allocation5 + $0x5e8] sm:$0xff]
    %v320 = vld [vmem:[#allocation5 + $0x5f0] sm:$0xff]
    %v321 = vld [vmem:[#allocation5 + $0x5f8] sm:$0xff]
    %v322 = vld [vmem:[#allocation5 + $0x600] sm:$0xff]
    %v323 = vld [vmem:[#allocation5 + $0x608] sm:$0xff]
    %v324 = vld [vmem:[#allocation5 + $0x610] sm:$0xff]
    %v325 = vld [vmem:[#allocation5 + $0x618] sm:$0xff]
    %v326 = vld [vmem:[%s3] sm:$0xf]
    %v328 = vperm.slane %v326, 0
    %v329 = vperm.slane %v326, 1
    %v330 = vperm.slane %v326, 2
    %v331 = vperm.slane %v326, 3
    %v532 = vunpack.c.l.b16 %v130
    %v533 = vunpack.c.h.b16 %v130
    %v534 = vunpack.c.l.b16 %v131
    %v535 = vunpack.c.h.b16 %v131
    %v536 = vunpack.c.l.b16 %v132
    %v537 = vunpack.c.h.b16 %v132
    %v538 = vunpack.c.l.b16 %v133
    %v539 = vunpack.c.h.b16 %v133
    %v540 = vunpack.c.l.b16 %v134
    %v541 = vunpack.c.h.b16 %v134
    %v542 = vunpack.c.l.b16 %v135
    %v543 = vunpack.c.h.b16 %v135
    %v544 = vunpack.c.l.b16 %v136
    %v545 = vunpack.c.h.b16 %v136
    %v546 = vunpack.c.l.b16 %v137
    %v547 = vunpack.c.h.b16 %v137
    %v548 = vunpack.c.l.b16 %v138
    %v549 = vunpack.c.h.b16 %v138
    %v550 = vunpack.c.l.b16 %v139
    %v551 = vunpack.c.h.b16 %v139
    %v552 = vunpack.c.l.b16 %v140
    %v553 = vunpack.c.h.b16 %v140
    %v554 = vunpack.c.l.b16 %v141
    %v555 = vunpack.c.h.b16 %v141
    %v556 = vunpack.c.l.b16 %v142
    %v557 = vunpack.c.h.b16 %v142
    %v558 = vunpack.c.l.b16 %v143
    %v559 = vunpack.c.h.b16 %v143
    %v560 = vunpack.c.l.b16 %v144
    %v561 = vunpack.c.h.b16 %v144
    %v562 = vunpack.c.l.b16 %v145
    %v563 = vunpack.c.h.b16 %v145
    %v564 = vunpack.c.l.b16 %v146
    %v565 = vunpack.c.h.b16 %v146
    %v566 = vunpack.c.l.b16 %v147
    %v567 = vunpack.c.h.b16 %v147
    %v568 = vunpack.c.l.b16 %v148
    %v569 = vunpack.c.h.b16 %v148
    %v570 = vunpack.c.l.b16 %v149
    %v571 = vunpack.c.h.b16 %v149
    %v572 = vunpack.c.l.b16 %v150
    %v573 = vunpack.c.h.b16 %v150
    %v574 = vunpack.c.l.b16 %v151
    %v575 = vunpack.c.h.b16 %v151
    %v576 = vunpack.c.l.b16 %v152
    %v577 = vunpack.c.h.b16 %v152
    %v578 = vunpack.c.l.b16 %v153
    %v579 = vunpack.c.h.b16 %v153
    %v580 = vunpack.c.l.b16 %v154
    %v581 = vunpack.c.h.b16 %v154
    %v582 = vunpack.c.l.b16 %v155
    %v583 = vunpack.c.h.b16 %v155
    %v584 = vunpack.c.l.b16 %v156
    %v585 = vunpack.c.h.b16 %v156
    %v586 = vunpack.c.l.b16 %v157
    %v587 = vunpack.c.h.b16 %v157
    %v588 = vunpack.c.l.b16 %v158
    %v589 = vunpack.c.h.b16 %v158
    %v590 = vunpack.c.l.b16 %v159
    %v591 = vunpack.c.h.b16 %v159
    %v592 = vunpack.c.l.b16 %v160
    %v593 = vunpack.c.h.b16 %v160
    %v594 = vunpack.c.l.b16 %v161
    %v595 = vunpack.c.h.b16 %v161
    %v596 = vunpack.c.l.b16 %v162
    %v597 = vunpack.c.h.b16 %v162
    %v598 = vunpack.c.l.b16 %v163
    %v599 = vunpack.c.h.b16 %v163
    %v600 = vunpack.c.l.b16 %v164
    %v601 = vunpack.c.h.b16 %v164
    %v602 = vunpack.c.l.b16 %v165
    %v603 = vunpack.c.h.b16 %v165
    %v604 = vunpack.c.l.b16 %v166
    %v605 = vunpack.c.h.b16 %v166
    %v606 = vunpack.c.l.b16 %v167
    %v607 = vunpack.c.h.b16 %v167
    %v608 = vunpack.c.l.b16 %v168
    %v609 = vunpack.c.h.b16 %v168
    %v610 = vunpack.c.l.b16 %v169
    %v611 = vunpack.c.h.b16 %v169
    %v612 = vunpack.c.l.b16 %v170
    %v613 = vunpack.c.h.b16 %v170
    %v614 = vunpack.c.l.b16 %v171
    %v615 = vunpack.c.h.b16 %v171
    %v616 = vunpack.c.l.b16 %v172
    %v617 = vunpack.c.h.b16 %v172
    %v618 = vunpack.c.l.b16 %v173
    %v619 = vunpack.c.h.b16 %v173
    %v620 = vunpack.c.l.b16 %v174
    %v621 = vunpack.c.h.b16 %v174
    %v622 = vunpack.c.l.b16 %v175
    %v623 = vunpack.c.h.b16 %v175
    %v624 = vunpack.c.l.b16 %v176
    %v625 = vunpack.c.h.b16 %v176
    %v626 = vunpack.c.l.b16 %v177
    %v627 = vunpack.c.h.b16 %v177
    %v628 = vunpack.c.l.b16 %v178
    %v629 = vunpack.c.h.b16 %v178
    %v630 = vunpack.c.l.b16 %v179
    %v631 = vunpack.c.h.b16 %v179
    %v632 = vunpack.c.l.b16 %v180
    %v633 = vunpack.c.h.b16 %v180
    %v634 = vunpack.c.l.b16 %v181
    %v635 = vunpack.c.h.b16 %v181
    %v636 = vunpack.c.l.b16 %v182
    %v637 = vunpack.c.h.b16 %v182
    %v638 = vunpack.c.l.b16 %v183
    %v639 = vunpack.c.h.b16 %v183
    %v640 = vunpack.c.l.b16 %v184
    %v641 = vunpack.c.h.b16 %v184
    %v642 = vunpack.c.l.b16 %v185
    %v643 = vunpack.c.h.b16 %v185
    %v644 = vunpack.c.l.b16 %v186
    %v645 = vunpack.c.h.b16 %v186
    %v646 = vunpack.c.l.b16 %v187
    %v647 = vunpack.c.h.b16 %v187
    %v648 = vunpack.c.l.b16 %v188
    %v649 = vunpack.c.h.b16 %v188
    %v650 = vunpack.c.l.b16 %v189
    %v651 = vunpack.c.h.b16 %v189
    %v652 = vunpack.c.l.b16 %v190
    %v653 = vunpack.c.h.b16 %v190
    %v654 = vunpack.c.l.b16 %v191
    %v655 = vunpack.c.h.b16 %v191
    %v656 = vunpack.c.l.b16 %v192
    %v657 = vunpack.c.h.b16 %v192
    %v658 = vunpack.c.l.b16 %v193
    %v659 = vunpack.c.h.b16 %v193
    %v660 = vunpack.c.l.b16 %v194
    %v661 = vunpack.c.h.b16 %v194
    %v662 = vunpack.c.l.b16 %v195
    %v663 = vunpack.c.h.b16 %v195
    %v664 = vunpack.c.l.b16 %v196
    %v665 = vunpack.c.h.b16 %v196
    %v666 = vunpack.c.l.b16 %v197
    %v667 = vunpack.c.h.b16 %v197
    %v668 = vunpack.c.l.b16 %v198
    %v669 = vunpack.c.h.b16 %v198
    %v670 = vunpack.c.l.b16 %v199
    %v671 = vunpack.c.h.b16 %v199
    %v672 = vunpack.c.l.b16 %v200
    %v673 = vunpack.c.h.b16 %v200
    %v674 = vunpack.c.l.b16 %v201
    %v675 = vunpack.c.h.b16 %v201
    %v676 = vunpack.c.l.b16 %v202
    %v677 = vunpack.c.h.b16 %v202
    %v678 = vunpack.c.l.b16 %v203
    %v679 = vunpack.c.h.b16 %v203
    %v680 = vunpack.c.l.b16 %v204
    %v681 = vunpack.c.h.b16 %v204
    %v682 = vunpack.c.l.b16 %v205
    %v683 = vunpack.c.h.b16 %v205
    %v684 = vunpack.c.l.b16 %v206
    %v685 = vunpack.c.h.b16 %v206
    %v686 = vunpack.c.l.b16 %v207
    %v687 = vunpack.c.h.b16 %v207
    %v688 = vunpack.c.l.b16 %v208
    %v689 = vunpack.c.h.b16 %v208
    %v690 = vunpack.c.l.b16 %v209
    %v691 = vunpack.c.h.b16 %v209
    %v692 = vunpack.c.l.b16 %v210
    %v693 = vunpack.c.h.b16 %v210
    %v694 = vunpack.c.l.b16 %v211
    %v695 = vunpack.c.h.b16 %v211
    %v696 = vunpack.c.l.b16 %v212
    %v697 = vunpack.c.h.b16 %v212
    %v698 = vunpack.c.l.b16 %v213
    %v699 = vunpack.c.h.b16 %v213
    %v700 = vunpack.c.l.b16 %v214
    %v701 = vunpack.c.h.b16 %v214
    %v702 = vunpack.c.l.b16 %v215
    %v703 = vunpack.c.h.b16 %v215
    %v704 = vunpack.c.l.b16 %v216
    %v705 = vunpack.c.h.b16 %v216
    %v706 = vunpack.c.l.b16 %v217
    %v707 = vunpack.c.h.b16 %v217
    %v708 = vunpack.c.l.b16 %v218
    %v709 = vunpack.c.h.b16 %v218
    %v710 = vunpack.c.l.b16 %v219
    %v711 = vunpack.c.h.b16 %v219
    %v712 = vunpack.c.l.b16 %v220
    %v713 = vunpack.c.h.b16 %v220
    %v714 = vunpack.c.l.b16 %v221
    %v715 = vunpack.c.h.b16 %v221
    %v716 = vunpack.c.l.b16 %v222
    %v717 = vunpack.c.h.b16 %v222
    %v718 = vunpack.c.l.b16 %v223
    %v719 = vunpack.c.h.b16 %v223
    %v720 = vunpack.c.l.b16 %v224
    %v721 = vunpack.c.h.b16 %v224
    %v722 = vunpack.c.l.b16 %v225
    %v723 = vunpack.c.h.b16 %v225
    %v724 = vunpack.c.l.b16 %v226
    %v725 = vunpack.c.h.b16 %v226
    %v726 = vunpack.c.l.b16 %v227
    %v727 = vunpack.c.h.b16 %v227
    %v728 = vunpack.c.l.b16 %v228
    %v729 = vunpack.c.h.b16 %v228
    %v730 = vunpack.c.l.b16 %v229
    %v731 = vunpack.c.h.b16 %v229
    %v732 = vunpack.c.l.b16 %v230
    %v733 = vunpack.c.h.b16 %v230
    %v734 = vunpack.c.l.b16 %v231
    %v735 = vunpack.c.h.b16 %v231
    %v736 = vunpack.c.l.b16 %v232
    %v737 = vunpack.c.h.b16 %v232
    %v738 = vunpack.c.l.b16 %v233
    %v739 = vunpack.c.h.b16 %v233
    %v740 = vunpack.c.l.b16 %v234
    %v741 = vunpack.c.h.b16 %v234
    %v742 = vunpack.c.l.b16 %v235
    %v743 = vunpack.c.h.b16 %v235
    %v744 = vunpack.c.l.b16 %v236
    %v745 = vunpack.c.h.b16 %v236
    %v746 = vunpack.c.l.b16 %v237
    %v747 = vunpack.c.h.b16 %v237
    %v748 = vunpack.c.l.b16 %v238
    %v749 = vunpack.c.h.b16 %v238
    %v750 = vunpack.c.l.b16 %v239
    %v751 = vunpack.c.h.b16 %v239
    %v752 = vunpack.c.l.b16 %v240
    %v753 = vunpack.c.h.b16 %v240
    %v754 = vunpack.c.l.b16 %v241
    %v755 = vunpack.c.h.b16 %v241
    %v756 = vunpack.c.l.b16 %v242
    %v757 = vunpack.c.h.b16 %v242
    %v758 = vunpack.c.l.b16 %v243
    %v759 = vunpack.c.h.b16 %v243
    %v760 = vunpack.c.l.b16 %v244
    %v761 = vunpack.c.h.b16 %v244
    %v762 = vunpack.c.l.b16 %v245
    %v763 = vunpack.c.h.b16 %v245
    %v764 = vunpack.c.l.b16 %v246
    %v765 = vunpack.c.h.b16 %v246
    %v766 = vunpack.c.l.b16 %v247
    %v767 = vunpack.c.h.b16 %v247
    %v768 = vunpack.c.l.b16 %v248
    %v769 = vunpack.c.h.b16 %v248
    %v770 = vunpack.c.l.b16 %v249
    %v771 = vunpack.c.h.b16 %v249
    %v772 = vunpack.c.l.b16 %v250
    %v773 = vunpack.c.h.b16 %v250
    %v774 = vunpack.c.l.b16 %v251
    %v775 = vunpack.c.h.b16 %v251
    %v776 = vunpack.c.l.b16 %v252
    %v777 = vunpack.c.h.b16 %v252
    %v778 = vunpack.c.l.b16 %v253
    %v779 = vunpack.c.h.b16 %v253
    %v780 = vunpack.c.l.b16 %v254
    %v781 = vunpack.c.h.b16 %v254
    %v782 = vunpack.c.l.b16 %v255
    %v783 = vunpack.c.h.b16 %v255
    %v784 = vunpack.c.l.b16 %v256
    %v785 = vunpack.c.h.b16 %v256
    %v786 = vunpack.c.l.b16 %v257
    %v787 = vunpack.c.h.b16 %v257
    %v788 = vunpack.c.l.b16 %v258
    %v789 = vunpack.c.h.b16 %v258
    %v790 = vunpack.c.l.b16 %v259
    %v791 = vunpack.c.h.b16 %v259
    %v792 = vunpack.c.l.b16 %v260
    %v793 = vunpack.c.h.b16 %v260
    %v794 = vunpack.c.l.b16 %v261
    %v795 = vunpack.c.h.b16 %v261
    %v796 = vunpack.c.l.b16 %v262
    %v797 = vunpack.c.h.b16 %v262
    %v798 = vunpack.c.l.b16 %v263
    %v799 = vunpack.c.h.b16 %v263
    %v800 = vunpack.c.l.b16 %v264
    %v801 = vunpack.c.h.b16 %v264
    %v802 = vunpack.c.l.b16 %v265
    %v803 = vunpack.c.h.b16 %v265
    %v804 = vunpack.c.l.b16 %v266
    %v805 = vunpack.c.h.b16 %v266
    %v806 = vunpack.c.l.b16 %v267
    %v807 = vunpack.c.h.b16 %v267
    %v808 = vunpack.c.l.b16 %v268
    %v809 = vunpack.c.h.b16 %v268
    %v810 = vunpack.c.l.b16 %v269
    %v811 = vunpack.c.h.b16 %v269
    %v812 = vunpack.c.l.b16 %v270
    %v813 = vunpack.c.h.b16 %v270
    %v814 = vunpack.c.l.b16 %v271
    %v815 = vunpack.c.h.b16 %v271
    %v816 = vunpack.c.l.b16 %v272
    %v817 = vunpack.c.h.b16 %v272
    %v818 = vunpack.c.l.b16 %v273
    %v819 = vunpack.c.h.b16 %v273
    %v820 = vunpack.c.l.b16 %v274
    %v821 = vunpack.c.h.b16 %v274
    %v822 = vunpack.c.l.b16 %v275
    %v823 = vunpack.c.h.b16 %v275
    %v824 = vunpack.c.l.b16 %v276
    %v825 = vunpack.c.h.b16 %v276
    %v826 = vunpack.c.l.b16 %v277
    %v827 = vunpack.c.h.b16 %v277
    %v828 = vunpack.c.l.b16 %v278
    %v829 = vunpack.c.h.b16 %v278
    %v830 = vunpack.c.l.b16 %v279
    %v831 = vunpack.c.h.b16 %v279
    %v832 = vunpack.c.l.b16 %v280
    %v833 = vunpack.c.h.b16 %v280
    %v834 = vunpack.c.l.b16 %v281
    %v835 = vunpack.c.h.b16 %v281
    %v836 = vunpack.c.l.b16 %v282
    %v837 = vunpack.c.h.b16 %v282
    %v838 = vunpack.c.l.b16 %v283
    %v839 = vunpack.c.h.b16 %v283
    %v840 = vunpack.c.l.b16 %v284
    %v841 = vunpack.c.h.b16 %v284
    %v842 = vunpack.c.l.b16 %v285
    %v843 = vunpack.c.h.b16 %v285
    %v844 = vunpack.c.l.b16 %v286
    %v845 = vunpack.c.h.b16 %v286
    %v846 = vunpack.c.l.b16 %v287
    %v847 = vunpack.c.h.b16 %v287
    %v848 = vunpack.c.l.b16 %v288
    %v849 = vunpack.c.h.b16 %v288
    %v850 = vunpack.c.l.b16 %v289
    %v851 = vunpack.c.h.b16 %v289
    %v852 = vunpack.c.l.b16 %v290
    %v853 = vunpack.c.h.b16 %v290
    %v854 = vunpack.c.l.b16 %v291
    %v855 = vunpack.c.h.b16 %v291
    %v856 = vunpack.c.l.b16 %v292
    %v857 = vunpack.c.h.b16 %v292
    %v858 = vunpack.c.l.b16 %v293
    %v859 = vunpack.c.h.b16 %v293
    %v860 = vunpack.c.l.b16 %v294
    %v861 = vunpack.c.h.b16 %v294
    %v862 = vunpack.c.l.b16 %v295
    %v863 = vunpack.c.h.b16 %v295
    %v864 = vunpack.c.l.b16 %v296
    %v865 = vunpack.c.h.b16 %v296
    %v866 = vunpack.c.l.b16 %v297
    %v867 = vunpack.c.h.b16 %v297
    %v868 = vunpack.c.l.b16 %v298
    %v869 = vunpack.c.h.b16 %v298
    %v870 = vunpack.c.l.b16 %v299
    %v871 = vunpack.c.h.b16 %v299
    %v872 = vunpack.c.l.b16 %v300
    %v873 = vunpack.c.h.b16 %v300
    %v874 = vunpack.c.l.b16 %v301
    %v875 = vunpack.c.h.b16 %v301
    %v876 = vunpack.c.l.b16 %v302
    %v877 = vunpack.c.h.b16 %v302
    %v878 = vunpack.c.l.b16 %v303
    %v879 = vunpack.c.h.b16 %v303
    %v880 = vunpack.c.l.b16 %v304
    %v881 = vunpack.c.h.b16 %v304
    %v882 = vunpack.c.l.b16 %v305
    %v883 = vunpack.c.h.b16 %v305
    %v884 = vunpack.c.l.b16 %v306
    %v885 = vunpack.c.h.b16 %v306
    %v886 = vunpack.c.l.b16 %v307
    %v887 = vunpack.c.h.b16 %v307
    %v888 = vunpack.c.l.b16 %v308
    %v889 = vunpack.c.h.b16 %v308
    %v890 = vunpack.c.l.b16 %v309
    %v891 = vunpack.c.h.b16 %v309
    %v892 = vunpack.c.l.b16 %v310
    %v893 = vunpack.c.h.b16 %v310
    %v894 = vunpack.c.l.b16 %v311
    %v895 = vunpack.c.h.b16 %v311
    %v896 = vunpack.c.l.b16 %v312
    %v897 = vunpack.c.h.b16 %v312
    %v898 = vunpack.c.l.b16 %v313
    %v899 = vunpack.c.h.b16 %v313
    %v900 = vunpack.c.l.b16 %v314
    %v901 = vunpack.c.h.b16 %v314
    %v902 = vunpack.c.l.b16 %v315
    %v903 = vunpack.c.h.b16 %v315
    %v904 = vunpack.c.l.b16 %v316
    %v905 = vunpack.c.h.b16 %v316
    %v906 = vunpack.c.l.b16 %v317
    %v907 = vunpack.c.h.b16 %v317
    %v908 = vunpack.c.l.b16 %v318
    %v909 = vunpack.c.h.b16 %v318
    %v910 = vunpack.c.l.b16 %v319
    %v911 = vunpack.c.h.b16 %v319
    %v912 = vunpack.c.l.b16 %v320
    %v913 = vunpack.c.h.b16 %v320
    %v914 = vunpack.c.l.b16 %v321
    %v915 = vunpack.c.h.b16 %v321
    %v916 = vunpack.c.l.b16 %v322
    %v917 = vunpack.c.h.b16 %v322
    %v918 = vunpack.c.l.b16 %v323
    %v919 = vunpack.c.h.b16 %v323
    %v920 = vunpack.c.l.b16 %v324
    %v921 = vunpack.c.h.b16 %v324
    %v922 = vunpack.c.l.b16 %v325
    %v923 = vunpack.c.h.b16 %v325
    %v924 = vpack.c.b16 %v536, %v532
    %v925 = vpack.c.b16 %v537, %v533
    %v926 = vpack.c.b16 %v538, %v534
    %v927 = vpack.c.b16 %v539, %v535
    %v928 = vpack.c.b16 %v544, %v540
    %v929 = vpack.c.b16 %v545, %v541
    %v930 = vpack.c.b16 %v546, %v542
    %v931 = vpack.c.b16 %v547, %v543
    %v932 = vpack.c.b16 %v552, %v548
    %v933 = vpack.c.b16 %v553, %v549
    %v934 = vpack.c.b16 %v554, %v550
    %v935 = vpack.c.b16 %v555, %v551
    %v936 = vpack.c.b16 %v560, %v556
    %v937 = vpack.c.b16 %v561, %v557
    %v938 = vpack.c.b16 %v562, %v558
    %v939 = vpack.c.b16 %v563, %v559
    %v940 = vpack.c.b16 %v568, %v564
    %v941 = vpack.c.b16 %v569, %v565
    %v942 = vpack.c.b16 %v570, %v566
    %v943 = vpack.c.b16 %v571, %v567
    %v944 = vpack.c.b16 %v576, %v572
    %v945 = vpack.c.b16 %v577, %v573
    %v946 = vpack.c.b16 %v578, %v574
    %v947 = vpack.c.b16 %v579, %v575
    %v948 = vpack.c.b16 %v584, %v580
    %v949 = vpack.c.b16 %v585, %v581
    %v950 = vpack.c.b16 %v586, %v582
    %v951 = vpack.c.b16 %v587, %v583
    %v952 = vpack.c.b16 %v592, %v588
    %v953 = vpack.c.b16 %v593, %v589
    %v954 = vpack.c.b16 %v594, %v590
    %v955 = vpack.c.b16 %v595, %v591
    %v956 = vpack.c.b16 %v600, %v596
    %v957 = vpack.c.b16 %v601, %v597
    %v958 = vpack.c.b16 %v602, %v598
    %v959 = vpack.c.b16 %v603, %v599
    %v960 = vpack.c.b16 %v608, %v604
    %v961 = vpack.c.b16 %v609, %v605
    %v962 = vpack.c.b16 %v610, %v606
    %v963 = vpack.c.b16 %v611, %v607
    %v964 = vpack.c.b16 %v616, %v612
    %v965 = vpack.c.b16 %v617, %v613
    %v966 = vpack.c.b16 %v618, %v614
    %v967 = vpack.c.b16 %v619, %v615
    %v968 = vpack.c.b16 %v624, %v620
    %v969 = vpack.c.b16 %v625, %v621
    %v970 = vpack.c.b16 %v626, %v622
    %v971 = vpack.c.b16 %v627, %v623
    %v972 = vpack.c.b16 %v632, %v628
    %v973 = vpack.c.b16 %v633, %v629
    %v974 = vpack.c.b16 %v634, %v630
    %v975 = vpack.c.b16 %v635, %v631
    %v976 = vpack.c.b16 %v640, %v636
    %v977 = vpack.c.b16 %v641, %v637
    %v978 = vpack.c.b16 %v642, %v638
    %v979 = vpack.c.b16 %v643, %v639
    %v980 = vpack.c.b16 %v648, %v644
    %v981 = vpack.c.b16 %v649, %v645
    %v982 = vpack.c.b16 %v650, %v646
    %v983 = vpack.c.b16 %v651, %v647
    %v984 = vpack.c.b16 %v656, %v652
    %v985 = vpack.c.b16 %v657, %v653
    %v986 = vpack.c.b16 %v658, %v654
    %v987 = vpack.c.b16 %v659, %v655
    %v988 = vpack.c.b16 %v664, %v660
    %v989 = vpack.c.b16 %v665, %v661
    %v990 = vpack.c.b16 %v666, %v662
    %v991 = vpack.c.b16 %v667, %v663
    %v992 = vpack.c.b16 %v672, %v668
    %v993 = vpack.c.b16 %v673, %v669
    %v994 = vpack.c.b16 %v674, %v670
    %v995 = vpack.c.b16 %v675, %v671
    %v996 = vpack.c.b16 %v680, %v676
    %v997 = vpack.c.b16 %v681, %v677
    %v998 = vpack.c.b16 %v682, %v678
    %v999 = vpack.c.b16 %v683, %v679
    %v1000 = vpack.c.b16 %v688, %v684
    %v1001 = vpack.c.b16 %v689, %v685
    %v1002 = vpack.c.b16 %v690, %v686
    %v1003 = vpack.c.b16 %v691, %v687
    %v1004 = vpack.c.b16 %v696, %v692
    %v1005 = vpack.c.b16 %v697, %v693
    %v1006 = vpack.c.b16 %v698, %v694
    %v1007 = vpack.c.b16 %v699, %v695
    %v1008 = vpack.c.b16 %v704, %v700
    %v1009 = vpack.c.b16 %v705, %v701
    %v1010 = vpack.c.b16 %v706, %v702
    %v1011 = vpack.c.b16 %v707, %v703
    %v1012 = vpack.c.b16 %v712, %v708
    %v1013 = vpack.c.b16 %v713, %v709
    %v1014 = vpack.c.b16 %v714, %v710
    %v1015 = vpack.c.b16 %v715, %v711
    %v1016 = vpack.c.b16 %v720, %v716
    %v1017 = vpack.c.b16 %v721, %v717
    %v1018 = vpack.c.b16 %v722, %v718
    %v1019 = vpack.c.b16 %v723, %v719
    %v1020 = vpack.c.b16 %v728, %v724
    %v1021 = vpack.c.b16 %v729, %v725
    %v1022 = vpack.c.b16 %v730, %v726
    %v1023 = vpack.c.b16 %v731, %v727
    %v1024 = vpack.c.b16 %v736, %v732
    %v1025 = vpack.c.b16 %v737, %v733
    %v1026 = vpack.c.b16 %v738, %v734
    %v1027 = vpack.c.b16 %v739, %v735
    %v1028 = vpack.c.b16 %v744, %v740
    %v1029 = vpack.c.b16 %v745, %v741
    %v1030 = vpack.c.b16 %v746, %v742
    %v1031 = vpack.c.b16 %v747, %v743
    %v1032 = vpack.c.b16 %v752, %v748
    %v1033 = vpack.c.b16 %v753, %v749
    %v1034 = vpack.c.b16 %v754, %v750
    %v1035 = vpack.c.b16 %v755, %v751
    %v1036 = vpack.c.b16 %v760, %v756
    %v1037 = vpack.c.b16 %v761, %v757
    %v1038 = vpack.c.b16 %v762, %v758
    %v1039 = vpack.c.b16 %v763, %v759
    %v1040 = vpack.c.b16 %v768, %v764
    %v1041 = vpack.c.b16 %v769, %v765
    %v1042 = vpack.c.b16 %v770, %v766
    %v1043 = vpack.c.b16 %v771, %v767
    %v1044 = vpack.c.b16 %v776, %v772
    %v1045 = vpack.c.b16 %v777, %v773
    %v1046 = vpack.c.b16 %v778, %v774
    %v1047 = vpack.c.b16 %v779, %v775
    %v1048 = vpack.c.b16 %v784, %v780
    %v1049 = vpack.c.b16 %v785, %v781
    %v1050 = vpack.c.b16 %v786, %v782
    %v1051 = vpack.c.b16 %v787, %v783
    %v1052 = vpack.c.b16 %v792, %v788
    %v1053 = vpack.c.b16 %v793, %v789
    %v1054 = vpack.c.b16 %v794, %v790
    %v1055 = vpack.c.b16 %v795, %v791
    %v1056 = vpack.c.b16 %v800, %v796
    %v1057 = vpack.c.b16 %v801, %v797
    %v1058 = vpack.c.b16 %v802, %v798
    %v1059 = vpack.c.b16 %v803, %v799
    %v1060 = vpack.c.b16 %v808, %v804
    %v1061 = vpack.c.b16 %v809, %v805
    %v1062 = vpack.c.b16 %v810, %v806
    %v1063 = vpack.c.b16 %v811, %v807
    %v1064 = vpack.c.b16 %v816, %v812
    %v1065 = vpack.c.b16 %v817, %v813
    %v1066 = vpack.c.b16 %v818, %v814
    %v1067 = vpack.c.b16 %v819, %v815
    %v1068 = vpack.c.b16 %v824, %v820
    %v1069 = vpack.c.b16 %v825, %v821
    %v1070 = vpack.c.b16 %v826, %v822
    %v1071 = vpack.c.b16 %v827, %v823
    %v1072 = vpack.c.b16 %v832, %v828
    %v1073 = vpack.c.b16 %v833, %v829
    %v1074 = vpack.c.b16 %v834, %v830
    %v1075 = vpack.c.b16 %v835, %v831
    %v1076 = vpack.c.b16 %v840, %v836
    %v1077 = vpack.c.b16 %v841, %v837
    %v1078 = vpack.c.b16 %v842, %v838
    %v1079 = vpack.c.b16 %v843, %v839
    %v1080 = vpack.c.b16 %v848, %v844
    %v1081 = vpack.c.b16 %v849, %v845
    %v1082 = vpack.c.b16 %v850, %v846
    %v1083 = vpack.c.b16 %v851, %v847
    %v1084 = vpack.c.b16 %v856, %v852
    %v1085 = vpack.c.b16 %v857, %v853
    %v1086 = vpack.c.b16 %v858, %v854
    %v1087 = vpack.c.b16 %v859, %v855
    %v1088 = vpack.c.b16 %v864, %v860
    %v1089 = vpack.c.b16 %v865, %v861
    %v1090 = vpack.c.b16 %v866, %v862
    %v1091 = vpack.c.b16 %v867, %v863
    %v1092 = vpack.c.b16 %v872, %v868
    %v1093 = vpack.c.b16 %v873, %v869
    %v1094 = vpack.c.b16 %v874, %v870
    %v1095 = vpack.c.b16 %v875, %v871
    %v1096 = vpack.c.b16 %v880, %v876
    %v1097 = vpack.c.b16 %v881, %v877
    %v1098 = vpack.c.b16 %v882, %v878
    %v1099 = vpack.c.b16 %v883, %v879
    %v1100 = vpack.c.b16 %v888, %v884
    %v1101 = vpack.c.b16 %v889, %v885
    %v1102 = vpack.c.b16 %v890, %v886
    %v1103 = vpack.c.b16 %v891, %v887
    %v1104 = vpack.c.b16 %v896, %v892
    %v1105 = vpack.c.b16 %v897, %v893
    %v1106 = vpack.c.b16 %v898, %v894
    %v1107 = vpack.c.b16 %v899, %v895
    %v1108 = vpack.c.b16 %v904, %v900
    %v1109 = vpack.c.b16 %v905, %v901
    %v1110 = vpack.c.b16 %v906, %v902
    %v1111 = vpack.c.b16 %v907, %v903
    %v1112 = vpack.c.b16 %v912, %v908
    %v1113 = vpack.c.b16 %v913, %v909
    %v1114 = vpack.c.b16 %v914, %v910
    %v1115 = vpack.c.b16 %v915, %v911
    %v1116 = vpack.c.b16 %v920, %v916
    %v1117 = vpack.c.b16 %v921, %v917
    %v1118 = vpack.c.b16 %v922, %v918
    %v1119 = vpack.c.b16 %v923, %v919
    %vm1316 = vcmask 130048
    %v1318 = vsel %vm1316, %v128, 0
    %1320 = vmatpush.bf16.msra.mxu0 %v952
    %1321 = vmatpush.bf16.msra.mxu0 %v948
    %1322 = vmatpush.bf16.msra.mxu0 %v944
    %1323 = vmatpush.bf16.msra.mxu0 %v940
    %1324 = vmatpush.bf16.msra.mxu0 %v936
    %1325 = vmatpush.bf16.msra.mxu0 %v932
    %1326 = vmatpush.bf16.msra.mxu0 %v928
    %1327 = vmatpush.bf16.msra.mxu0 %v924
    %1328 = vmatmul.bf16.gmra.mxu0 %v122
    %v1329 = vpop.f32.mrf.mxu0
    %v1330 = vadd.f32 %v328, %v1329
    %v1331 = vpop.f32.mrf.mxu0
    %1332 = vdwg.mxu0
    %1333 = vmatpush.bf16.msra.mxu0 %v984
    %1334 = vmatpush.bf16.msra.mxu0 %v980
    %1335 = vmatpush.bf16.msra.mxu0 %v976
    %1336 = vmatpush.bf16.msra.mxu0 %v972
    %1337 = vmatpush.bf16.msra.mxu0 %v968
    %1338 = vmatpush.bf16.msra.mxu0 %v964
    %1339 = vmatpush.bf16.msra.mxu0 %v960
    %1340 = vmatpush.bf16.msra.mxu0 %v956
    %1341 = vmatmul.bf16.gmra.mxu0 %v123
    %v1342 = vpop.f32.mrf.mxu0
    %v1343 = vadd.f32 %v1330, %v1342
    %v1344 = vpop.f32.mrf.mxu0
    %1345 = vdwg.mxu0
    %1346 = vmatpush.bf16.msra.mxu0 %v1016
    %1347 = vmatpush.bf16.msra.mxu0 %v1012
    %1348 = vmatpush.bf16.msra.mxu0 %v1008
    %1349 = vmatpush.bf16.msra.mxu0 %v1004
    %1350 = vmatpush.bf16.msra.mxu0 %v1000
    %1351 = vmatpush.bf16.msra.mxu0 %v996
    %1352 = vmatpush.bf16.msra.mxu0 %v992
    %1353 = vmatpush.bf16.msra.mxu0 %v988
    %1354 = vmatmul.bf16.gmra.mxu0 %v124
    %v1355 = vpop.f32.mrf.mxu0
    %v1356 = vadd.f32 %v1343, %v1355
    %v1357 = vpop.f32.mrf.mxu0
    %1358 = vdwg.mxu0
    %1359 = vmatpush.bf16.msra.mxu0 %v1048
    %1360 = vmatpush.bf16.msra.mxu0 %v1044
    %1361 = vmatpush.bf16.msra.mxu0 %v1040
    %1362 = vmatpush.bf16.msra.mxu0 %v1036
    %1363 = vmatpush.bf16.msra.mxu0 %v1032
    %1364 = vmatpush.bf16.msra.mxu0 %v1028
    %1365 = vmatpush.bf16.msra.mxu0 %v1024
    %1366 = vmatpush.bf16.msra.mxu0 %v1020
    %1367 = vmatmul.bf16.gmra.mxu0 %v125
    %v1368 = vpop.f32.mrf.mxu0
    %v1369 = vadd.f32 %v1356, %v1368
    %v1370 = vpop.f32.mrf.mxu0
    %1371 = vdwg.mxu0
    %1372 = vmatpush.bf16.msra.mxu0 %v1080
    %1373 = vmatpush.bf16.msra.mxu0 %v1076
    %1374 = vmatpush.bf16.msra.mxu0 %v1072
    %1375 = vmatpush.bf16.msra.mxu0 %v1068
    %1376 = vmatpush.bf16.msra.mxu0 %v1064
    %1377 = vmatpush.bf16.msra.mxu0 %v1060
    %1378 = vmatpush.bf16.msra.mxu0 %v1056
    %1379 = vmatpush.bf16.msra.mxu0 %v1052
    %1380 = vmatmul.bf16.gmra.mxu0 %v126
    %v1381 = vpop.f32.mrf.mxu0
    %v1382 = vadd.f32 %v1369, %v1381
    %v1383 = vpop.f32.mrf.mxu0
    %1384 = vdwg.mxu0
    %1385 = vmatpush.bf16.msra.mxu0 %v1112
    %1386 = vmatpush.bf16.msra.mxu0 %v1108
    %1387 = vmatpush.bf16.msra.mxu0 %v1104
    %1388 = vmatpush.bf16.msra.mxu0 %v1100
    %1389 = vmatpush.bf16.msra.mxu0 %v1096
    %1390 = vmatpush.bf16.msra.mxu0 %v1092
    %1391 = vmatpush.bf16.msra.mxu0 %v1088
    %1392 = vmatpush.bf16.msra.mxu0 %v1084
    %1393 = vmatmul.bf16.gmra.mxu0 %v127
    %v1394 = vpop.f32.mrf.mxu0
    %v1395 = vadd.f32 %v1382, %v1394
    %v1396 = vpop.f32.mrf.mxu0
    %1397 = vdwg.mxu0
    %1398 = vmatpush.bf16.msra.mxu0 0
    %1399 = vmatpush.bf16.msra.mxu0 0
    %1400 = vmatpush.bf16.msra.mxu0 0
    %1401 = vmatpush.bf16.msra.mxu0 0
    %1402 = vmatpush.bf16.msra.mxu0 0
    %1403 = vmatpush.bf16.msra.mxu0 0
    %1404 = vmatpush.bf16.msra.mxu0 0
    %1405 = vmatpush.bf16.msra.mxu0 %v1116
    %1406 = vmatmul.bf16.gmra.mxu0 %v1318
    %v1407 = vpop.f32.mrf.mxu0
    %v1408 = vadd.f32 %v1395, %v1407
    %v1409 = vpop.f32.mrf.mxu0
    %1410 = vdwg.mxu0
    %1411 = vmatpush.bf16.msra.mxu0 %v953
    %1412 = vmatpush.bf16.msra.mxu0 %v949
    %1413 = vmatpush.bf16.msra.mxu0 %v945
    %1414 = vmatpush.bf16.msra.mxu0 %v941
    %1415 = vmatpush.bf16.msra.mxu0 %v937
    %1416 = vmatpush.bf16.msra.mxu0 %v933
    %1417 = vmatpush.bf16.msra.mxu0 %v929
    %1418 = vmatpush.bf16.msra.mxu0 %v925
    %1419 = vmatmul.bf16.gmra.mxu0 %v122
    %v1420 = vpop.f32.mrf.mxu0
    %v1421 = vadd.f32 %v329, %v1420
    %v1422 = vpop.f32.mrf.mxu0
    %1423 = vdwg.mxu0
    %1424 = vmatpush.bf16.msra.mxu0 %v985
    %1425 = vmatpush.bf16.msra.mxu0 %v981
    %1426 = vmatpush.bf16.msra.mxu0 %v977
    %1427 = vmatpush.bf16.msra.mxu0 %v973
    %1428 = vmatpush.bf16.msra.mxu0 %v969
    %1429 = vmatpush.bf16.msra.mxu0 %v965
    %1430 = vmatpush.bf16.msra.mxu0 %v961
    %1431 = vmatpush.bf16.msra.mxu0 %v957
    %1432 = vmatmul.bf16.gmra.mxu0 %v123
    %v1433 = vpop.f32.mrf.mxu0
    %v1434 = vadd.f32 %v1421, %v1433
    %v1435 = vpop.f32.mrf.mxu0
    %1436 = vdwg.mxu0
    %1437 = vmatpush.bf16.msra.mxu0 %v1017
    %1438 = vmatpush.bf16.msra.mxu0 %v1013
    %1439 = vmatpush.bf16.msra.mxu0 %v1009
    %1440 = vmatpush.bf16.msra.mxu0 %v1005
    %1441 = vmatpush.bf16.msra.mxu0 %v1001
    %1442 = vmatpush.bf16.msra.mxu0 %v997
    %1443 = vmatpush.bf16.msra.mxu0 %v993
    %1444 = vmatpush.bf16.msra.mxu0 %v989
    %1445 = vmatmul.bf16.gmra.mxu0 %v124
    %v1446 = vpop.f32.mrf.mxu0
    %v1447 = vadd.f32 %v1434, %v1446
    %v1448 = vpop.f32.mrf.mxu0
    %1449 = vdwg.mxu0
    %1450 = vmatpush.bf16.msra.mxu0 %v1049
    %1451 = vmatpush.bf16.msra.mxu0 %v1045
    %1452 = vmatpush.bf16.msra.mxu0 %v1041
    %1453 = vmatpush.bf16.msra.mxu0 %v1037
    %1454 = vmatpush.bf16.msra.mxu0 %v1033
    %1455 = vmatpush.bf16.msra.mxu0 %v1029
    %1456 = vmatpush.bf16.msra.mxu0 %v1025
    %1457 = vmatpush.bf16.msra.mxu0 %v1021
    %1458 = vmatmul.bf16.gmra.mxu0 %v125
    %v1459 = vpop.f32.mrf.mxu0
    %v1460 = vadd.f32 %v1447, %v1459
    %v1461 = vpop.f32.mrf.mxu0
    %1462 = vdwg.mxu0
    %1463 = vmatpush.bf16.msra.mxu0 %v1081
    %1464 = vmatpush.bf16.msra.mxu0 %v1077
    %1465 = vmatpush.bf16.msra.mxu0 %v1073
    %1466 = vmatpush.bf16.msra.mxu0 %v1069
    %1467 = vmatpush.bf16.msra.mxu0 %v1065
    %1468 = vmatpush.bf16.msra.mxu0 %v1061
    %1469 = vmatpush.bf16.msra.mxu0 %v1057
    %1470 = vmatpush.bf16.msra.mxu0 %v1053
    %1471 = vmatmul.bf16.gmra.mxu0 %v126
    %v1472 = vpop.f32.mrf.mxu0
    %v1473 = vadd.f32 %v1460, %v1472
    %v1474 = vpop.f32.mrf.mxu0
    %1475 = vdwg.mxu0
    %1476 = vmatpush.bf16.msra.mxu0 %v1113
    %1477 = vmatpush.bf16.msra.mxu0 %v1109
    %1478 = vmatpush.bf16.msra.mxu0 %v1105
    %1479 = vmatpush.bf16.msra.mxu0 %v1101
    %1480 = vmatpush.bf16.msra.mxu0 %v1097
    %1481 = vmatpush.bf16.msra.mxu0 %v1093
    %1482 = vmatpush.bf16.msra.mxu0 %v1089
    %1483 = vmatpush.bf16.msra.mxu0 %v1085
    %1484 = vmatmul.bf16.gmra.mxu0 %v127
    %v1485 = vpop.f32.mrf.mxu0
    %v1486 = vadd.f32 %v1473, %v1485
    %v1487 = vpop.f32.mrf.mxu0
    %1488 = vdwg.mxu0
    %1489 = vmatpush.bf16.msra.mxu0 0
    %1490 = vmatpush.bf16.msra.mxu0 0
    %1491 = vmatpush.bf16.msra.mxu0 0
    %1492 = vmatpush.bf16.msra.mxu0 0
    %1493 = vmatpush.bf16.msra.mxu0 0
    %1494 = vmatpush.bf16.msra.mxu0 0
    %1495 = vmatpush.bf16.msra.mxu0 0
    %1496 = vmatpush.bf16.msra.mxu0 %v1117
    %1497 = vmatmul.bf16.gmra.mxu0 %v1318
    %v1498 = vpop.f32.mrf.mxu0
    %v1499 = vadd.f32 %v1486, %v1498
    %v1500 = vpop.f32.mrf.mxu0
    %1501 = vdwg.mxu0
    %1502 = vmatpush.bf16.msra.mxu0 %v954
    %1503 = vmatpush.bf16.msra.mxu0 %v950
    %1504 = vmatpush.bf16.msra.mxu0 %v946
    %1505 = vmatpush.bf16.msra.mxu0 %v942
    %1506 = vmatpush.bf16.msra.mxu0 %v938
    %1507 = vmatpush.bf16.msra.mxu0 %v934
    %1508 = vmatpush.bf16.msra.mxu0 %v930
    %1509 = vmatpush.bf16.msra.mxu0 %v926
    %1510 = vmatmul.bf16.gmra.mxu0 %v122
    %v1511 = vpop.f32.mrf.mxu0
    %v1512 = vadd.f32 %v330, %v1511
    %v1513 = vpop.f32.mrf.mxu0
    %1514 = vdwg.mxu0
    %1515 = vmatpush.bf16.msra.mxu0 %v986
    %1516 = vmatpush.bf16.msra.mxu0 %v982
    %1517 = vmatpush.bf16.msra.mxu0 %v978
    %1518 = vmatpush.bf16.msra.mxu0 %v974
    %1519 = vmatpush.bf16.msra.mxu0 %v970
    %1520 = vmatpush.bf16.msra.mxu0 %v966
    %1521 = vmatpush.bf16.msra.mxu0 %v962
    %1522 = vmatpush.bf16.msra.mxu0 %v958
    %1523 = vmatmul.bf16.gmra.mxu0 %v123
    %v1524 = vpop.f32.mrf.mxu0
    %v1525 = vadd.f32 %v1512, %v1524
    %v1526 = vpop.f32.mrf.mxu0
    %1527 = vdwg.mxu0
    %1528 = vmatpush.bf16.msra.mxu0 %v1018
    %1529 = vmatpush.bf16.msra.mxu0 %v1014
    %1530 = vmatpush.bf16.msra.mxu0 %v1010
    %1531 = vmatpush.bf16.msra.mxu0 %v1006
    %1532 = vmatpush.bf16.msra.mxu0 %v1002
    %1533 = vmatpush.bf16.msra.mxu0 %v998
    %1534 = vmatpush.bf16.msra.mxu0 %v994
    %1535 = vmatpush.bf16.msra.mxu0 %v990
    %1536 = vmatmul.bf16.gmra.mxu0 %v124
    %v1537 = vpop.f32.mrf.mxu0
    %v1538 = vadd.f32 %v1525, %v1537
    %v1539 = vpop.f32.mrf.mxu0
    %1540 = vdwg.mxu0
    %1541 = vmatpush.bf16.msra.mxu0 %v1050
    %1542 = vmatpush.bf16.msra.mxu0 %v1046
    %1543 = vmatpush.bf16.msra.mxu0 %v1042
    %1544 = vmatpush.bf16.msra.mxu0 %v1038
    %1545 = vmatpush.bf16.msra.mxu0 %v1034
    %1546 = vmatpush.bf16.msra.mxu0 %v1030
    %1547 = vmatpush.bf16.msra.mxu0 %v1026
    %1548 = vmatpush.bf16.msra.mxu0 %v1022
    %1549 = vmatmul.bf16.gmra.mxu0 %v125
    %v1550 = vpop.f32.mrf.mxu0
    %v1551 = vadd.f32 %v1538, %v1550
    %v1552 = vpop.f32.mrf.mxu0
    %1553 = vdwg.mxu0
    %1554 = vmatpush.bf16.msra.mxu0 %v1082
    %1555 = vmatpush.bf16.msra.mxu0 %v1078
    %1556 = vmatpush.bf16.msra.mxu0 %v1074
    %1557 = vmatpush.bf16.msra.mxu0 %v1070
    %1558 = vmatpush.bf16.msra.mxu0 %v1066
    %1559 = vmatpush.bf16.msra.mxu0 %v1062
    %1560 = vmatpush.bf16.msra.mxu0 %v1058
    %1561 = vmatpush.bf16.msra.mxu0 %v1054
    %1562 = vmatmul.bf16.gmra.mxu0 %v126
    %v1563 = vpop.f32.mrf.mxu0
    %v1564 = vadd.f32 %v1551, %v1563
    %v1565 = vpop.f32.mrf.mxu0
    %1566 = vdwg.mxu0
    %1567 = vmatpush.bf16.msra.mxu0 %v1114
    %1568 = vmatpush.bf16.msra.mxu0 %v1110
    %1569 = vmatpush.bf16.msra.mxu0 %v1106
    %1570 = vmatpush.bf16.msra.mxu0 %v1102
    %1571 = vmatpush.bf16.msra.mxu0 %v1098
    %1572 = vmatpush.bf16.msra.mxu0 %v1094
    %1573 = vmatpush.bf16.msra.mxu0 %v1090
    %1574 = vmatpush.bf16.msra.mxu0 %v1086
    %1575 = vmatmul.bf16.gmra.mxu0 %v127
    %v1576 = vpop.f32.mrf.mxu0
    %v1577 = vadd.f32 %v1564, %v1576
    %v1578 = vpop.f32.mrf.mxu0
    %1579 = vdwg.mxu0
    %1580 = vmatpush.bf16.msra.mxu0 0
    %1581 = vmatpush.bf16.msra.mxu0 0
    %1582 = vmatpush.bf16.msra.mxu0 0
    %1583 = vmatpush.bf16.msra.mxu0 0
    %1584 = vmatpush.bf16.msra.mxu0 0
    %1585 = vmatpush.bf16.msra.mxu0 0
    %1586 = vmatpush.bf16.msra.mxu0 0
    %1587 = vmatpush.bf16.msra.mxu0 %v1118
    %1588 = vmatmul.bf16.gmra.mxu0 %v1318
    %v1589 = vpop.f32.mrf.mxu0
    %v1590 = vadd.f32 %v1577, %v1589
    %v1591 = vpop.f32.mrf.mxu0
    %1592 = vdwg.mxu0
    %1593 = vmatpush.bf16.msra.mxu0 %v955
    %1594 = vmatpush.bf16.msra.mxu0 %v951
    %1595 = vmatpush.bf16.msra.mxu0 %v947
    %1596 = vmatpush.bf16.msra.mxu0 %v943
    %1597 = vmatpush.bf16.msra.mxu0 %v939
    %1598 = vmatpush.bf16.msra.mxu0 %v935
    %1599 = vmatpush.bf16.msra.mxu0 %v931
    %1600 = vmatpush.bf16.msra.mxu0 %v927
    %1601 = vmatmul.bf16.gmra.mxu0 %v122
    %v1602 = vpop.f32.mrf.mxu0
    %v1603 = vadd.f32 %v331, %v1602
    %v1604 = vpop.f32.mrf.mxu0
    %1605 = vdwg.mxu0
    %1606 = vmatpush.bf16.msra.mxu0 %v987
    %1607 = vmatpush.bf16.msra.mxu0 %v983
    %1608 = vmatpush.bf16.msra.mxu0 %v979
    %1609 = vmatpush.bf16.msra.mxu0 %v975
    %1610 = vmatpush.bf16.msra.mxu0 %v971
    %1611 = vmatpush.bf16.msra.mxu0 %v967
    %1612 = vmatpush.bf16.msra.mxu0 %v963
    %1613 = vmatpush.bf16.msra.mxu0 %v959
    %1614 = vmatmul.bf16.gmra.mxu0 %v123
    %v1615 = vpop.f32.mrf.mxu0
    %v1616 = vadd.f32 %v1603, %v1615
    %v1617 = vpop.f32.mrf.mxu0
    %1618 = vdwg.mxu0
    %1619 = vmatpush.bf16.msra.mxu0 %v1019
    %1620 = vmatpush.bf16.msra.mxu0 %v1015
    %1621 = vmatpush.bf16.msra.mxu0 %v1011
    %1622 = vmatpush.bf16.msra.mxu0 %v1007
    %1623 = vmatpush.bf16.msra.mxu0 %v1003
    %1624 = vmatpush.bf16.msra.mxu0 %v999
    %1625 = vmatpush.bf16.msra.mxu0 %v995
    %1626 = vmatpush.bf16.msra.mxu0 %v991
    %1627 = vmatmul.bf16.gmra.mxu0 %v124
    %v1628 = vpop.f32.mrf.mxu0
    %v1629 = vadd.f32 %v1616, %v1628
    %v1630 = vpop.f32.mrf.mxu0
    %1631 = vdwg.mxu0
    %1632 = vmatpush.bf16.msra.mxu0 %v1051
    %1633 = vmatpush.bf16.msra.mxu0 %v1047
    %1634 = vmatpush.bf16.msra.mxu0 %v1043
    %1635 = vmatpush.bf16.msra.mxu0 %v1039
    %1636 = vmatpush.bf16.msra.mxu0 %v1035
    %1637 = vmatpush.bf16.msra.mxu0 %v1031
    %1638 = vmatpush.bf16.msra.mxu0 %v1027
    %1639 = vmatpush.bf16.msra.mxu0 %v1023
    %1640 = vmatmul.bf16.gmra.mxu0 %v125
    %v1641 = vpop.f32.mrf.mxu0
    %v1642 = vadd.f32 %v1629, %v1641
    %v1643 = vpop.f32.mrf.mxu0
    %1644 = vdwg.mxu0
    %1645 = vmatpush.bf16.msra.mxu0 %v1083
    %1646 = vmatpush.bf16.msra.mxu0 %v1079
    %1647 = vmatpush.bf16.msra.mxu0 %v1075
    %1648 = vmatpush.bf16.msra.mxu0 %v1071
    %1649 = vmatpush.bf16.msra.mxu0 %v1067
    %1650 = vmatpush.bf16.msra.mxu0 %v1063
    %1651 = vmatpush.bf16.msra.mxu0 %v1059
    %1652 = vmatpush.bf16.msra.mxu0 %v1055
    %1653 = vmatmul.bf16.gmra.mxu0 %v126
    %v1654 = vpop.f32.mrf.mxu0
    %v1655 = vadd.f32 %v1642, %v1654
    %v1656 = vpop.f32.mrf.mxu0
    %1657 = vdwg.mxu0
    %1658 = vmatpush.bf16.msra.mxu0 %v1115
    %1659 = vmatpush.bf16.msra.mxu0 %v1111
    %1660 = vmatpush.bf16.msra.mxu0 %v1107
    %1661 = vmatpush.bf16.msra.mxu0 %v1103
    %1662 = vmatpush.bf16.msra.mxu0 %v1099
    %1663 = vmatpush.bf16.msra.mxu0 %v1095
    %1664 = vmatpush.bf16.msra.mxu0 %v1091
    %1665 = vmatpush.bf16.msra.mxu0 %v1087
    %1666 = vmatmul.bf16.gmra.mxu0 %v127
    %v1667 = vpop.f32.mrf.mxu0
    %v1668 = vadd.f32 %v1655, %v1667
    %v1669 = vpop.f32.mrf.mxu0
    %1670 = vdwg.mxu0
    %1671 = vmatpush.bf16.msra.mxu0 0
    %1672 = vmatpush.bf16.msra.mxu0 0
    %1673 = vmatpush.bf16.msra.mxu0 0
    %1674 = vmatpush.bf16.msra.mxu0 0
    %1675 = vmatpush.bf16.msra.mxu0 0
    %1676 = vmatpush.bf16.msra.mxu0 0
    %1677 = vmatpush.bf16.msra.mxu0 0
    %1678 = vmatpush.bf16.msra.mxu0 %v1119
    %1679 = vmatmul.bf16.gmra.mxu0 %v1318
    %v1680 = vpop.f32.mrf.mxu0
    %v1681 = vadd.f32 %v1668, %v1680
    %v1682 = vpop.f32.mrf.mxu0
    %1683 = vdwg.mxu0
    %v1684 = vmax.f32 %v1408, 0.0
    %v1685 = vmax.f32 %v1499, 0.0
    %v1686 = vmax.f32 %v1590, 0.0
    %v1687 = vmax.f32 %v1681, 0.0
    %v1688 = vpack.c.bf16 %v1684, %v1684
    %v1689 = vpack.c.bf16 %v1685, %v1685
    %v1690 = vpack.c.bf16 %v1686, %v1686
    %v1691 = vpack.c.bf16 %v1687, %v1687
    %v1692 = vld [vmem:[#allocation7] sm:$0xff]
    %v1693 = vld [vmem:[#allocation7 + $0x8] sm:$0xff]
    %v1694 = vld [vmem:[#allocation7 + $0x10] sm:$0xff]
    %v1695 = vld [vmem:[#allocation7 + $0x18] sm:$0xff]
    %v1696 = vld [vmem:[#allocation7 + $0x20] sm:$0xff]
    %v1697 = vld [vmem:[#allocation7 + $0x28] sm:$0xff]
    %v1698 = vld [vmem:[#allocation7 + $0x30] sm:$0xff]
    %v1699 = vld [vmem:[#allocation7 + $0x38] sm:$0xff]
    %v1700 = vld [vmem:[#allocation7 + $0x40] sm:$0xff]
    %v1701 = vld [vmem:[#allocation7 + $0x48] sm:$0xff]
    %v1702 = vld [vmem:[#allocation7 + $0x50] sm:$0xff]
    %v1703 = vld [vmem:[#allocation7 + $0x58] sm:$0xff]
    %v1704 = vld [vmem:[#allocation7 + $0x60] sm:$0xff]
    %v1705 = vld [vmem:[#allocation7 + $0x68] sm:$0xff]
    %v1706 = vld [vmem:[#allocation7 + $0x70] sm:$0xff]
    %v1707 = vld [vmem:[#allocation7 + $0x78] sm:$0xff]
    %v1708 = vld [vmem:[#allocation7 + $0x80] sm:$0xff]
    %v1709 = vld [vmem:[#allocation7 + $0x88] sm:$0xff]
    %v1710 = vld [vmem:[#allocation7 + $0x90] sm:$0xff]
    %v1711 = vld [vmem:[#allocation7 + $0x98] sm:$0xff]
    %v1712 = vld [vmem:[#allocation7 + $0xa0] sm:$0xff]
    %v1713 = vld [vmem:[#allocation7 + $0xa8] sm:$0xff]
    %v1714 = vld [vmem:[#allocation7 + $0xb0] sm:$0xff]
    %v1715 = vld [vmem:[#allocation7 + $0xb8] sm:$0xff]
    %v1716 = vld [vmem:[#allocation7 + $0xc0] sm:$0xff]
    %v1717 = vld [vmem:[#allocation7 + $0xc8] sm:$0xff]
    %v1718 = vld [vmem:[#allocation7 + $0xd0] sm:$0xff]
    %v1719 = vld [vmem:[#allocation7 + $0xd8] sm:$0xff]
    %v1720 = vld [vmem:[#allocation7 + $0xe0] sm:$0xff]
    %v1721 = vld [vmem:[#allocation7 + $0xe8] sm:$0xff]
    %v1722 = vld [vmem:[#allocation7 + $0xf0] sm:$0xff]
    %v1723 = vld [vmem:[#allocation7 + $0xf8] sm:$0xff]
    %v1724 = vld [vmem:[#allocation7 + $0x100] sm:$0xff]
    %v1725 = vld [vmem:[#allocation7 + $0x108] sm:$0xff]
    %v1726 = vld [vmem:[#allocation7 + $0x110] sm:$0xff]
    %v1727 = vld [vmem:[#allocation7 + $0x118] sm:$0xff]
    %v1728 = vld [vmem:[#allocation7 + $0x120] sm:$0xff]
    %v1729 = vld [vmem:[#allocation7 + $0x128] sm:$0xff]
    %v1730 = vld [vmem:[#allocation7 + $0x130] sm:$0xff]
    %v1731 = vld [vmem:[#allocation7 + $0x138] sm:$0xff]
    %v1732 = vld [vmem:[#allocation7 + $0x140] sm:$0xff]
    %v1733 = vld [vmem:[#allocation7 + $0x148] sm:$0xff]
    %v1734 = vld [vmem:[#allocation7 + $0x150] sm:$0xff]
    %v1735 = vld [vmem:[#allocation7 + $0x158] sm:$0xff]
    %v1736 = vld [vmem:[#allocation7 + $0x160] sm:$0xff]
    %v1737 = vld [vmem:[#allocation7 + $0x168] sm:$0xff]
    %v1738 = vld [vmem:[#allocation7 + $0x170] sm:$0xff]
    %v1739 = vld [vmem:[#allocation7 + $0x178] sm:$0xff]
    %v1740 = vld [vmem:[#allocation7 + $0x180] sm:$0xff]
    %v1741 = vld [vmem:[#allocation7 + $0x188] sm:$0xff]
    %v1742 = vld [vmem:[#allocation7 + $0x190] sm:$0xff]
    %v1743 = vld [vmem:[#allocation7 + $0x198] sm:$0xff]
    %v1744 = vld [vmem:[#allocation7 + $0x1a0] sm:$0xff]
    %v1745 = vld [vmem:[#allocation7 + $0x1a8] sm:$0xff]
    %v1746 = vld [vmem:[#allocation7 + $0x1b0] sm:$0xff]
    %v1747 = vld [vmem:[#allocation7 + $0x1b8] sm:$0xff]
    %v1748 = vld [vmem:[#allocation7 + $0x1c0] sm:$0xff]
    %v1749 = vld [vmem:[#allocation7 + $0x1c8] sm:$0xff]
    %v1750 = vld [vmem:[#allocation7 + $0x1d0] sm:$0xff]
    %v1751 = vld [vmem:[#allocation7 + $0x1d8] sm:$0xff]
    %v1752 = vld [vmem:[#allocation7 + $0x1e0] sm:$0xff]
    %v1753 = vld [vmem:[#allocation7 + $0x1e8] sm:$0xff]
    %v1754 = vld [vmem:[#allocation7 + $0x1f0] sm:$0xff]
    %v1755 = vld [vmem:[#allocation7 + $0x1f8] sm:$0xff]
    %v1756 = vld [vmem:[%s5] sm:$0x3]
    %v1758 = vperm.slane %v1756, 0
    %v1759 = vperm.slane %v1756, 1
    %v1826 = vunpack.c.l.b16 %v1692
    %v1827 = vunpack.c.h.b16 %v1692
    %v1828 = vunpack.c.l.b16 %v1693
    %v1829 = vunpack.c.h.b16 %v1693
    %v1830 = vunpack.c.l.b16 %v1694
    %v1831 = vunpack.c.h.b16 %v1694
    %v1832 = vunpack.c.l.b16 %v1695
    %v1833 = vunpack.c.h.b16 %v1695
    %v1834 = vunpack.c.l.b16 %v1696
    %v1835 = vunpack.c.h.b16 %v1696
    %v1836 = vunpack.c.l.b16 %v1697
    %v1837 = vunpack.c.h.b16 %v1697
    %v1838 = vunpack.c.l.b16 %v1698
    %v1839 = vunpack.c.h.b16 %v1698
    %v1840 = vunpack.c.l.b16 %v1699
    %v1841 = vunpack.c.h.b16 %v1699
    %v1842 = vunpack.c.l.b16 %v1700
    %v1843 = vunpack.c.h.b16 %v1700
    %v1844 = vunpack.c.l.b16 %v1701
    %v1845 = vunpack.c.h.b16 %v1701
    %v1846 = vunpack.c.l.b16 %v1702
    %v1847 = vunpack.c.h.b16 %v1702
    %v1848 = vunpack.c.l.b16 %v1703
    %v1849 = vunpack.c.h.b16 %v1703
    %v1850 = vunpack.c.l.b16 %v1704
    %v1851 = vunpack.c.h.b16 %v1704
    %v1852 = vunpack.c.l.b16 %v1705
    %v1853 = vunpack.c.h.b16 %v1705
    %v1854 = vunpack.c.l.b16 %v1706
    %v1855 = vunpack.c.h.b16 %v1706
    %v1856 = vunpack.c.l.b16 %v1707
    %v1857 = vunpack.c.h.b16 %v1707
    %v1858 = vunpack.c.l.b16 %v1708
    %v1859 = vunpack.c.h.b16 %v1708
    %v1860 = vunpack.c.l.b16 %v1709
    %v1861 = vunpack.c.h.b16 %v1709
    %v1862 = vunpack.c.l.b16 %v1710
    %v1863 = vunpack.c.h.b16 %v1710
    %v1864 = vunpack.c.l.b16 %v1711
    %v1865 = vunpack.c.h.b16 %v1711
    %v1866 = vunpack.c.l.b16 %v1712
    %v1867 = vunpack.c.h.b16 %v1712
    %v1868 = vunpack.c.l.b16 %v1713
    %v1869 = vunpack.c.h.b16 %v1713
    %v1870 = vunpack.c.l.b16 %v1714
    %v1871 = vunpack.c.h.b16 %v1714
    %v1872 = vunpack.c.l.b16 %v1715
    %v1873 = vunpack.c.h.b16 %v1715
    %v1874 = vunpack.c.l.b16 %v1716
    %v1875 = vunpack.c.h.b16 %v1716
    %v1876 = vunpack.c.l.b16 %v1717
    %v1877 = vunpack.c.h.b16 %v1717
    %v1878 = vunpack.c.l.b16 %v1718
    %v1879 = vunpack.c.h.b16 %v1718
    %v1880 = vunpack.c.l.b16 %v1719
    %v1881 = vunpack.c.h.b16 %v1719
    %v1882 = vunpack.c.l.b16 %v1720
    %v1883 = vunpack.c.h.b16 %v1720
    %v1884 = vunpack.c.l.b16 %v1721
    %v1885 = vunpack.c.h.b16 %v1721
    %v1886 = vunpack.c.l.b16 %v1722
    %v1887 = vunpack.c.h.b16 %v1722
    %v1888 = vunpack.c.l.b16 %v1723
    %v1889 = vunpack.c.h.b16 %v1723
    %v1890 = vunpack.c.l.b16 %v1724
    %v1891 = vunpack.c.h.b16 %v1724
    %v1892 = vunpack.c.l.b16 %v1725
    %v1893 = vunpack.c.h.b16 %v1725
    %v1894 = vunpack.c.l.b16 %v1726
    %v1895 = vunpack.c.h.b16 %v1726
    %v1896 = vunpack.c.l.b16 %v1727
    %v1897 = vunpack.c.h.b16 %v1727
    %v1898 = vunpack.c.l.b16 %v1728
    %v1899 = vunpack.c.h.b16 %v1728
    %v1900 = vunpack.c.l.b16 %v1729
    %v1901 = vunpack.c.h.b16 %v1729
    %v1902 = vunpack.c.l.b16 %v1730
    %v1903 = vunpack.c.h.b16 %v1730
    %v1904 = vunpack.c.l.b16 %v1731
    %v1905 = vunpack.c.h.b16 %v1731
    %v1906 = vunpack.c.l.b16 %v1732
    %v1907 = vunpack.c.h.b16 %v1732
    %v1908 = vunpack.c.l.b16 %v1733
    %v1909 = vunpack.c.h.b16 %v1733
    %v1910 = vunpack.c.l.b16 %v1734
    %v1911 = vunpack.c.h.b16 %v1734
    %v1912 = vunpack.c.l.b16 %v1735
    %v1913 = vunpack.c.h.b16 %v1735
    %v1914 = vunpack.c.l.b16 %v1736
    %v1915 = vunpack.c.h.b16 %v1736
    %v1916 = vunpack.c.l.b16 %v1737
    %v1917 = vunpack.c.h.b16 %v1737
    %v1918 = vunpack.c.l.b16 %v1738
    %v1919 = vunpack.c.h.b16 %v1738
    %v1920 = vunpack.c.l.b16 %v1739
    %v1921 = vunpack.c.h.b16 %v1739
    %v1922 = vunpack.c.l.b16 %v1740
    %v1923 = vunpack.c.h.b16 %v1740
    %v1924 = vunpack.c.l.b16 %v1741
    %v1925 = vunpack.c.h.b16 %v1741
    %v1926 = vunpack.c.l.b16 %v1742
    %v1927 = vunpack.c.h.b16 %v1742
    %v1928 = vunpack.c.l.b16 %v1743
    %v1929 = vunpack.c.h.b16 %v1743
    %v1930 = vunpack.c.l.b16 %v1744
    %v1931 = vunpack.c.h.b16 %v1744
    %v1932 = vunpack.c.l.b16 %v1745
    %v1933 = vunpack.c.h.b16 %v1745
    %v1934 = vunpack.c.l.b16 %v1746
    %v1935 = vunpack.c.h.b16 %v1746
    %v1936 = vunpack.c.l.b16 %v1747
    %v1937 = vunpack.c.h.b16 %v1747
    %v1938 = vunpack.c.l.b16 %v1748
    %v1939 = vunpack.c.h.b16 %v1748
    %v1940 = vunpack.c.l.b16 %v1749
    %v1941 = vunpack.c.h.b16 %v1749
    %v1942 = vunpack.c.l.b16 %v1750
    %v1943 = vunpack.c.h.b16 %v1750
    %v1944 = vunpack.c.l.b16 %v1751
    %v1945 = vunpack.c.h.b16 %v1751
    %v1946 = vunpack.c.l.b16 %v1752
    %v1947 = vunpack.c.h.b16 %v1752
    %v1948 = vunpack.c.l.b16 %v1753
    %v1949 = vunpack.c.h.b16 %v1753
    %v1950 = vunpack.c.l.b16 %v1754
    %v1951 = vunpack.c.h.b16 %v1754
    %v1952 = vunpack.c.l.b16 %v1755
    %v1953 = vunpack.c.h.b16 %v1755
    %v1954 = vpack.c.b16 %v1828, %v1826
    %v1955 = vpack.c.b16 %v1829, %v1827
    %v1956 = vpack.c.b16 %v1832, %v1830
    %v1957 = vpack.c.b16 %v1833, %v1831
    %v1958 = vpack.c.b16 %v1836, %v1834
    %v1959 = vpack.c.b16 %v1837, %v1835
    %v1960 = vpack.c.b16 %v1840, %v1838
    %v1961 = vpack.c.b16 %v1841, %v1839
    %v1962 = vpack.c.b16 %v1844, %v1842
    %v1963 = vpack.c.b16 %v1845, %v1843
    %v1964 = vpack.c.b16 %v1848, %v1846
    %v1965 = vpack.c.b16 %v1849, %v1847
    %v1966 = vpack.c.b16 %v1852, %v1850
    %v1967 = vpack.c.b16 %v1853, %v1851
    %v1968 = vpack.c.b16 %v1856, %v1854
    %v1969 = vpack.c.b16 %v1857, %v1855
    %v1970 = vpack.c.b16 %v1860, %v1858
    %v1971 = vpack.c.b16 %v1861, %v1859
    %v1972 = vpack.c.b16 %v1864, %v1862
    %v1973 = vpack.c.b16 %v1865, %v1863
    %v1974 = vpack.c.b16 %v1868, %v1866
    %v1975 = vpack.c.b16 %v1869, %v1867
    %v1976 = vpack.c.b16 %v1872, %v1870
    %v1977 = vpack.c.b16 %v1873, %v1871
    %v1978 = vpack.c.b16 %v1876, %v1874
    %v1979 = vpack.c.b16 %v1877, %v1875
    %v1980 = vpack.c.b16 %v1880, %v1878
    %v1981 = vpack.c.b16 %v1881, %v1879
    %v1982 = vpack.c.b16 %v1884, %v1882
    %v1983 = vpack.c.b16 %v1885, %v1883
    %v1984 = vpack.c.b16 %v1888, %v1886
    %v1985 = vpack.c.b16 %v1889, %v1887
    %v1986 = vpack.c.b16 %v1892, %v1890
    %v1987 = vpack.c.b16 %v1893, %v1891
    %v1988 = vpack.c.b16 %v1896, %v1894
    %v1989 = vpack.c.b16 %v1897, %v1895
    %v1990 = vpack.c.b16 %v1900, %v1898
    %v1991 = vpack.c.b16 %v1901, %v1899
    %v1992 = vpack.c.b16 %v1904, %v1902
    %v1993 = vpack.c.b16 %v1905, %v1903
    %v1994 = vpack.c.b16 %v1908, %v1906
    %v1995 = vpack.c.b16 %v1909, %v1907
    %v1996 = vpack.c.b16 %v1912, %v1910
    %v1997 = vpack.c.b16 %v1913, %v1911
    %v1998 = vpack.c.b16 %v1916, %v1914
    %v1999 = vpack.c.b16 %v1917, %v1915
    %v2000 = vpack.c.b16 %v1920, %v1918
    %v2001 = vpack.c.b16 %v1921, %v1919
    %v2002 = vpack.c.b16 %v1924, %v1922
    %v2003 = vpack.c.b16 %v1925, %v1923
    %v2004 = vpack.c.b16 %v1928, %v1926
    %v2005 = vpack.c.b16 %v1929, %v1927
    %v2006 = vpack.c.b16 %v1932, %v1930
    %v2007 = vpack.c.b16 %v1933, %v1931
    %v2008 = vpack.c.b16 %v1936, %v1934
    %v2009 = vpack.c.b16 %v1937, %v1935
    %v2010 = vpack.c.b16 %v1940, %v1938
    %v2011 = vpack.c.b16 %v1941, %v1939
    %v2012 = vpack.c.b16 %v1944, %v1942
    %v2013 = vpack.c.b16 %v1945, %v1943
    %v2014 = vpack.c.b16 %v1948, %v1946
    %v2015 = vpack.c.b16 %v1949, %v1947
    %v2016 = vpack.c.b16 %v1952, %v1950
    %v2017 = vpack.c.b16 %v1953, %v1951
    %2082 = vmatpush.bf16.msra.mxu0 %v1968
    %2083 = vmatpush.bf16.msra.mxu0 %v1966
    %2084 = vmatpush.bf16.msra.mxu0 %v1964
    %2085 = vmatpush.bf16.msra.mxu0 %v1962
    %2086 = vmatpush.bf16.msra.mxu0 %v1960
    %2087 = vmatpush.bf16.msra.mxu0 %v1958
    %2088 = vmatpush.bf16.msra.mxu0 %v1956
    %2089 = vmatpush.bf16.msra.mxu0 %v1954
    %2090 = vmatmul.bf16.gmra.mxu0 %v1688
    %v2091 = vpop.f32.mrf.mxu0
    %v2092 = vadd.f32 %v1758, %v2091
    %v2093 = vpop.f32.mrf.mxu0
    %2094 = vdwg.mxu0
    %2095 = vmatpush.bf16.msra.mxu0 %v1984
    %2096 = vmatpush.bf16.msra.mxu0 %v1982
    %2097 = vmatpush.bf16.msra.mxu0 %v1980
    %2098 = vmatpush.bf16.msra.mxu0 %v1978
    %2099 = vmatpush.bf16.msra.mxu0 %v1976
    %2100 = vmatpush.bf16.msra.mxu0 %v1974
    %2101 = vmatpush.bf16.msra.mxu0 %v1972
    %2102 = vmatpush.bf16.msra.mxu0 %v1970
    %2103 = vmatmul.bf16.gmra.mxu0 %v1689
    %v2104 = vpop.f32.mrf.mxu0
    %v2105 = vadd.f32 %v2092, %v2104
    %v2106 = vpop.f32.mrf.mxu0
    %2107 = vdwg.mxu0
    %2108 = vmatpush.bf16.msra.mxu0 %v2000
    %2109 = vmatpush.bf16.msra.mxu0 %v1998
    %2110 = vmatpush.bf16.msra.mxu0 %v1996
    %2111 = vmatpush.bf16.msra.mxu0 %v1994
    %2112 = vmatpush.bf16.msra.mxu0 %v1992
    %2113 = vmatpush.bf16.msra.mxu0 %v1990
    %2114 = vmatpush.bf16.msra.mxu0 %v1988
    %2115 = vmatpush.bf16.msra.mxu0 %v1986
    %2116 = vmatmul.bf16.gmra.mxu0 %v1690
    %v2117 = vpop.f32.mrf.mxu0
    %v2118 = vadd.f32 %v2105, %v2117
    %v2119 = vpop.f32.mrf.mxu0
    %2120 = vdwg.mxu0
    %2121 = vmatpush.bf16.msra.mxu0 %v2016
    %2122 = vmatpush.bf16.msra.mxu0 %v2014
    %2123 = vmatpush.bf16.msra.mxu0 %v2012
    %2124 = vmatpush.bf16.msra.mxu0 %v2010
    %2125 = vmatpush.bf16.msra.mxu0 %v2008
    %2126 = vmatpush.bf16.msra.mxu0 %v2006
    %2127 = vmatpush.bf16.msra.mxu0 %v2004
    %2128 = vmatpush.bf16.msra.mxu0 %v2002
    %2129 = vmatmul.bf16.gmra.mxu0 %v1691
    %v2130 = vpop.f32.mrf.mxu0
    %v2131 = vadd.f32 %v2118, %v2130
    %v2132 = vpop.f32.mrf.mxu0
    %2133 = vdwg.mxu0
    %2134 = vmatpush.bf16.msra.mxu0 %v1969
    %2135 = vmatpush.bf16.msra.mxu0 %v1967
    %2136 = vmatpush.bf16.msra.mxu0 %v1965
    %2137 = vmatpush.bf16.msra.mxu0 %v1963
    %2138 = vmatpush.bf16.msra.mxu0 %v1961
    %2139 = vmatpush.bf16.msra.mxu0 %v1959
    %2140 = vmatpush.bf16.msra.mxu0 %v1957
    %2141 = vmatpush.bf16.msra.mxu0 %v1955
    %2142 = vmatmul.bf16.gmra.mxu0 %v1688
    %v2143 = vpop.f32.mrf.mxu0
    %v2144 = vadd.f32 %v1759, %v2143
    %v2145 = vpop.f32.mrf.mxu0
    %2146 = vdwg.mxu0
    %2147 = vmatpush.bf16.msra.mxu0 %v1985
    %2148 = vmatpush.bf16.msra.mxu0 %v1983
    %2149 = vmatpush.bf16.msra.mxu0 %v1981
    %2150 = vmatpush.bf16.msra.mxu0 %v1979
    %2151 = vmatpush.bf16.msra.mxu0 %v1977
    %2152 = vmatpush.bf16.msra.mxu0 %v1975
    %2153 = vmatpush.bf16.msra.mxu0 %v1973
    %2154 = vmatpush.bf16.msra.mxu0 %v1971
    %2155 = vmatmul.bf16.gmra.mxu0 %v1689
    %v2156 = vpop.f32.mrf.mxu0
    %v2157 = vadd.f32 %v2144, %v2156
    %v2158 = vpop.f32.mrf.mxu0
    %2159 = vdwg.mxu0
    %2160 = vmatpush.bf16.msra.mxu0 %v2001
    %2161 = vmatpush.bf16.msra.mxu0 %v1999
    %2162 = vmatpush.bf16.msra.mxu0 %v1997
    %2163 = vmatpush.bf16.msra.mxu0 %v1995
    %2164 = vmatpush.bf16.msra.mxu0 %v1993
    %2165 = vmatpush.bf16.msra.mxu0 %v1991
    %2166 = vmatpush.bf16.msra.mxu0 %v1989
    %2167 = vmatpush.bf16.msra.mxu0 %v1987
    %2168 = vmatmul.bf16.gmra.mxu0 %v1690
    %v2169 = vpop.f32.mrf.mxu0
    %v2170 = vadd.f32 %v2157, %v2169
    %v2171 = vpop.f32.mrf.mxu0
    %2172 = vdwg.mxu0
    %2173 = vmatpush.bf16.msra.mxu0 %v2017
    %2174 = vmatpush.bf16.msra.mxu0 %v2015
    %2175 = vmatpush.bf16.msra.mxu0 %v2013
    %2176 = vmatpush.bf16.msra.mxu0 %v2011
    %2177 = vmatpush.bf16.msra.mxu0 %v2009
    %2178 = vmatpush.bf16.msra.mxu0 %v2007
    %2179 = vmatpush.bf16.msra.mxu0 %v2005
    %2180 = vmatpush.bf16.msra.mxu0 %v2003
    %2181 = vmatmul.bf16.gmra.mxu0 %v1691
    %v2182 = vpop.f32.mrf.mxu0
    %v2183 = vadd.f32 %v2170, %v2182
    %v2184 = vpop.f32.mrf.mxu0
    %2185 = vdwg.mxu0
    %2186 = vst [vmem:[%s11] sm:$0xff] %v2131
    %2187 = vst [vmem:[%s11 + $0x8] sm:$0xff] %v2183
    %v2188 = vmul.f32 %v2183, 0.5
    %v2189 = vmul.f32 %v2188, 1.442695
    %v2190 = vpow.pop %v2189
    %v2191 = vmul.f32 %v129, %v2190
    %v2192 = vadd.f32 %v2131, %v2191
    %v2193 = vpack.c.bf16 %v2192, %v2192
    %v2194 = vld [vmem:[#allocation8] sm:$0xff]
    %v2195 = vld [vmem:[#allocation8 + $0x8] sm:$0xff]
    %v2196 = vld [vmem:[#allocation8 + $0x10] sm:$0xff]
    %v2197 = vld [vmem:[#allocation8 + $0x18] sm:$0xff]
    %v2198 = vld [vmem:[#allocation8 + $0x20] sm:$0xff]
    %v2199 = vld [vmem:[#allocation8 + $0x28] sm:$0xff]
    %v2200 = vld [vmem:[#allocation8 + $0x30] sm:$0xff]
    %v2201 = vld [vmem:[#allocation8 + $0x38] sm:$0xff]
    %v2202 = vld [vmem:[#allocation8 + $0x40] sm:$0xff]
    %v2203 = vld [vmem:[#allocation8 + $0x48] sm:$0xff]
    %v2204 = vld [vmem:[#allocation8 + $0x50] sm:$0xff]
    %v2205 = vld [vmem:[#allocation8 + $0x58] sm:$0xff]
    %v2206 = vld [vmem:[#allocation8 + $0x60] sm:$0xff]
    %v2207 = vld [vmem:[#allocation8 + $0x68] sm:$0xff]
    %v2208 = vld [vmem:[#allocation8 + $0x70] sm:$0xff]
    %v2209 = vld [vmem:[#allocation8 + $0x78] sm:$0xff]
    %v2210 = vld [vmem:[#allocation8 + $0x80] sm:$0xff]
    %v2211 = vld [vmem:[#allocation8 + $0x88] sm:$0xff]
    %v2212 = vld [vmem:[#allocation8 + $0x90] sm:$0xff]
    %v2213 = vld [vmem:[#allocation8 + $0x98] sm:$0xff]
    %v2214 = vld [vmem:[#allocation8 + $0xa0] sm:$0xff]
    %v2215 = vld [vmem:[#allocation8 + $0xa8] sm:$0xff]
    %v2216 = vld [vmem:[#allocation8 + $0xb0] sm:$0xff]
    %v2217 = vld [vmem:[#allocation8 + $0xb8] sm:$0xff]
    %v2218 = vld [vmem:[#allocation8 + $0xc0] sm:$0xff]
    %v2219 = vld [vmem:[#allocation8 + $0xc8] sm:$0xff]
    %v2220 = vld [vmem:[#allocation8 + $0xd0] sm:$0xff]
    %v2221 = vld [vmem:[#allocation8 + $0xd8] sm:$0xff]
    %v2222 = vld [vmem:[#allocation8 + $0xe0] sm:$0xff]
    %v2223 = vld [vmem:[#allocation8 + $0xe8] sm:$0xff]
    %v2224 = vld [vmem:[#allocation8 + $0xf0] sm:$0xff]
    %v2225 = vld [vmem:[#allocation8 + $0xf8] sm:$0xff]
    %v2226 = vld [vmem:[%s7] sm:$0xf]
    %v2228 = vperm.slane %v2226, 0
    %v2229 = vperm.slane %v2226, 1
    %v2230 = vperm.slane %v2226, 2
    %v2231 = vperm.slane %v2226, 3
    %v2268 = vunpack.c.l.b16 %v2194
    %v2269 = vunpack.c.h.b16 %v2194
    %v2270 = vunpack.c.l.b16 %v2195
    %v2271 = vunpack.c.h.b16 %v2195
    %v2272 = vunpack.c.l.b16 %v2196
    %v2273 = vunpack.c.h.b16 %v2196
    %v2274 = vunpack.c.l.b16 %v2197
    %v2275 = vunpack.c.h.b16 %v2197
    %v2276 = vunpack.c.l.b16 %v2198
    %v2277 = vunpack.c.h.b16 %v2198
    %v2278 = vunpack.c.l.b16 %v2199
    %v2279 = vunpack.c.h.b16 %v2199
    %v2280 = vunpack.c.l.b16 %v2200
    %v2281 = vunpack.c.h.b16 %v2200
    %v2282 = vunpack.c.l.b16 %v2201
    %v2283 = vunpack.c.h.b16 %v2201
    %v2284 = vunpack.c.l.b16 %v2202
    %v2285 = vunpack.c.h.b16 %v2202
    %v2286 = vunpack.c.l.b16 %v2203
    %v2287 = vunpack.c.h.b16 %v2203
    %v2288 = vunpack.c.l.b16 %v2204
    %v2289 = vunpack.c.h.b16 %v2204
    %v2290 = vunpack.c.l.b16 %v2205
    %v2291 = vunpack.c.h.b16 %v2205
    %v2292 = vunpack.c.l.b16 %v2206
    %v2293 = vunpack.c.h.b16 %v2206
    %v2294 = vunpack.c.l.b16 %v2207
    %v2295 = vunpack.c.h.b16 %v2207
    %v2296 = vunpack.c.l.b16 %v2208
    %v2297 = vunpack.c.h.b16 %v2208
    %v2298 = vunpack.c.l.b16 %v2209
    %v2299 = vunpack.c.h.b16 %v2209
    %v2300 = vunpack.c.l.b16 %v2210
    %v2301 = vunpack.c.h.b16 %v2210
    %v2302 = vunpack.c.l.b16 %v2211
    %v2303 = vunpack.c.h.b16 %v2211
    %v2304 = vunpack.c.l.b16 %v2212
    %v2305 = vunpack.c.h.b16 %v2212
    %v2306 = vunpack.c.l.b16 %v2213
    %v2307 = vunpack.c.h.b16 %v2213
    %v2308 = vunpack.c.l.b16 %v2214
    %v2309 = vunpack.c.h.b16 %v2214
    %v2310 = vunpack.c.l.b16 %v2215
    %v2311 = vunpack.c.h.b16 %v2215
    %v2312 = vunpack.c.l.b16 %v2216
    %v2313 = vunpack.c.h.b16 %v2216
    %v2314 = vunpack.c.l.b16 %v2217
    %v2315 = vunpack.c.h.b16 %v2217
    %v2316 = vunpack.c.l.b16 %v2218
    %v2317 = vunpack.c.h.b16 %v2218
    %v2318 = vunpack.c.l.b16 %v2219
    %v2319 = vunpack.c.h.b16 %v2219
    %v2320 = vunpack.c.l.b16 %v2220
    %v2321 = vunpack.c.h.b16 %v2220
    %v2322 = vunpack.c.l.b16 %v2221
    %v2323 = vunpack.c.h.b16 %v2221
    %v2324 = vunpack.c.l.b16 %v2222
    %v2325 = vunpack.c.h.b16 %v2222
    %v2326 = vunpack.c.l.b16 %v2223
    %v2327 = vunpack.c.h.b16 %v2223
    %v2328 = vunpack.c.l.b16 %v2224
    %v2329 = vunpack.c.h.b16 %v2224
    %v2330 = vunpack.c.l.b16 %v2225
    %v2331 = vunpack.c.h.b16 %v2225
    %v2332 = vpack.c.b16 %v2272, %v2268
    %v2333 = vpack.c.b16 %v2273, %v2269
    %v2334 = vpack.c.b16 %v2274, %v2270
    %v2335 = vpack.c.b16 %v2275, %v2271
    %v2336 = vpack.c.b16 %v2280, %v2276
    %v2337 = vpack.c.b16 %v2281, %v2277
    %v2338 = vpack.c.b16 %v2282, %v2278
    %v2339 = vpack.c.b16 %v2283, %v2279
    %v2340 = vpack.c.b16 %v2288, %v2284
    %v2341 = vpack.c.b16 %v2289, %v2285
    %v2342 = vpack.c.b16 %v2290, %v2286
    %v2343 = vpack.c.b16 %v2291, %v2287
    %v2344 = vpack.c.b16 %v2296, %v2292
    %v2345 = vpack.c.b16 %v2297, %v2293
    %v2346 = vpack.c.b16 %v2298, %v2294
    %v2347 = vpack.c.b16 %v2299, %v2295
    %v2348 = vpack.c.b16 %v2304, %v2300
    %v2349 = vpack.c.b16 %v2305, %v2301
    %v2350 = vpack.c.b16 %v2306, %v2302
    %v2351 = vpack.c.b16 %v2307, %v2303
    %v2352 = vpack.c.b16 %v2312, %v2308
    %v2353 = vpack.c.b16 %v2313, %v2309
    %v2354 = vpack.c.b16 %v2314, %v2310
    %v2355 = vpack.c.b16 %v2315, %v2311
    %v2356 = vpack.c.b16 %v2320, %v2316
    %v2357 = vpack.c.b16 %v2321, %v2317
    %v2358 = vpack.c.b16 %v2322, %v2318
    %v2359 = vpack.c.b16 %v2323, %v2319
    %v2360 = vpack.c.b16 %v2328, %v2324
    %v2361 = vpack.c.b16 %v2329, %v2325
    %v2362 = vpack.c.b16 %v2330, %v2326
    %v2363 = vpack.c.b16 %v2331, %v2327
    %2396 = vmatpush.bf16.msra.mxu0 %v2360
    %2397 = vmatpush.bf16.msra.mxu0 %v2356
    %2398 = vmatpush.bf16.msra.mxu0 %v2352
    %2399 = vmatpush.bf16.msra.mxu0 %v2348
    %2400 = vmatpush.bf16.msra.mxu0 %v2344
    %2401 = vmatpush.bf16.msra.mxu0 %v2340
    %2402 = vmatpush.bf16.msra.mxu0 %v2336
    %2403 = vmatpush.bf16.msra.mxu0 %v2332
    %2404 = vmatmul.bf16.gmra.mxu0 %v2193
    %v2405 = vpop.f32.mrf.mxu0
    %v2406 = vadd.f32 %v2228, %v2405
    %v2407 = vpop.f32.mrf.mxu0
    %2408 = vdwg.mxu0
    %2409 = vmatpush.bf16.msra.mxu0 %v2361
    %2410 = vmatpush.bf16.msra.mxu0 %v2357
    %2411 = vmatpush.bf16.msra.mxu0 %v2353
    %2412 = vmatpush.bf16.msra.mxu0 %v2349
    %2413 = vmatpush.bf16.msra.mxu0 %v2345
    %2414 = vmatpush.bf16.msra.mxu0 %v2341
    %2415 = vmatpush.bf16.msra.mxu0 %v2337
    %2416 = vmatpush.bf16.msra.mxu0 %v2333
    %2417 = vmatmul.bf16.gmra.mxu0 %v2193
    %v2418 = vpop.f32.mrf.mxu0
    %v2419 = vadd.f32 %v2229, %v2418
    %v2420 = vpop.f32.mrf.mxu0
    %2421 = vdwg.mxu0
    %2422 = vmatpush.bf16.msra.mxu0 %v2362
    %2423 = vmatpush.bf16.msra.mxu0 %v2358
    %2424 = vmatpush.bf16.msra.mxu0 %v2354
    %2425 = vmatpush.bf16.msra.mxu0 %v2350
    %2426 = vmatpush.bf16.msra.mxu0 %v2346
    %2427 = vmatpush.bf16.msra.mxu0 %v2342
    %2428 = vmatpush.bf16.msra.mxu0 %v2338
    %2429 = vmatpush.bf16.msra.mxu0 %v2334
    %2430 = vmatmul.bf16.gmra.mxu0 %v2193
    %v2431 = vpop.f32.mrf.mxu0
    %v2432 = vadd.f32 %v2230, %v2431
    %v2433 = vpop.f32.mrf.mxu0
    %2434 = vdwg.mxu0
    %2435 = vmatpush.bf16.msra.mxu0 %v2363
    %2436 = vmatpush.bf16.msra.mxu0 %v2359
    %2437 = vmatpush.bf16.msra.mxu0 %v2355
    %2438 = vmatpush.bf16.msra.mxu0 %v2351
    %2439 = vmatpush.bf16.msra.mxu0 %v2347
    %2440 = vmatpush.bf16.msra.mxu0 %v2343
    %2441 = vmatpush.bf16.msra.mxu0 %v2339
    %2442 = vmatpush.bf16.msra.mxu0 %v2335
    %2443 = vmatmul.bf16.gmra.mxu0 %v2193
    %v2444 = vpop.f32.mrf.mxu0
    %v2445 = vadd.f32 %v2231, %v2444
    %v2446 = vpop.f32.mrf.mxu0
    %2447 = vdwg.mxu0
    %v2448 = vmax.f32 %v2406, 0.0
    %v2449 = vmax.f32 %v2419, 0.0
    %v2450 = vmax.f32 %v2432, 0.0
    %v2451 = vmax.f32 %v2445, 0.0
    %v2452 = vpack.c.bf16 %v2448, %v2448
    %v2453 = vpack.c.bf16 %v2449, %v2449
    %v2454 = vpack.c.bf16 %v2450, %v2450
    %v2455 = vpack.c.bf16 %v2451, %v2451
    %v2456 = vld [vmem:[#allocation10] sm:$0xff]
    %v2457 = vld [vmem:[#allocation10 + $0x8] sm:$0xff]
    %v2458 = vld [vmem:[#allocation10 + $0x10] sm:$0xff]
    %v2459 = vld [vmem:[#allocation10 + $0x18] sm:$0xf]
    %v2460 = vld [vmem:[#allocation10 + $0x1c] sm:$0xff]
    %v2461 = vld [vmem:[#allocation10 + $0x24] sm:$0xff]
    %v2462 = vld [vmem:[#allocation10 + $0x2c] sm:$0xff]
    %v2463 = vld [vmem:[#allocation10 + $0x34] sm:$0xf]
    %v2464 = vld [vmem:[#allocation10 + $0x38] sm:$0xff]
    %v2465 = vld [vmem:[#allocation10 + $0x40] sm:$0xff]
    %v2466 = vld [vmem:[#allocation10 + $0x48] sm:$0xff]
    %v2467 = vld [vmem:[#allocation10 + $0x50] sm:$0xf]
    %v2468 = vld [vmem:[#allocation10 + $0x54] sm:$0xff]
    %v2469 = vld [vmem:[#allocation10 + $0x5c] sm:$0xff]
    %v2470 = vld [vmem:[#allocation10 + $0x64] sm:$0xff]
    %v2471 = vld [vmem:[#allocation10 + $0x6c] sm:$0xf]
    %v2472 = vld [vmem:[#allocation10 + $0x70] sm:$0xff]
    %v2473 = vld [vmem:[#allocation10 + $0x78] sm:$0xff]
    %v2474 = vld [vmem:[#allocation10 + $0x80] sm:$0xff]
    %v2475 = vld [vmem:[#allocation10 + $0x88] sm:$0xf]
    %v2476 = vld [vmem:[#allocation10 + $0x8c] sm:$0xff]
    %v2477 = vld [vmem:[#allocation10 + $0x94] sm:$0xff]
    %v2478 = vld [vmem:[#allocation10 + $0x9c] sm:$0xff]
    %v2479 = vld [vmem:[#allocation10 + $0xa4] sm:$0xf]
    %v2480 = vld [vmem:[#allocation10 + $0xa8] sm:$0xff]
    %v2481 = vld [vmem:[#allocation10 + $0xb0] sm:$0xff]
    %v2482 = vld [vmem:[#allocation10 + $0xb8] sm:$0xff]
    %v2483 = vld [vmem:[#allocation10 + $0xc0] sm:$0xf]
    %v2484 = vld [vmem:[#allocation10 + $0xc4] sm:$0xff]
    %v2485 = vld [vmem:[#allocation10 + $0xcc] sm:$0xff]
    %v2486 = vld [vmem:[#allocation10 + $0xd4] sm:$0xff]
    %v2487 = vld [vmem:[#allocation10 + $0xdc] sm:$0xf]
    %v2488 = vld [vmem:[#allocation10 + $0xe0] sm:$0xff]
    %v2489 = vld [vmem:[#allocation10 + $0xe8] sm:$0xff]
    %v2490 = vld [vmem:[#allocation10 + $0xf0] sm:$0xff]
    %v2491 = vld [vmem:[#allocation10 + $0xf8] sm:$0xf]
    %v2492 = vld [vmem:[#allocation10 + $0xfc] sm:$0xff]
    %v2493 = vld [vmem:[#allocation10 + $0x104] sm:$0xff]
    %v2494 = vld [vmem:[#allocation10 + $0x10c] sm:$0xff]
    %v2495 = vld [vmem:[#allocation10 + $0x114] sm:$0xf]
    %v2496 = vld [vmem:[#allocation10 + $0x118] sm:$0xff]
    %v2497 = vld [vmem:[#allocation10 + $0x120] sm:$0xff]
    %v2498 = vld [vmem:[#allocation10 + $0x128] sm:$0xff]
    %v2499 = vld [vmem:[#allocation10 + $0x130] sm:$0xf]
    %v2500 = vld [vmem:[#allocation10 + $0x134] sm:$0xff]
    %v2501 = vld [vmem:[#allocation10 + $0x13c] sm:$0xff]
    %v2502 = vld [vmem:[#allocation10 + $0x144] sm:$0xff]
    %v2503 = vld [vmem:[#allocation10 + $0x14c] sm:$0xf]
    %v2504 = vld [vmem:[#allocation10 + $0x150] sm:$0xff]
    %v2505 = vld [vmem:[#allocation10 + $0x158] sm:$0xff]
    %v2506 = vld [vmem:[#allocation10 + $0x160] sm:$0xff]
    %v2507 = vld [vmem:[#allocation10 + $0x168] sm:$0xf]
    %v2508 = vld [vmem:[#allocation10 + $0x16c] sm:$0xff]
    %v2509 = vld [vmem:[#allocation10 + $0x174] sm:$0xff]
    %v2510 = vld [vmem:[#allocation10 + $0x17c] sm:$0xff]
    %v2511 = vld [vmem:[#allocation10 + $0x184] sm:$0xf]
    %v2512 = vld [vmem:[#allocation10 + $0x188] sm:$0xff]
    %v2513 = vld [vmem:[#allocation10 + $0x190] sm:$0xff]
    %v2514 = vld [vmem:[#allocation10 + $0x198] sm:$0xff]
    %v2515 = vld [vmem:[#allocation10 + $0x1a0] sm:$0xf]
    %v2516 = vld [vmem:[#allocation10 + $0x1a4] sm:$0xff]
    %v2517 = vld [vmem:[#allocation10 + $0x1ac] sm:$0xff]
    %v2518 = vld [vmem:[#allocation10 + $0x1b4] sm:$0xff]
    %v2519 = vld [vmem:[#allocation10 + $0x1bc] sm:$0xf]
    %v2520 = vld [vmem:[#allocation10 + $0x1c0] sm:$0xff]
    %v2521 = vld [vmem:[#allocation10 + $0x1c8] sm:$0xff]
    %v2522 = vld [vmem:[#allocation10 + $0x1d0] sm:$0xff]
    %v2523 = vld [vmem:[#allocation10 + $0x1d8] sm:$0xf]
    %v2524 = vld [vmem:[#allocation10 + $0x1dc] sm:$0xff]
    %v2525 = vld [vmem:[#allocation10 + $0x1e4] sm:$0xff]
    %v2526 = vld [vmem:[#allocation10 + $0x1ec] sm:$0xff]
    %v2527 = vld [vmem:[#allocation10 + $0x1f4] sm:$0xf]
    %v2528 = vld [vmem:[#allocation10 + $0x1f8] sm:$0xff]
    %v2529 = vld [vmem:[#allocation10 + $0x200] sm:$0xff]
    %v2530 = vld [vmem:[#allocation10 + $0x208] sm:$0xff]
    %v2531 = vld [vmem:[#allocation10 + $0x210] sm:$0xf]
    %v2532 = vld [vmem:[#allocation10 + $0x214] sm:$0xff]
    %v2533 = vld [vmem:[#allocation10 + $0x21c] sm:$0xff]
    %v2534 = vld [vmem:[#allocation10 + $0x224] sm:$0xff]
    %v2535 = vld [vmem:[#allocation10 + $0x22c] sm:$0xf]
    %v2536 = vld [vmem:[#allocation10 + $0x230] sm:$0xff]
    %v2537 = vld [vmem:[#allocation10 + $0x238] sm:$0xff]
    %v2538 = vld [vmem:[#allocation10 + $0x240] sm:$0xff]
    %v2539 = vld [vmem:[#allocation10 + $0x248] sm:$0xf]
    %v2540 = vld [vmem:[#allocation10 + $0x24c] sm:$0xff]
    %v2541 = vld [vmem:[#allocation10 + $0x254] sm:$0xff]
    %v2542 = vld [vmem:[#allocation10 + $0x25c] sm:$0xff]
    %v2543 = vld [vmem:[#allocation10 + $0x264] sm:$0xf]
    %v2544 = vld [vmem:[#allocation10 + $0x268] sm:$0xff]
    %v2545 = vld [vmem:[#allocation10 + $0x270] sm:$0xff]
    %v2546 = vld [vmem:[#allocation10 + $0x278] sm:$0xff]
    %v2547 = vld [vmem:[#allocation10 + $0x280] sm:$0xf]
    %v2548 = vld [vmem:[#allocation10 + $0x284] sm:$0xff]
    %v2549 = vld [vmem:[#allocation10 + $0x28c] sm:$0xff]
    %v2550 = vld [vmem:[#allocation10 + $0x294] sm:$0xff]
    %v2551 = vld [vmem:[#allocation10 + $0x29c] sm:$0xf]
    %v2552 = vld [vmem:[#allocation10 + $0x2a0] sm:$0xff]
    %v2553 = vld [vmem:[#allocation10 + $0x2a8] sm:$0xff]
    %v2554 = vld [vmem:[#allocation10 + $0x2b0] sm:$0xff]
    %v2555 = vld [vmem:[#allocation10 + $0x2b8] sm:$0xf]
    %v2556 = vld [vmem:[#allocation10 + $0x2bc] sm:$0xff]
    %v2557 = vld [vmem:[#allocation10 + $0x2c4] sm:$0xff]
    %v2558 = vld [vmem:[#allocation10 + $0x2cc] sm:$0xff]
    %v2559 = vld [vmem:[#allocation10 + $0x2d4] sm:$0xf]
    %v2560 = vld [vmem:[#allocation10 + $0x2d8] sm:$0xff]
    %v2561 = vld [vmem:[#allocation10 + $0x2e0] sm:$0xff]
    %v2562 = vld [vmem:[#allocation10 + $0x2e8] sm:$0xff]
    %v2563 = vld [vmem:[#allocation10 + $0x2f0] sm:$0xf]
    %v2564 = vld [vmem:[#allocation10 + $0x2f4] sm:$0xff]
    %v2565 = vld [vmem:[#allocation10 + $0x2fc] sm:$0xff]
    %v2566 = vld [vmem:[#allocation10 + $0x304] sm:$0xff]
    %v2567 = vld [vmem:[#allocation10 + $0x30c] sm:$0xf]
    %v2568 = vld [vmem:[#allocation10 + $0x310] sm:$0xff]
    %v2569 = vld [vmem:[#allocation10 + $0x318] sm:$0xff]
    %v2570 = vld [vmem:[#allocation10 + $0x320] sm:$0xff]
    %v2571 = vld [vmem:[#allocation10 + $0x328] sm:$0xf]
    %v2572 = vld [vmem:[#allocation10 + $0x32c] sm:$0xff]
    %v2573 = vld [vmem:[#allocation10 + $0x334] sm:$0xff]
    %v2574 = vld [vmem:[#allocation10 + $0x33c] sm:$0xff]
    %v2575 = vld [vmem:[#allocation10 + $0x344] sm:$0xf]
    %v2576 = vld [vmem:[#allocation10 + $0x348] sm:$0xff]
    %v2577 = vld [vmem:[#allocation10 + $0x350] sm:$0xff]
    %v2578 = vld [vmem:[#allocation10 + $0x358] sm:$0xff]
    %v2579 = vld [vmem:[#allocation10 + $0x360] sm:$0xf]
    %v2580 = vld [vmem:[#allocation10 + $0x364] sm:$0xff]
    %v2581 = vld [vmem:[#allocation10 + $0x36c] sm:$0xff]
    %v2582 = vld [vmem:[#allocation10 + $0x374] sm:$0xff]
    %v2583 = vld [vmem:[#allocation10 + $0x37c] sm:$0xf]
    %v2584 = vld [vmem:[#allocation10 + $0x380] sm:$0xff]
    %v2585 = vld [vmem:[#allocation10 + $0x388] sm:$0xff]
    %v2586 = vld [vmem:[#allocation10 + $0x390] sm:$0xff]
    %v2587 = vld [vmem:[#allocation10 + $0x398] sm:$0xf]
    %v2588 = vld [vmem:[#allocation10 + $0x39c] sm:$0xff]
    %v2589 = vld [vmem:[#allocation10 + $0x3a4] sm:$0xff]
    %v2590 = vld [vmem:[#allocation10 + $0x3ac] sm:$0xff]
    %v2591 = vld [vmem:[#allocation10 + $0x3b4] sm:$0xf]
    %v2592 = vld [vmem:[#allocation10 + $0x3b8] sm:$0xff]
    %v2593 = vld [vmem:[#allocation10 + $0x3c0] sm:$0xff]
    %v2594 = vld [vmem:[#allocation10 + $0x3c8] sm:$0xff]
    %v2595 = vld [vmem:[#allocation10 + $0x3d0] sm:$0xf]
    %v2596 = vld [vmem:[#allocation10 + $0x3d4] sm:$0xff]
    %v2597 = vld [vmem:[#allocation10 + $0x3dc] sm:$0xff]
    %v2598 = vld [vmem:[#allocation10 + $0x3e4] sm:$0xff]
    %v2599 = vld [vmem:[#allocation10 + $0x3ec] sm:$0xf]
    %v2600 = vld [vmem:[#allocation10 + $0x3f0] sm:$0xff]
    %v2601 = vld [vmem:[#allocation10 + $0x3f8] sm:$0xff]
    %v2602 = vld [vmem:[#allocation10 + $0x400] sm:$0xff]
    %v2603 = vld [vmem:[#allocation10 + $0x408] sm:$0xf]
    %v2604 = vld [vmem:[#allocation10 + $0x40c] sm:$0xff]
    %v2605 = vld [vmem:[#allocation10 + $0x414] sm:$0xff]
    %v2606 = vld [vmem:[#allocation10 + $0x41c] sm:$0xff]
    %v2607 = vld [vmem:[#allocation10 + $0x424] sm:$0xf]
    %v2608 = vld [vmem:[#allocation10 + $0x428] sm:$0xff]
    %v2609 = vld [vmem:[#allocation10 + $0x430] sm:$0xff]
    %v2610 = vld [vmem:[#allocation10 + $0x438] sm:$0xff]
    %v2611 = vld [vmem:[#allocation10 + $0x440] sm:$0xf]
    %v2612 = vld [vmem:[#allocation10 + $0x444] sm:$0xff]
    %v2613 = vld [vmem:[#allocation10 + $0x44c] sm:$0xff]
    %v2614 = vld [vmem:[#allocation10 + $0x454] sm:$0xff]
    %v2615 = vld [vmem:[#allocation10 + $0x45c] sm:$0xf]
    %v2616 = vld [vmem:[#allocation10 + $0x460] sm:$0xff]
    %v2617 = vld [vmem:[#allocation10 + $0x468] sm:$0xff]
    %v2618 = vld [vmem:[#allocation10 + $0x470] sm:$0xff]
    %v2619 = vld [vmem:[#allocation10 + $0x478] sm:$0xf]
    %v2620 = vld [vmem:[#allocation10 + $0x47c] sm:$0xff]
    %v2621 = vld [vmem:[#allocation10 + $0x484] sm:$0xff]
    %v2622 = vld [vmem:[#allocation10 + $0x48c] sm:$0xff]
    %v2623 = vld [vmem:[#allocation10 + $0x494] sm:$0xf]
    %v2624 = vld [vmem:[#allocation10 + $0x498] sm:$0xff]
    %v2625 = vld [vmem:[#allocation10 + $0x4a0] sm:$0xff]
    %v2626 = vld [vmem:[#allocation10 + $0x4a8] sm:$0xff]
    %v2627 = vld [vmem:[#allocation10 + $0x4b0] sm:$0xf]
    %v2628 = vld [vmem:[#allocation10 + $0x4b4] sm:$0xff]
    %v2629 = vld [vmem:[#allocation10 + $0x4bc] sm:$0xff]
    %v2630 = vld [vmem:[#allocation10 + $0x4c4] sm:$0xff]
    %v2631 = vld [vmem:[#allocation10 + $0x4cc] sm:$0xf]
    %v2632 = vld [vmem:[#allocation10 + $0x4d0] sm:$0xff]
    %v2633 = vld [vmem:[#allocation10 + $0x4d8] sm:$0xff]
    %v2634 = vld [vmem:[#allocation10 + $0x4e0] sm:$0xff]
    %v2635 = vld [vmem:[#allocation10 + $0x4e8] sm:$0xf]
    %v2636 = vld [vmem:[#allocation10 + $0x4ec] sm:$0xff]
    %v2637 = vld [vmem:[#allocation10 + $0x4f4] sm:$0xff]
    %v2638 = vld [vmem:[#allocation10 + $0x4fc] sm:$0xff]
    %v2639 = vld [vmem:[#allocation10 + $0x504] sm:$0xf]
    %v2640 = vld [vmem:[#allocation10 + $0x508] sm:$0xff]
    %v2641 = vld [vmem:[#allocation10 + $0x510] sm:$0xff]
    %v2642 = vld [vmem:[#allocation10 + $0x518] sm:$0xff]
    %v2643 = vld [vmem:[#allocation10 + $0x520] sm:$0xf]
    %v2644 = vld [vmem:[#allocation10 + $0x524] sm:$0xff]
    %v2645 = vld [vmem:[#allocation10 + $0x52c] sm:$0xff]
    %v2646 = vld [vmem:[#allocation10 + $0x534] sm:$0xff]
    %v2647 = vld [vmem:[#allocation10 + $0x53c] sm:$0xf]
    %v2648 = vld [vmem:[#allocation10 + $0x540] sm:$0xff]
    %v2649 = vld [vmem:[#allocation10 + $0x548] sm:$0xff]
    %v2650 = vld [vmem:[#allocation10 + $0x550] sm:$0xff]
    %v2651 = vld [vmem:[#allocation10 + $0x558] sm:$0xf]
    %v2652 = vld [vmem:[#allocation10 + $0x55c] sm:$0xff]
    %v2653 = vld [vmem:[#allocation10 + $0x564] sm:$0xff]
    %v2654 = vld [vmem:[#allocation10 + $0x56c] sm:$0xff]
    %v2655 = vld [vmem:[#allocation10 + $0x574] sm:$0xf]
    %v2656 = vld [vmem:[#allocation10 + $0x578] sm:$0xff]
    %v2657 = vld [vmem:[#allocation10 + $0x580] sm:$0xff]
    %v2658 = vld [vmem:[#allocation10 + $0x588] sm:$0xff]
    %v2659 = vld [vmem:[#allocation10 + $0x590] sm:$0xf]
    %v2660 = vld [vmem:[#allocation10 + $0x594] sm:$0xff]
    %v2661 = vld [vmem:[#allocation10 + $0x59c] sm:$0xff]
    %v2662 = vld [vmem:[#allocation10 + $0x5a4] sm:$0xff]
    %v2663 = vld [vmem:[#allocation10 + $0x5ac] sm:$0xf]
    %v2664 = vld [vmem:[#allocation10 + $0x5b0] sm:$0xff]
    %v2665 = vld [vmem:[#allocation10 + $0x5b8] sm:$0xff]
    %v2666 = vld [vmem:[#allocation10 + $0x5c0] sm:$0xff]
    %v2667 = vld [vmem:[#allocation10 + $0x5c8] sm:$0xf]
    %v2668 = vld [vmem:[#allocation10 + $0x5cc] sm:$0xff]
    %v2669 = vld [vmem:[#allocation10 + $0x5d4] sm:$0xff]
    %v2670 = vld [vmem:[#allocation10 + $0x5dc] sm:$0xff]
    %v2671 = vld [vmem:[#allocation10 + $0x5e4] sm:$0xf]
    %v2672 = vld [vmem:[#allocation10 + $0x5e8] sm:$0xff]
    %v2673 = vld [vmem:[#allocation10 + $0x5f0] sm:$0xff]
    %v2674 = vld [vmem:[#allocation10 + $0x5f8] sm:$0xff]
    %v2675 = vld [vmem:[#allocation10 + $0x600] sm:$0xf]
    %v2676 = vld [vmem:[#allocation10 + $0x604] sm:$0xff]
    %v2677 = vld [vmem:[#allocation10 + $0x60c] sm:$0xff]
    %v2678 = vld [vmem:[#allocation10 + $0x614] sm:$0xff]
    %v2679 = vld [vmem:[#allocation10 + $0x61c] sm:$0xf]
    %v2680 = vld [vmem:[#allocation10 + $0x620] sm:$0xff]
    %v2681 = vld [vmem:[#allocation10 + $0x628] sm:$0xff]
    %v2682 = vld [vmem:[#allocation10 + $0x630] sm:$0xff]
    %v2683 = vld [vmem:[#allocation10 + $0x638] sm:$0xf]
    %v2684 = vld [vmem:[#allocation10 + $0x63c] sm:$0xff]
    %v2685 = vld [vmem:[#allocation10 + $0x644] sm:$0xff]
    %v2686 = vld [vmem:[#allocation10 + $0x64c] sm:$0xff]
    %v2687 = vld [vmem:[#allocation10 + $0x654] sm:$0xf]
    %v2688 = vld [vmem:[#allocation10 + $0x658] sm:$0xff]
    %v2689 = vld [vmem:[#allocation10 + $0x660] sm:$0xff]
    %v2690 = vld [vmem:[#allocation10 + $0x668] sm:$0xff]
    %v2691 = vld [vmem:[#allocation10 + $0x670] sm:$0xf]
    %v2692 = vld [vmem:[#allocation10 + $0x674] sm:$0xff]
    %v2693 = vld [vmem:[#allocation10 + $0x67c] sm:$0xff]
    %v2694 = vld [vmem:[#allocation10 + $0x684] sm:$0xff]
    %v2695 = vld [vmem:[#allocation10 + $0x68c] sm:$0xf]
    %v2696 = vld [vmem:[#allocation10 + $0x690] sm:$0xff]
    %v2697 = vld [vmem:[#allocation10 + $0x698] sm:$0xff]
    %v2698 = vld [vmem:[#allocation10 + $0x6a0] sm:$0xff]
    %v2699 = vld [vmem:[#allocation10 + $0x6a8] sm:$0xf]
    %v2700 = vld [vmem:[#allocation10 + $0x6ac] sm:$0xff]
    %v2701 = vld [vmem:[#allocation10 + $0x6b4] sm:$0xff]
    %v2702 = vld [vmem:[#allocation10 + $0x6bc] sm:$0xff]
    %v2703 = vld [vmem:[#allocation10 + $0x6c4] sm:$0xf]
    %v2704 = vld [vmem:[#allocation10 + $0x6c8] sm:$0xff]
    %v2705 = vld [vmem:[#allocation10 + $0x6d0] sm:$0xff]
    %v2706 = vld [vmem:[#allocation10 + $0x6d8] sm:$0xff]
    %v2707 = vld [vmem:[#allocation10 + $0x6e0] sm:$0xf]
    %v2708 = vld [vmem:[#allocation10 + $0x6e4] sm:$0xff]
    %v2709 = vld [vmem:[#allocation10 + $0x6ec] sm:$0xff]
    %v2710 = vld [vmem:[#allocation10 + $0x6f4] sm:$0xff]
    %v2711 = vld [vmem:[#allocation10 + $0x6fc] sm:$0xf]
    %v2712 = vld [vmem:[%s9] sm:$0x7f]
    %v2714 = vperm.slane %v2712, 0
    %v2715 = vperm.slane %v2712, 1
    %v2716 = vperm.slane %v2712, 2
    %v2717 = vperm.slane %v2712, 3
    %v2718 = vperm.slane %v2712, 4
    %v2719 = vperm.slane %v2712, 5
    %v2720 = vperm.slane %v2712, 6
    %v2984 = vunpack.c.l.b16 %v2456
    %v2985 = vunpack.c.h.b16 %v2456
    %v2986 = vunpack.c.l.b16 %v2457
    %v2987 = vunpack.c.h.b16 %v2457
    %v2988 = vunpack.c.l.b16 %v2458
    %v2989 = vunpack.c.h.b16 %v2458
    %v2990 = vunpack.c.l.b16 %v2459
    %v2991 = vunpack.c.l.b16 %v2460
    %v2992 = vunpack.c.h.b16 %v2460
    %v2993 = vunpack.c.l.b16 %v2461
    %v2994 = vunpack.c.h.b16 %v2461
    %v2995 = vunpack.c.l.b16 %v2462
    %v2996 = vunpack.c.h.b16 %v2462
    %v2997 = vunpack.c.l.b16 %v2463
    %v2998 = vunpack.c.l.b16 %v2464
    %v2999 = vunpack.c.h.b16 %v2464
    %v3000 = vunpack.c.l.b16 %v2465
    %v3001 = vunpack.c.h.b16 %v2465
    %v3002 = vunpack.c.l.b16 %v2466
    %v3003 = vunpack.c.h.b16 %v2466
    %v3004 = vunpack.c.l.b16 %v2467
    %v3005 = vunpack.c.l.b16 %v2468
    %v3006 = vunpack.c.h.b16 %v2468
    %v3007 = vunpack.c.l.b16 %v2469
    %v3008 = vunpack.c.h.b16 %v2469
    %v3009 = vunpack.c.l.b16 %v2470
    %v3010 = vunpack.c.h.b16 %v2470
    %v3011 = vunpack.c.l.b16 %v2471
    %v3012 = vunpack.c.l.b16 %v2472
    %v3013 = vunpack.c.h.b16 %v2472
    %v3014 = vunpack.c.l.b16 %v2473
    %v3015 = vunpack.c.h.b16 %v2473
    %v3016 = vunpack.c.l.b16 %v2474
    %v3017 = vunpack.c.h.b16 %v2474
    %v3018 = vunpack.c.l.b16 %v2475
    %v3019 = vunpack.c.l.b16 %v2476
    %v3020 = vunpack.c.h.b16 %v2476
    %v3021 = vunpack.c.l.b16 %v2477
    %v3022 = vunpack.c.h.b16 %v2477
    %v3023 = vunpack.c.l.b16 %v2478
    %v3024 = vunpack.c.h.b16 %v2478
    %v3025 = vunpack.c.l.b16 %v2479
    %v3026 = vunpack.c.l.b16 %v2480
    %v3027 = vunpack.c.h.b16 %v2480
    %v3028 = vunpack.c.l.b16 %v2481
    %v3029 = vunpack.c.h.b16 %v2481
    %v3030 = vunpack.c.l.b16 %v2482
    %v3031 = vunpack.c.h.b16 %v2482
    %v3032 = vunpack.c.l.b16 %v2483
    %v3033 = vunpack.c.l.b16 %v2484
    %v3034 = vunpack.c.h.b16 %v2484
    %v3035 = vunpack.c.l.b16 %v2485
    %v3036 = vunpack.c.h.b16 %v2485
    %v3037 = vunpack.c.l.b16 %v2486
    %v3038 = vunpack.c.h.b16 %v2486
    %v3039 = vunpack.c.l.b16 %v2487
    %v3040 = vunpack.c.l.b16 %v2488
    %v3041 = vunpack.c.h.b16 %v2488
    %v3042 = vunpack.c.l.b16 %v2489
    %v3043 = vunpack.c.h.b16 %v2489
    %v3044 = vunpack.c.l.b16 %v2490
    %v3045 = vunpack.c.h.b16 %v2490
    %v3046 = vunpack.c.l.b16 %v2491
    %v3047 = vunpack.c.l.b16 %v2492
    %v3048 = vunpack.c.h.b16 %v2492
    %v3049 = vunpack.c.l.b16 %v2493
    %v3050 = vunpack.c.h.b16 %v2493
    %v3051 = vunpack.c.l.b16 %v2494
    %v3052 = vunpack.c.h.b16 %v2494
    %v3053 = vunpack.c.l.b16 %v2495
    %v3054 = vunpack.c.l.b16 %v2496
    %v3055 = vunpack.c.h.b16 %v2496
    %v3056 = vunpack.c.l.b16 %v2497
    %v3057 = vunpack.c.h.b16 %v2497
    %v3058 = vunpack.c.l.b16 %v2498
    %v3059 = vunpack.c.h.b16 %v2498
    %v3060 = vunpack.c.l.b16 %v2499
    %v3061 = vunpack.c.l.b16 %v2500
    %v3062 = vunpack.c.h.b16 %v2500
    %v3063 = vunpack.c.l.b16 %v2501
    %v3064 = vunpack.c.h.b16 %v2501
    %v3065 = vunpack.c.l.b16 %v2502
    %v3066 = vunpack.c.h.b16 %v2502
    %v3067 = vunpack.c.l.b16 %v2503
    %v3068 = vunpack.c.l.b16 %v2504
    %v3069 = vunpack.c.h.b16 %v2504
    %v3070 = vunpack.c.l.b16 %v2505
    %v3071 = vunpack.c.h.b16 %v2505
    %v3072 = vunpack.c.l.b16 %v2506
    %v3073 = vunpack.c.h.b16 %v2506
    %v3074 = vunpack.c.l.b16 %v2507
    %v3075 = vunpack.c.l.b16 %v2508
    %v3076 = vunpack.c.h.b16 %v2508
    %v3077 = vunpack.c.l.b16 %v2509
    %v3078 = vunpack.c.h.b16 %v2509
    %v3079 = vunpack.c.l.b16 %v2510
    %v3080 = vunpack.c.h.b16 %v2510
    %v3081 = vunpack.c.l.b16 %v2511
    %v3082 = vunpack.c.l.b16 %v2512
    %v3083 = vunpack.c.h.b16 %v2512
    %v3084 = vunpack.c.l.b16 %v2513
    %v3085 = vunpack.c.h.b16 %v2513
    %v3086 = vunpack.c.l.b16 %v2514
    %v3087 = vunpack.c.h.b16 %v2514
    %v3088 = vunpack.c.l.b16 %v2515
    %v3089 = vunpack.c.l.b16 %v2516
    %v3090 = vunpack.c.h.b16 %v2516
    %v3091 = vunpack.c.l.b16 %v2517
    %v3092 = vunpack.c.h.b16 %v2517
    %v3093 = vunpack.c.l.b16 %v2518
    %v3094 = vunpack.c.h.b16 %v2518
    %v3095 = vunpack.c.l.b16 %v2519
    %v3096 = vunpack.c.l.b16 %v2520
    %v3097 = vunpack.c.h.b16 %v2520
    %v3098 = vunpack.c.l.b16 %v2521
    %v3099 = vunpack.c.h.b16 %v2521
    %v3100 = vunpack.c.l.b16 %v2522
    %v3101 = vunpack.c.h.b16 %v2522
    %v3102 = vunpack.c.l.b16 %v2523
    %v3103 = vunpack.c.l.b16 %v2524
    %v3104 = vunpack.c.h.b16 %v2524
    %v3105 = vunpack.c.l.b16 %v2525
    %v3106 = vunpack.c.h.b16 %v2525
    %v3107 = vunpack.c.l.b16 %v2526
    %v3108 = vunpack.c.h.b16 %v2526
    %v3109 = vunpack.c.l.b16 %v2527
    %v3110 = vunpack.c.l.b16 %v2528
    %v3111 = vunpack.c.h.b16 %v2528
    %v3112 = vunpack.c.l.b16 %v2529
    %v3113 = vunpack.c.h.b16 %v2529
    %v3114 = vunpack.c.l.b16 %v2530
    %v3115 = vunpack.c.h.b16 %v2530
    %v3116 = vunpack.c.l.b16 %v2531
    %v3117 = vunpack.c.l.b16 %v2532
    %v3118 = vunpack.c.h.b16 %v2532
    %v3119 = vunpack.c.l.b16 %v2533
    %v3120 = vunpack.c.h.b16 %v2533
    %v3121 = vunpack.c.l.b16 %v2534
    %v3122 = vunpack.c.h.b16 %v2534
    %v3123 = vunpack.c.l.b16 %v2535
    %v3124 = vunpack.c.l.b16 %v2536
    %v3125 = vunpack.c.h.b16 %v2536
    %v3126 = vunpack.c.l.b16 %v2537
    %v3127 = vunpack.c.h.b16 %v2537
    %v3128 = vunpack.c.l.b16 %v2538
    %v3129 = vunpack.c.h.b16 %v2538
    %v3130 = vunpack.c.l.b16 %v2539
    %v3131 = vunpack.c.l.b16 %v2540
    %v3132 = vunpack.c.h.b16 %v2540
    %v3133 = vunpack.c.l.b16 %v2541
    %v3134 = vunpack.c.h.b16 %v2541
    %v3135 = vunpack.c.l.b16 %v2542
    %v3136 = vunpack.c.h.b16 %v2542
    %v3137 = vunpack.c.l.b16 %v2543
    %v3138 = vunpack.c.l.b16 %v2544
    %v3139 = vunpack.c.h.b16 %v2544
    %v3140 = vunpack.c.l.b16 %v2545
    %v3141 = vunpack.c.h.b16 %v2545
    %v3142 = vunpack.c.l.b16 %v2546
    %v3143 = vunpack.c.h.b16 %v2546
    %v3144 = vunpack.c.l.b16 %v2547
    %v3145 = vunpack.c.l.b16 %v2548
    %v3146 = vunpack.c.h.b16 %v2548
    %v3147 = vunpack.c.l.b16 %v2549
    %v3148 = vunpack.c.h.b16 %v2549
    %v3149 = vunpack.c.l.b16 %v2550
    %v3150 = vunpack.c.h.b16 %v2550
    %v3151 = vunpack.c.l.b16 %v2551
    %v3152 = vunpack.c.l.b16 %v2552
    %v3153 = vunpack.c.h.b16 %v2552
    %v3154 = vunpack.c.l.b16 %v2553
    %v3155 = vunpack.c.h.b16 %v2553
    %v3156 = vunpack.c.l.b16 %v2554
    %v3157 = vunpack.c.h.b16 %v2554
    %v3158 = vunpack.c.l.b16 %v2555
    %v3159 = vunpack.c.l.b16 %v2556
    %v3160 = vunpack.c.h.b16 %v2556
    %v3161 = vunpack.c.l.b16 %v2557
    %v3162 = vunpack.c.h.b16 %v2557
    %v3163 = vunpack.c.l.b16 %v2558
    %v3164 = vunpack.c.h.b16 %v2558
    %v3165 = vunpack.c.l.b16 %v2559
    %v3166 = vunpack.c.l.b16 %v2560
    %v3167 = vunpack.c.h.b16 %v2560
    %v3168 = vunpack.c.l.b16 %v2561
    %v3169 = vunpack.c.h.b16 %v2561
    %v3170 = vunpack.c.l.b16 %v2562
    %v3171 = vunpack.c.h.b16 %v2562
    %v3172 = vunpack.c.l.b16 %v2563
    %v3173 = vunpack.c.l.b16 %v2564
    %v3174 = vunpack.c.h.b16 %v2564
    %v3175 = vunpack.c.l.b16 %v2565
    %v3176 = vunpack.c.h.b16 %v2565
    %v3177 = vunpack.c.l.b16 %v2566
    %v3178 = vunpack.c.h.b16 %v2566
    %v3179 = vunpack.c.l.b16 %v2567
    %v3180 = vunpack.c.l.b16 %v2568
    %v3181 = vunpack.c.h.b16 %v2568
    %v3182 = vunpack.c.l.b16 %v2569
    %v3183 = vunpack.c.h.b16 %v2569
    %v3184 = vunpack.c.l.b16 %v2570
    %v3185 = vunpack.c.h.b16 %v2570
    %v3186 = vunpack.c.l.b16 %v2571
    %v3187 = vunpack.c.l.b16 %v2572
    %v3188 = vunpack.c.h.b16 %v2572
    %v3189 = vunpack.c.l.b16 %v2573
    %v3190 = vunpack.c.h.b16 %v2573
    %v3191 = vunpack.c.l.b16 %v2574
    %v3192 = vunpack.c.h.b16 %v2574
    %v3193 = vunpack.c.l.b16 %v2575
    %v3194 = vunpack.c.l.b16 %v2576
    %v3195 = vunpack.c.h.b16 %v2576
    %v3196 = vunpack.c.l.b16 %v2577
    %v3197 = vunpack.c.h.b16 %v2577
    %v3198 = vunpack.c.l.b16 %v2578
    %v3199 = vunpack.c.h.b16 %v2578
    %v3200 = vunpack.c.l.b16 %v2579
    %v3201 = vunpack.c.l.b16 %v2580
    %v3202 = vunpack.c.h.b16 %v2580
    %v3203 = vunpack.c.l.b16 %v2581
    %v3204 = vunpack.c.h.b16 %v2581
    %v3205 = vunpack.c.l.b16 %v2582
    %v3206 = vunpack.c.h.b16 %v2582
    %v3207 = vunpack.c.l.b16 %v2583
    %v3208 = vunpack.c.l.b16 %v2584
    %v3209 = vunpack.c.h.b16 %v2584
    %v3210 = vunpack.c.l.b16 %v2585
    %v3211 = vunpack.c.h.b16 %v2585
    %v3212 = vunpack.c.l.b16 %v2586
    %v3213 = vunpack.c.h.b16 %v2586
    %v3214 = vunpack.c.l.b16 %v2587
    %v3215 = vunpack.c.l.b16 %v2588
    %v3216 = vunpack.c.h.b16 %v2588
    %v3217 = vunpack.c.l.b16 %v2589
    %v3218 = vunpack.c.h.b16 %v2589
    %v3219 = vunpack.c.l.b16 %v2590
    %v3220 = vunpack.c.h.b16 %v2590
    %v3221 = vunpack.c.l.b16 %v2591
    %v3222 = vunpack.c.l.b16 %v2592
    %v3223 = vunpack.c.h.b16 %v2592
    %v3224 = vunpack.c.l.b16 %v2593
    %v3225 = vunpack.c.h.b16 %v2593
    %v3226 = vunpack.c.l.b16 %v2594
    %v3227 = vunpack.c.h.b16 %v2594
    %v3228 = vunpack.c.l.b16 %v2595
    %v3229 = vunpack.c.l.b16 %v2596
    %v3230 = vunpack.c.h.b16 %v2596
    %v3231 = vunpack.c.l.b16 %v2597
    %v3232 = vunpack.c.h.b16 %v2597
    %v3233 = vunpack.c.l.b16 %v2598
    %v3234 = vunpack.c.h.b16 %v2598
    %v3235 = vunpack.c.l.b16 %v2599
    %v3236 = vunpack.c.l.b16 %v2600
    %v3237 = vunpack.c.h.b16 %v2600
    %v3238 = vunpack.c.l.b16 %v2601
    %v3239 = vunpack.c.h.b16 %v2601
    %v3240 = vunpack.c.l.b16 %v2602
    %v3241 = vunpack.c.h.b16 %v2602
    %v3242 = vunpack.c.l.b16 %v2603
    %v3243 = vunpack.c.l.b16 %v2604
    %v3244 = vunpack.c.h.b16 %v2604
    %v3245 = vunpack.c.l.b16 %v2605
    %v3246 = vunpack.c.h.b16 %v2605
    %v3247 = vunpack.c.l.b16 %v2606
    %v3248 = vunpack.c.h.b16 %v2606
    %v3249 = vunpack.c.l.b16 %v2607
    %v3250 = vunpack.c.l.b16 %v2608
    %v3251 = vunpack.c.h.b16 %v2608
    %v3252 = vunpack.c.l.b16 %v2609
    %v3253 = vunpack.c.h.b16 %v2609
    %v3254 = vunpack.c.l.b16 %v2610
    %v3255 = vunpack.c.h.b16 %v2610
    %v3256 = vunpack.c.l.b16 %v2611
    %v3257 = vunpack.c.l.b16 %v2612
    %v3258 = vunpack.c.h.b16 %v2612
    %v3259 = vunpack.c.l.b16 %v2613
    %v3260 = vunpack.c.h.b16 %v2613
    %v3261 = vunpack.c.l.b16 %v2614
    %v3262 = vunpack.c.h.b16 %v2614
    %v3263 = vunpack.c.l.b16 %v2615
    %v3264 = vunpack.c.l.b16 %v2616
    %v3265 = vunpack.c.h.b16 %v2616
    %v3266 = vunpack.c.l.b16 %v2617
    %v3267 = vunpack.c.h.b16 %v2617
    %v3268 = vunpack.c.l.b16 %v2618
    %v3269 = vunpack.c.h.b16 %v2618
    %v3270 = vunpack.c.l.b16 %v2619
    %v3271 = vunpack.c.l.b16 %v2620
    %v3272 = vunpack.c.h.b16 %v2620
    %v3273 = vunpack.c.l.b16 %v2621
    %v3274 = vunpack.c.h.b16 %v2621
    %v3275 = vunpack.c.l.b16 %v2622
    %v3276 = vunpack.c.h.b16 %v2622
    %v3277 = vunpack.c.l.b16 %v2623
    %v3278 = vunpack.c.l.b16 %v2624
    %v3279 = vunpack.c.h.b16 %v2624
    %v3280 = vunpack.c.l.b16 %v2625
    %v3281 = vunpack.c.h.b16 %v2625
    %v3282 = vunpack.c.l.b16 %v2626
    %v3283 = vunpack.c.h.b16 %v2626
    %v3284 = vunpack.c.l.b16 %v2627
    %v3285 = vunpack.c.l.b16 %v2628
    %v3286 = vunpack.c.h.b16 %v2628
    %v3287 = vunpack.c.l.b16 %v2629
    %v3288 = vunpack.c.h.b16 %v2629
    %v3289 = vunpack.c.l.b16 %v2630
    %v3290 = vunpack.c.h.b16 %v2630
    %v3291 = vunpack.c.l.b16 %v2631
    %v3292 = vunpack.c.l.b16 %v2632
    %v3293 = vunpack.c.h.b16 %v2632
    %v3294 = vunpack.c.l.b16 %v2633
    %v3295 = vunpack.c.h.b16 %v2633
    %v3296 = vunpack.c.l.b16 %v2634
    %v3297 = vunpack.c.h.b16 %v2634
    %v3298 = vunpack.c.l.b16 %v2635
    %v3299 = vunpack.c.l.b16 %v2636
    %v3300 = vunpack.c.h.b16 %v2636
    %v3301 = vunpack.c.l.b16 %v2637
    %v3302 = vunpack.c.h.b16 %v2637
    %v3303 = vunpack.c.l.b16 %v2638
    %v3304 = vunpack.c.h.b16 %v2638
    %v3305 = vunpack.c.l.b16 %v2639
    %v3306 = vunpack.c.l.b16 %v2640
    %v3307 = vunpack.c.h.b16 %v2640
    %v3308 = vunpack.c.l.b16 %v2641
    %v3309 = vunpack.c.h.b16 %v2641
    %v3310 = vunpack.c.l.b16 %v2642
    %v3311 = vunpack.c.h.b16 %v2642
    %v3312 = vunpack.c.l.b16 %v2643
    %v3313 = vunpack.c.l.b16 %v2644
    %v3314 = vunpack.c.h.b16 %v2644
    %v3315 = vunpack.c.l.b16 %v2645
    %v3316 = vunpack.c.h.b16 %v2645
    %v3317 = vunpack.c.l.b16 %v2646
    %v3318 = vunpack.c.h.b16 %v2646
    %v3319 = vunpack.c.l.b16 %v2647
    %v3320 = vunpack.c.l.b16 %v2648
    %v3321 = vunpack.c.h.b16 %v2648
    %v3322 = vunpack.c.l.b16 %v2649
    %v3323 = vunpack.c.h.b16 %v2649
    %v3324 = vunpack.c.l.b16 %v2650
    %v3325 = vunpack.c.h.b16 %v2650
    %v3326 = vunpack.c.l.b16 %v2651
    %v3327 = vunpack.c.l.b16 %v2652
    %v3328 = vunpack.c.h.b16 %v2652
    %v3329 = vunpack.c.l.b16 %v2653
    %v3330 = vunpack.c.h.b16 %v2653
    %v3331 = vunpack.c.l.b16 %v2654
    %v3332 = vunpack.c.h.b16 %v2654
    %v3333 = vunpack.c.l.b16 %v2655
    %v3334 = vunpack.c.l.b16 %v2656
    %v3335 = vunpack.c.h.b16 %v2656
    %v3336 = vunpack.c.l.b16 %v2657
    %v3337 = vunpack.c.h.b16 %v2657
    %v3338 = vunpack.c.l.b16 %v2658
    %v3339 = vunpack.c.h.b16 %v2658
    %v3340 = vunpack.c.l.b16 %v2659
    %v3341 = vunpack.c.l.b16 %v2660
    %v3342 = vunpack.c.h.b16 %v2660
    %v3343 = vunpack.c.l.b16 %v2661
    %v3344 = vunpack.c.h.b16 %v2661
    %v3345 = vunpack.c.l.b16 %v2662
    %v3346 = vunpack.c.h.b16 %v2662
    %v3347 = vunpack.c.l.b16 %v2663
    %v3348 = vunpack.c.l.b16 %v2664
    %v3349 = vunpack.c.h.b16 %v2664
    %v3350 = vunpack.c.l.b16 %v2665
    %v3351 = vunpack.c.h.b16 %v2665
    %v3352 = vunpack.c.l.b16 %v2666
    %v3353 = vunpack.c.h.b16 %v2666
    %v3354 = vunpack.c.l.b16 %v2667
    %v3355 = vunpack.c.l.b16 %v2668
    %v3356 = vunpack.c.h.b16 %v2668
    %v3357 = vunpack.c.l.b16 %v2669
    %v3358 = vunpack.c.h.b16 %v2669
    %v3359 = vunpack.c.l.b16 %v2670
    %v3360 = vunpack.c.h.b16 %v2670
    %v3361 = vunpack.c.l.b16 %v2671
    %v3362 = vunpack.c.l.b16 %v2672
    %v3363 = vunpack.c.h.b16 %v2672
    %v3364 = vunpack.c.l.b16 %v2673
    %v3365 = vunpack.c.h.b16 %v2673
    %v3366 = vunpack.c.l.b16 %v2674
    %v3367 = vunpack.c.h.b16 %v2674
    %v3368 = vunpack.c.l.b16 %v2675
    %v3369 = vunpack.c.l.b16 %v2676
    %v3370 = vunpack.c.h.b16 %v2676
    %v3371 = vunpack.c.l.b16 %v2677
    %v3372 = vunpack.c.h.b16 %v2677
    %v3373 = vunpack.c.l.b16 %v2678
    %v3374 = vunpack.c.h.b16 %v2678
    %v3375 = vunpack.c.l.b16 %v2679
    %v3376 = vunpack.c.l.b16 %v2680
    %v3377 = vunpack.c.h.b16 %v2680
    %v3378 = vunpack.c.l.b16 %v2681
    %v3379 = vunpack.c.h.b16 %v2681
    %v3380 = vunpack.c.l.b16 %v2682
    %v3381 = vunpack.c.h.b16 %v2682
    %v3382 = vunpack.c.l.b16 %v2683
    %v3383 = vunpack.c.l.b16 %v2684
    %v3384 = vunpack.c.h.b16 %v2684
    %v3385 = vunpack.c.l.b16 %v2685
    %v3386 = vunpack.c.h.b16 %v2685
    %v3387 = vunpack.c.l.b16 %v2686
    %v3388 = vunpack.c.h.b16 %v2686
    %v3389 = vunpack.c.l.b16 %v2687
    %v3390 = vunpack.c.l.b16 %v2688
    %v3391 = vunpack.c.h.b16 %v2688
    %v3392 = vunpack.c.l.b16 %v2689
    %v3393 = vunpack.c.h.b16 %v2689
    %v3394 = vunpack.c.l.b16 %v2690
    %v3395 = vunpack.c.h.b16 %v2690
    %v3396 = vunpack.c.l.b16 %v2691
    %v3397 = vunpack.c.l.b16 %v2692
    %v3398 = vunpack.c.h.b16 %v2692
    %v3399 = vunpack.c.l.b16 %v2693
    %v3400 = vunpack.c.h.b16 %v2693
    %v3401 = vunpack.c.l.b16 %v2694
    %v3402 = vunpack.c.h.b16 %v2694
    %v3403 = vunpack.c.l.b16 %v2695
    %v3404 = vunpack.c.l.b16 %v2696
    %v3405 = vunpack.c.h.b16 %v2696
    %v3406 = vunpack.c.l.b16 %v2697
    %v3407 = vunpack.c.h.b16 %v2697
    %v3408 = vunpack.c.l.b16 %v2698
    %v3409 = vunpack.c.h.b16 %v2698
    %v3410 = vunpack.c.l.b16 %v2699
    %v3411 = vunpack.c.l.b16 %v2700
    %v3412 = vunpack.c.h.b16 %v2700
    %v3413 = vunpack.c.l.b16 %v2701
    %v3414 = vunpack.c.h.b16 %v2701
    %v3415 = vunpack.c.l.b16 %v2702
    %v3416 = vunpack.c.h.b16 %v2702
    %v3417 = vunpack.c.l.b16 %v2703
    %v3418 = vunpack.c.l.b16 %v2704
    %v3419 = vunpack.c.h.b16 %v2704
    %v3420 = vunpack.c.l.b16 %v2705
    %v3421 = vunpack.c.h.b16 %v2705
    %v3422 = vunpack.c.l.b16 %v2706
    %v3423 = vunpack.c.h.b16 %v2706
    %v3424 = vunpack.c.l.b16 %v2707
    %v3425 = vunpack.c.l.b16 %v2708
    %v3426 = vunpack.c.h.b16 %v2708
    %v3427 = vunpack.c.l.b16 %v2709
    %v3428 = vunpack.c.h.b16 %v2709
    %v3429 = vunpack.c.l.b16 %v2710
    %v3430 = vunpack.c.h.b16 %v2710
    %v3431 = vunpack.c.l.b16 %v2711
    %v3432 = vpack.c.b16 %v2991, %v2984
    %v3433 = vpack.c.b16 %v2992, %v2985
    %v3434 = vpack.c.b16 %v2993, %v2986
    %v3435 = vpack.c.b16 %v2994, %v2987
    %v3436 = vpack.c.b16 %v2995, %v2988
    %v3437 = vpack.c.b16 %v2996, %v2989
    %v3438 = vpack.c.b16 %v2997, %v2990
    %v3439 = vpack.c.b16 %v3005, %v2998
    %v3440 = vpack.c.b16 %v3006, %v2999
    %v3441 = vpack.c.b16 %v3007, %v3000
    %v3442 = vpack.c.b16 %v3008, %v3001
    %v3443 = vpack.c.b16 %v3009, %v3002
    %v3444 = vpack.c.b16 %v3010, %v3003
    %v3445 = vpack.c.b16 %v3011, %v3004
    %v3446 = vpack.c.b16 %v3019, %v3012
    %v3447 = vpack.c.b16 %v3020, %v3013
    %v3448 = vpack.c.b16 %v3021, %v3014
    %v3449 = vpack.c.b16 %v3022, %v3015
    %v3450 = vpack.c.b16 %v3023, %v3016
    %v3451 = vpack.c.b16 %v3024, %v3017
    %v3452 = vpack.c.b16 %v3025, %v3018
    %v3453 = vpack.c.b16 %v3033, %v3026
    %v3454 = vpack.c.b16 %v3034, %v3027
    %v3455 = vpack.c.b16 %v3035, %v3028
    %v3456 = vpack.c.b16 %v3036, %v3029
    %v3457 = vpack.c.b16 %v3037, %v3030
    %v3458 = vpack.c.b16 %v3038, %v3031
    %v3459 = vpack.c.b16 %v3039, %v3032
    %v3460 = vpack.c.b16 %v3047, %v3040
    %v3461 = vpack.c.b16 %v3048, %v3041
    %v3462 = vpack.c.b16 %v3049, %v3042
    %v3463 = vpack.c.b16 %v3050, %v3043
    %v3464 = vpack.c.b16 %v3051, %v3044
    %v3465 = vpack.c.b16 %v3052, %v3045
    %v3466 = vpack.c.b16 %v3053, %v3046
    %v3467 = vpack.c.b16 %v3061, %v3054
    %v3468 = vpack.c.b16 %v3062, %v3055
    %v3469 = vpack.c.b16 %v3063, %v3056
    %v3470 = vpack.c.b16 %v3064, %v3057
    %v3471 = vpack.c.b16 %v3065, %v3058
    %v3472 = vpack.c.b16 %v3066, %v3059
    %v3473 = vpack.c.b16 %v3067, %v3060
    %v3474 = vpack.c.b16 %v3075, %v3068
    %v3475 = vpack.c.b16 %v3076, %v3069
    %v3476 = vpack.c.b16 %v3077, %v3070
    %v3477 = vpack.c.b16 %v3078, %v3071
    %v3478 = vpack.c.b16 %v3079, %v3072
    %v3479 = vpack.c.b16 %v3080, %v3073
    %v3480 = vpack.c.b16 %v3081, %v3074
    %v3481 = vpack.c.b16 %v3089, %v3082
    %v3482 = vpack.c.b16 %v3090, %v3083
    %v3483 = vpack.c.b16 %v3091, %v3084
    %v3484 = vpack.c.b16 %v3092, %v3085
    %v3485 = vpack.c.b16 %v3093, %v3086
    %v3486 = vpack.c.b16 %v3094, %v3087
    %v3487 = vpack.c.b16 %v3095, %v3088
    %v3488 = vpack.c.b16 %v3103, %v3096
    %v3489 = vpack.c.b16 %v3104, %v3097
    %v3490 = vpack.c.b16 %v3105, %v3098
    %v3491 = vpack.c.b16 %v3106, %v3099
    %v3492 = vpack.c.b16 %v3107, %v3100
    %v3493 = vpack.c.b16 %v3108, %v3101
    %v3494 = vpack.c.b16 %v3109, %v3102
    %v3495 = vpack.c.b16 %v3117, %v3110
    %v3496 = vpack.c.b16 %v3118, %v3111
    %v3497 = vpack.c.b16 %v3119, %v3112
    %v3498 = vpack.c.b16 %v3120, %v3113
    %v3499 = vpack.c.b16 %v3121, %v3114
    %v3500 = vpack.c.b16 %v3122, %v3115
    %v3501 = vpack.c.b16 %v3123, %v3116
    %v3502 = vpack.c.b16 %v3131, %v3124
    %v3503 = vpack.c.b16 %v3132, %v3125
    %v3504 = vpack.c.b16 %v3133, %v3126
    %v3505 = vpack.c.b16 %v3134, %v3127
    %v3506 = vpack.c.b16 %v3135, %v3128
    %v3507 = vpack.c.b16 %v3136, %v3129
    %v3508 = vpack.c.b16 %v3137, %v3130
    %v3509 = vpack.c.b16 %v3145, %v3138
    %v3510 = vpack.c.b16 %v3146, %v3139
    %v3511 = vpack.c.b16 %v3147, %v3140
    %v3512 = vpack.c.b16 %v3148, %v3141
    %v3513 = vpack.c.b16 %v3149, %v3142
    %v3514 = vpack.c.b16 %v3150, %v3143
    %v3515 = vpack.c.b16 %v3151, %v3144
    %v3516 = vpack.c.b16 %v3159, %v3152
    %v3517 = vpack.c.b16 %v3160, %v3153
    %v3518 = vpack.c.b16 %v3161, %v3154
    %v3519 = vpack.c.b16 %v3162, %v3155
    %v3520 = vpack.c.b16 %v3163, %v3156
    %v3521 = vpack.c.b16 %v3164, %v3157
    %v3522 = vpack.c.b16 %v3165, %v3158
    %v3523 = vpack.c.b16 %v3173, %v3166
    %v3524 = vpack.c.b16 %v3174, %v3167
    %v3525 = vpack.c.b16 %v3175, %v3168
    %v3526 = vpack.c.b16 %v3176, %v3169
    %v3527 = vpack.c.b16 %v3177, %v3170
    %v3528 = vpack.c.b16 %v3178, %v3171
    %v3529 = vpack.c.b16 %v3179, %v3172
    %v3530 = vpack.c.b16 %v3187, %v3180
    %v3531 = vpack.c.b16 %v3188, %v3181
    %v3532 = vpack.c.b16 %v3189, %v3182
    %v3533 = vpack.c.b16 %v3190, %v3183
    %v3534 = vpack.c.b16 %v3191, %v3184
    %v3535 = vpack.c.b16 %v3192, %v3185
    %v3536 = vpack.c.b16 %v3193, %v3186
    %v3537 = vpack.c.b16 %v3201, %v3194
    %v3538 = vpack.c.b16 %v3202, %v3195
    %v3539 = vpack.c.b16 %v3203, %v3196
    %v3540 = vpack.c.b16 %v3204, %v3197
    %v3541 = vpack.c.b16 %v3205, %v3198
    %v3542 = vpack.c.b16 %v3206, %v3199
    %v3543 = vpack.c.b16 %v3207, %v3200
    %v3544 = vpack.c.b16 %v3215, %v3208
    %v3545 = vpack.c.b16 %v3216, %v3209
    %v3546 = vpack.c.b16 %v3217, %v3210
    %v3547 = vpack.c.b16 %v3218, %v3211
    %v3548 = vpack.c.b16 %v3219, %v3212
    %v3549 = vpack.c.b16 %v3220, %v3213
    %v3550 = vpack.c.b16 %v3221, %v3214
    %v3551 = vpack.c.b16 %v3229, %v3222
    %v3552 = vpack.c.b16 %v3230, %v3223
    %v3553 = vpack.c.b16 %v3231, %v3224
    %v3554 = vpack.c.b16 %v3232, %v3225
    %v3555 = vpack.c.b16 %v3233, %v3226
    %v3556 = vpack.c.b16 %v3234, %v3227
    %v3557 = vpack.c.b16 %v3235, %v3228
    %v3558 = vpack.c.b16 %v3243, %v3236
    %v3559 = vpack.c.b16 %v3244, %v3237
    %v3560 = vpack.c.b16 %v3245, %v3238
    %v3561 = vpack.c.b16 %v3246, %v3239
    %v3562 = vpack.c.b16 %v3247, %v3240
    %v3563 = vpack.c.b16 %v3248, %v3241
    %v3564 = vpack.c.b16 %v3249, %v3242
    %v3565 = vpack.c.b16 %v3257, %v3250
    %v3566 = vpack.c.b16 %v3258, %v3251
    %v3567 = vpack.c.b16 %v3259, %v3252
    %v3568 = vpack.c.b16 %v3260, %v3253
    %v3569 = vpack.c.b16 %v3261, %v3254
    %v3570 = vpack.c.b16 %v3262, %v3255
    %v3571 = vpack.c.b16 %v3263, %v3256
    %v3572 = vpack.c.b16 %v3271, %v3264
    %v3573 = vpack.c.b16 %v3272, %v3265
    %v3574 = vpack.c.b16 %v3273, %v3266
    %v3575 = vpack.c.b16 %v3274, %v3267
    %v3576 = vpack.c.b16 %v3275, %v3268
    %v3577 = vpack.c.b16 %v3276, %v3269
    %v3578 = vpack.c.b16 %v3277, %v3270
    %v3579 = vpack.c.b16 %v3285, %v3278
    %v3580 = vpack.c.b16 %v3286, %v3279
    %v3581 = vpack.c.b16 %v3287, %v3280
    %v3582 = vpack.c.b16 %v3288, %v3281
    %v3583 = vpack.c.b16 %v3289, %v3282
    %v3584 = vpack.c.b16 %v3290, %v3283
    %v3585 = vpack.c.b16 %v3291, %v3284
    %v3586 = vpack.c.b16 %v3299, %v3292
    %v3587 = vpack.c.b16 %v3300, %v3293
    %v3588 = vpack.c.b16 %v3301, %v3294
    %v3589 = vpack.c.b16 %v3302, %v3295
    %v3590 = vpack.c.b16 %v3303, %v3296
    %v3591 = vpack.c.b16 %v3304, %v3297
    %v3592 = vpack.c.b16 %v3305, %v3298
    %v3593 = vpack.c.b16 %v3313, %v3306
    %v3594 = vpack.c.b16 %v3314, %v3307
    %v3595 = vpack.c.b16 %v3315, %v3308
    %v3596 = vpack.c.b16 %v3316, %v3309
    %v3597 = vpack.c.b16 %v3317, %v3310
    %v3598 = vpack.c.b16 %v3318, %v3311
    %v3599 = vpack.c.b16 %v3319, %v3312
    %v3600 = vpack.c.b16 %v3327, %v3320
    %v3601 = vpack.c.b16 %v3328, %v3321
    %v3602 = vpack.c.b16 %v3329, %v3322
    %v3603 = vpack.c.b16 %v3330, %v3323
    %v3604 = vpack.c.b16 %v3331, %v3324
    %v3605 = vpack.c.b16 %v3332, %v3325
    %v3606 = vpack.c.b16 %v3333, %v3326
    %v3607 = vpack.c.b16 %v3341, %v3334
    %v3608 = vpack.c.b16 %v3342, %v3335
    %v3609 = vpack.c.b16 %v3343, %v3336
    %v3610 = vpack.c.b16 %v3344, %v3337
    %v3611 = vpack.c.b16 %v3345, %v3338
    %v3612 = vpack.c.b16 %v3346, %v3339
    %v3613 = vpack.c.b16 %v3347, %v3340
    %v3614 = vpack.c.b16 %v3355, %v3348
    %v3615 = vpack.c.b16 %v3356, %v3349
    %v3616 = vpack.c.b16 %v3357, %v3350
    %v3617 = vpack.c.b16 %v3358, %v3351
    %v3618 = vpack.c.b16 %v3359, %v3352
    %v3619 = vpack.c.b16 %v3360, %v3353
    %v3620 = vpack.c.b16 %v3361, %v3354
    %v3621 = vpack.c.b16 %v3369, %v3362
    %v3622 = vpack.c.b16 %v3370, %v3363
    %v3623 = vpack.c.b16 %v3371, %v3364
    %v3624 = vpack.c.b16 %v3372, %v3365
    %v3625 = vpack.c.b16 %v3373, %v3366
    %v3626 = vpack.c.b16 %v3374, %v3367
    %v3627 = vpack.c.b16 %v3375, %v3368
    %v3628 = vpack.c.b16 %v3383, %v3376
    %v3629 = vpack.c.b16 %v3384, %v3377
    %v3630 = vpack.c.b16 %v3385, %v3378
    %v3631 = vpack.c.b16 %v3386, %v3379
    %v3632 = vpack.c.b16 %v3387, %v3380
    %v3633 = vpack.c.b16 %v3388, %v3381
    %v3634 = vpack.c.b16 %v3389, %v3382
    %v3635 = vpack.c.b16 %v3397, %v3390
    %v3636 = vpack.c.b16 %v3398, %v3391
    %v3637 = vpack.c.b16 %v3399, %v3392
    %v3638 = vpack.c.b16 %v3400, %v3393
    %v3639 = vpack.c.b16 %v3401, %v3394
    %v3640 = vpack.c.b16 %v3402, %v3395
    %v3641 = vpack.c.b16 %v3403, %v3396
    %v3642 = vpack.c.b16 %v3411, %v3404
    %v3643 = vpack.c.b16 %v3412, %v3405
    %v3644 = vpack.c.b16 %v3413, %v3406
    %v3645 = vpack.c.b16 %v3414, %v3407
    %v3646 = vpack.c.b16 %v3415, %v3408
    %v3647 = vpack.c.b16 %v3416, %v3409
    %v3648 = vpack.c.b16 %v3417, %v3410
    %v3649 = vpack.c.b16 %v3425, %v3418
    %v3650 = vpack.c.b16 %v3426, %v3419
    %v3651 = vpack.c.b16 %v3427, %v3420
    %v3652 = vpack.c.b16 %v3428, %v3421
    %v3653 = vpack.c.b16 %v3429, %v3422
    %v3654 = vpack.c.b16 %v3430, %v3423
    %v3655 = vpack.c.b16 %v3431, %v3424
    %3880 = vmatpush.bf16.msra.mxu0 %v3481
    %3881 = vmatpush.bf16.msra.mxu0 %v3474
    %3882 = vmatpush.bf16.msra.mxu0 %v3467
    %3883 = vmatpush.bf16.msra.mxu0 %v3460
    %3884 = vmatpush.bf16.msra.mxu0 %v3453
    %3885 = vmatpush.bf16.msra.mxu0 %v3446
    %3886 = vmatpush.bf16.msra.mxu0 %v3439
    %3887 = vmatpush.bf16.msra.mxu0 %v3432
    %3888 = vmatmul.bf16.gmra.mxu0 %v2452
    %v3889 = vpop.f32.mrf.mxu0
    %v3890 = vadd.f32 %v2714, %v3889
    %v3891 = vpop.f32.mrf.mxu0
    %3892 = vdwg.mxu0
    %3893 = vmatpush.bf16.msra.mxu0 %v3537
    %3894 = vmatpush.bf16.msra.mxu0 %v3530
    %3895 = vmatpush.bf16.msra.mxu0 %v3523
    %3896 = vmatpush.bf16.msra.mxu0 %v3516
    %3897 = vmatpush.bf16.msra.mxu0 %v3509
    %3898 = vmatpush.bf16.msra.mxu0 %v3502
    %3899 = vmatpush.bf16.msra.mxu0 %v3495
    %3900 = vmatpush.bf16.msra.mxu0 %v3488
    %3901 = vmatmul.bf16.gmra.mxu0 %v2453
    %v3902 = vpop.f32.mrf.mxu0
    %v3903 = vadd.f32 %v3890, %v3902
    %v3904 = vpop.f32.mrf.mxu0
    %3905 = vdwg.mxu0
    %3906 = vmatpush.bf16.msra.mxu0 %v3593
    %3907 = vmatpush.bf16.msra.mxu0 %v3586
    %3908 = vmatpush.bf16.msra.mxu0 %v3579
    %3909 = vmatpush.bf16.msra.mxu0 %v3572
    %3910 = vmatpush.bf16.msra.mxu0 %v3565
    %3911 = vmatpush.bf16.msra.mxu0 %v3558
    %3912 = vmatpush.bf16.msra.mxu0 %v3551
    %3913 = vmatpush.bf16.msra.mxu0 %v3544
    %3914 = vmatmul.bf16.gmra.mxu0 %v2454
    %v3915 = vpop.f32.mrf.mxu0
    %v3916 = vadd.f32 %v3903, %v3915
    %v3917 = vpop.f32.mrf.mxu0
    %3918 = vdwg.mxu0
    %3919 = vmatpush.bf16.msra.mxu0 %v3649
    %3920 = vmatpush.bf16.msra.mxu0 %v3642
    %3921 = vmatpush.bf16.msra.mxu0 %v3635
    %3922 = vmatpush.bf16.msra.mxu0 %v3628
    %3923 = vmatpush.bf16.msra.mxu0 %v3621
    %3924 = vmatpush.bf16.msra.mxu0 %v3614
    %3925 = vmatpush.bf16.msra.mxu0 %v3607
    %3926 = vmatpush.bf16.msra.mxu0 %v3600
    %3927 = vmatmul.bf16.gmra.mxu0 %v2455
    %v3928 = vpop.f32.mrf.mxu0
    %v3929 = vadd.f32 %v3916, %v3928
    %v3930 = vpop.f32.mrf.mxu0
    %3931 = vdwg.mxu0
    %3932 = vmatpush.bf16.msra.mxu0 %v3482
    %3933 = vmatpush.bf16.msra.mxu0 %v3475
    %3934 = vmatpush.bf16.msra.mxu0 %v3468
    %3935 = vmatpush.bf16.msra.mxu0 %v3461
    %3936 = vmatpush.bf16.msra.mxu0 %v3454
    %3937 = vmatpush.bf16.msra.mxu0 %v3447
    %3938 = vmatpush.bf16.msra.mxu0 %v3440
    %3939 = vmatpush.bf16.msra.mxu0 %v3433
    %3940 = vmatmul.bf16.gmra.mxu0 %v2452
    %v3941 = vpop.f32.mrf.mxu0
    %v3942 = vadd.f32 %v2715, %v3941
    %v3943 = vpop.f32.mrf.mxu0
    %3944 = vdwg.mxu0
    %3945 = vmatpush.bf16.msra.mxu0 %v3538
    %3946 = vmatpush.bf16.msra.mxu0 %v3531
    %3947 = vmatpush.bf16.msra.mxu0 %v3524
    %3948 = vmatpush.bf16.msra.mxu0 %v3517
    %3949 = vmatpush.bf16.msra.mxu0 %v3510
    %3950 = vmatpush.bf16.msra.mxu0 %v3503
    %3951 = vmatpush.bf16.msra.mxu0 %v3496
    %3952 = vmatpush.bf16.msra.mxu0 %v3489
    %3953 = vmatmul.bf16.gmra.mxu0 %v2453
    %v3954 = vpop.f32.mrf.mxu0
    %v3955 = vadd.f32 %v3942, %v3954
    %v3956 = vpop.f32.mrf.mxu0
    %3957 = vdwg.mxu0
    %3958 = vmatpush.bf16.msra.mxu0 %v3594
    %3959 = vmatpush.bf16.msra.mxu0 %v3587
    %3960 = vmatpush.bf16.msra.mxu0 %v3580
    %3961 = vmatpush.bf16.msra.mxu0 %v3573
    %3962 = vmatpush.bf16.msra.mxu0 %v3566
    %3963 = vmatpush.bf16.msra.mxu0 %v3559
    %3964 = vmatpush.bf16.msra.mxu0 %v3552
    %3965 = vmatpush.bf16.msra.mxu0 %v3545
    %3966 = vmatmul.bf16.gmra.mxu0 %v2454
    %v3967 = vpop.f32.mrf.mxu0
    %v3968 = vadd.f32 %v3955, %v3967
    %v3969 = vpop.f32.mrf.mxu0
    %3970 = vdwg.mxu0
    %3971 = vmatpush.bf16.msra.mxu0 %v3650
    %3972 = vmatpush.bf16.msra.mxu0 %v3643
    %3973 = vmatpush.bf16.msra.mxu0 %v3636
    %3974 = vmatpush.bf16.msra.mxu0 %v3629
    %3975 = vmatpush.bf16.msra.mxu0 %v3622
    %3976 = vmatpush.bf16.msra.mxu0 %v3615
    %3977 = vmatpush.bf16.msra.mxu0 %v3608
    %3978 = vmatpush.bf16.msra.mxu0 %v3601
    %3979 = vmatmul.bf16.gmra.mxu0 %v2455
    %v3980 = vpop.f32.mrf.mxu0
    %v3981 = vadd.f32 %v3968, %v3980
    %v3982 = vpop.f32.mrf.mxu0
    %3983 = vdwg.mxu0
    %3984 = vmatpush.bf16.msra.mxu0 %v3483
    %3985 = vmatpush.bf16.msra.mxu0 %v3476
    %3986 = vmatpush.bf16.msra.mxu0 %v3469
    %3987 = vmatpush.bf16.msra.mxu0 %v3462
    %3988 = vmatpush.bf16.msra.mxu0 %v3455
    %3989 = vmatpush.bf16.msra.mxu0 %v3448
    %3990 = vmatpush.bf16.msra.mxu0 %v3441
    %3991 = vmatpush.bf16.msra.mxu0 %v3434
    %3992 = vmatmul.bf16.gmra.mxu0 %v2452
    %v3993 = vpop.f32.mrf.mxu0
    %v3994 = vadd.f32 %v2716, %v3993
    %v3995 = vpop.f32.mrf.mxu0
    %3996 = vdwg.mxu0
    %3997 = vmatpush.bf16.msra.mxu0 %v3539
    %3998 = vmatpush.bf16.msra.mxu0 %v3532
    %3999 = vmatpush.bf16.msra.mxu0 %v3525
    %4000 = vmatpush.bf16.msra.mxu0 %v3518
    %4001 = vmatpush.bf16.msra.mxu0 %v3511
    %4002 = vmatpush.bf16.msra.mxu0 %v3504
    %4003 = vmatpush.bf16.msra.mxu0 %v3497
    %4004 = vmatpush.bf16.msra.mxu0 %v3490
    %4005 = vmatmul.bf16.gmra.mxu0 %v2453
    %v4006 = vpop.f32.mrf.mxu0
    %v4007 = vadd.f32 %v3994, %v4006
    %v4008 = vpop.f32.mrf.mxu0
    %4009 = vdwg.mxu0
    %4010 = vmatpush.bf16.msra.mxu0 %v3595
    %4011 = vmatpush.bf16.msra.mxu0 %v3588
    %4012 = vmatpush.bf16.msra.mxu0 %v3581
    %4013 = vmatpush.bf16.msra.mxu0 %v3574
    %4014 = vmatpush.bf16.msra.mxu0 %v3567
    %4015 = vmatpush.bf16.msra.mxu0 %v3560
    %4016 = vmatpush.bf16.msra.mxu0 %v3553
    %4017 = vmatpush.bf16.msra.mxu0 %v3546
    %4018 = vmatmul.bf16.gmra.mxu0 %v2454
    %v4019 = vpop.f32.mrf.mxu0
    %v4020 = vadd.f32 %v4007, %v4019
    %v4021 = vpop.f32.mrf.mxu0
    %4022 = vdwg.mxu0
    %4023 = vmatpush.bf16.msra.mxu0 %v3651
    %4024 = vmatpush.bf16.msra.mxu0 %v3644
    %4025 = vmatpush.bf16.msra.mxu0 %v3637
    %4026 = vmatpush.bf16.msra.mxu0 %v3630
    %4027 = vmatpush.bf16.msra.mxu0 %v3623
    %4028 = vmatpush.bf16.msra.mxu0 %v3616
    %4029 = vmatpush.bf16.msra.mxu0 %v3609
    %4030 = vmatpush.bf16.msra.mxu0 %v3602
    %4031 = vmatmul.bf16.gmra.mxu0 %v2455
    %v4032 = vpop.f32.mrf.mxu0
    %v4033 = vadd.f32 %v4020, %v4032
    %v4034 = vpop.f32.mrf.mxu0
    %4035 = vdwg.mxu0
    %4036 = vmatpush.bf16.msra.mxu0 %v3484
    %4037 = vmatpush.bf16.msra.mxu0 %v3477
    %4038 = vmatpush.bf16.msra.mxu0 %v3470
    %4039 = vmatpush.bf16.msra.mxu0 %v3463
    %4040 = vmatpush.bf16.msra.mxu0 %v3456
    %4041 = vmatpush.bf16.msra.mxu0 %v3449
    %4042 = vmatpush.bf16.msra.mxu0 %v3442
    %4043 = vmatpush.bf16.msra.mxu0 %v3435
    %4044 = vmatmul.bf16.gmra.mxu0 %v2452
    %v4045 = vpop.f32.mrf.mxu0
    %v4046 = vadd.f32 %v2717, %v4045
    %v4047 = vpop.f32.mrf.mxu0
    %4048 = vdwg.mxu0
    %4049 = vmatpush.bf16.msra.mxu0 %v3540
    %4050 = vmatpush.bf16.msra.mxu0 %v3533
    %4051 = vmatpush.bf16.msra.mxu0 %v3526
    %4052 = vmatpush.bf16.msra.mxu0 %v3519
    %4053 = vmatpush.bf16.msra.mxu0 %v3512
    %4054 = vmatpush.bf16.msra.mxu0 %v3505
    %4055 = vmatpush.bf16.msra.mxu0 %v3498
    %4056 = vmatpush.bf16.msra.mxu0 %v3491
    %4057 = vmatmul.bf16.gmra.mxu0 %v2453
    %v4058 = vpop.f32.mrf.mxu0
    %v4059 = vadd.f32 %v4046, %v4058
    %v4060 = vpop.f32.mrf.mxu0
    %4061 = vdwg.mxu0
    %4062 = vmatpush.bf16.msra.mxu0 %v3596
    %4063 = vmatpush.bf16.msra.mxu0 %v3589
    %4064 = vmatpush.bf16.msra.mxu0 %v3582
    %4065 = vmatpush.bf16.msra.mxu0 %v3575
    %4066 = vmatpush.bf16.msra.mxu0 %v3568
    %4067 = vmatpush.bf16.msra.mxu0 %v3561
    %4068 = vmatpush.bf16.msra.mxu0 %v3554
    %4069 = vmatpush.bf16.msra.mxu0 %v3547
    %4070 = vmatmul.bf16.gmra.mxu0 %v2454
    %v4071 = vpop.f32.mrf.mxu0
    %v4072 = vadd.f32 %v4059, %v4071
    %v4073 = vpop.f32.mrf.mxu0
    %4074 = vdwg.mxu0
    %4075 = vmatpush.bf16.msra.mxu0 %v3652
    %4076 = vmatpush.bf16.msra.mxu0 %v3645
    %4077 = vmatpush.bf16.msra.mxu0 %v3638
    %4078 = vmatpush.bf16.msra.mxu0 %v3631
    %4079 = vmatpush.bf16.msra.mxu0 %v3624
    %4080 = vmatpush.bf16.msra.mxu0 %v3617
    %4081 = vmatpush.bf16.msra.mxu0 %v3610
    %4082 = vmatpush.bf16.msra.mxu0 %v3603
    %4083 = vmatmul.bf16.gmra.mxu0 %v2455
    %v4084 = vpop.f32.mrf.mxu0
    %v4085 = vadd.f32 %v4072, %v4084
    %v4086 = vpop.f32.mrf.mxu0
    %4087 = vdwg.mxu0
    %4088 = vmatpush.bf16.msra.mxu0 %v3485
    %4089 = vmatpush.bf16.msra.mxu0 %v3478
    %4090 = vmatpush.bf16.msra.mxu0 %v3471
    %4091 = vmatpush.bf16.msra.mxu0 %v3464
    %4092 = vmatpush.bf16.msra.mxu0 %v3457
    %4093 = vmatpush.bf16.msra.mxu0 %v3450
    %4094 = vmatpush.bf16.msra.mxu0 %v3443
    %4095 = vmatpush.bf16.msra.mxu0 %v3436
    %4096 = vmatmul.bf16.gmra.mxu0 %v2452
    %v4097 = vpop.f32.mrf.mxu0
    %v4098 = vadd.f32 %v2718, %v4097
    %v4099 = vpop.f32.mrf.mxu0
    %4100 = vdwg.mxu0
    %4101 = vmatpush.bf16.msra.mxu0 %v3541
    %4102 = vmatpush.bf16.msra.mxu0 %v3534
    %4103 = vmatpush.bf16.msra.mxu0 %v3527
    %4104 = vmatpush.bf16.msra.mxu0 %v3520
    %4105 = vmatpush.bf16.msra.mxu0 %v3513
    %4106 = vmatpush.bf16.msra.mxu0 %v3506
    %4107 = vmatpush.bf16.msra.mxu0 %v3499
    %4108 = vmatpush.bf16.msra.mxu0 %v3492
    %4109 = vmatmul.bf16.gmra.mxu0 %v2453
    %v4110 = vpop.f32.mrf.mxu0
    %v4111 = vadd.f32 %v4098, %v4110
    %v4112 = vpop.f32.mrf.mxu0
    %4113 = vdwg.mxu0
    %4114 = vmatpush.bf16.msra.mxu0 %v3597
    %4115 = vmatpush.bf16.msra.mxu0 %v3590
    %4116 = vmatpush.bf16.msra.mxu0 %v3583
    %4117 = vmatpush.bf16.msra.mxu0 %v3576
    %4118 = vmatpush.bf16.msra.mxu0 %v3569
    %4119 = vmatpush.bf16.msra.mxu0 %v3562
    %4120 = vmatpush.bf16.msra.mxu0 %v3555
    %4121 = vmatpush.bf16.msra.mxu0 %v3548
    %4122 = vmatmul.bf16.gmra.mxu0 %v2454
    %v4123 = vpop.f32.mrf.mxu0
    %v4124 = vadd.f32 %v4111, %v4123
    %v4125 = vpop.f32.mrf.mxu0
    %4126 = vdwg.mxu0
    %4127 = vmatpush.bf16.msra.mxu0 %v3653
    %4128 = vmatpush.bf16.msra.mxu0 %v3646
    %4129 = vmatpush.bf16.msra.mxu0 %v3639
    %4130 = vmatpush.bf16.msra.mxu0 %v3632
    %4131 = vmatpush.bf16.msra.mxu0 %v3625
    %4132 = vmatpush.bf16.msra.mxu0 %v3618
    %4133 = vmatpush.bf16.msra.mxu0 %v3611
    %4134 = vmatpush.bf16.msra.mxu0 %v3604
    %4135 = vmatmul.bf16.gmra.mxu0 %v2455
    %v4136 = vpop.f32.mrf.mxu0
    %v4137 = vadd.f32 %v4124, %v4136
    %v4138 = vpop.f32.mrf.mxu0
    %4139 = vdwg.mxu0
    %4140 = vmatpush.bf16.msra.mxu0 %v3486
    %4141 = vmatpush.bf16.msra.mxu0 %v3479
    %4142 = vmatpush.bf16.msra.mxu0 %v3472
    %4143 = vmatpush.bf16.msra.mxu0 %v3465
    %4144 = vmatpush.bf16.msra.mxu0 %v3458
    %4145 = vmatpush.bf16.msra.mxu0 %v3451
    %4146 = vmatpush.bf16.msra.mxu0 %v3444
    %4147 = vmatpush.bf16.msra.mxu0 %v3437
    %4148 = vmatmul.bf16.gmra.mxu0 %v2452
    %v4149 = vpop.f32.mrf.mxu0
    %v4150 = vadd.f32 %v2719, %v4149
    %v4151 = vpop.f32.mrf.mxu0
    %4152 = vdwg.mxu0
    %4153 = vmatpush.bf16.msra.mxu0 %v3542
    %4154 = vmatpush.bf16.msra.mxu0 %v3535
    %4155 = vmatpush.bf16.msra.mxu0 %v3528
    %4156 = vmatpush.bf16.msra.mxu0 %v3521
    %4157 = vmatpush.bf16.msra.mxu0 %v3514
    %4158 = vmatpush.bf16.msra.mxu0 %v3507
    %4159 = vmatpush.bf16.msra.mxu0 %v3500
    %4160 = vmatpush.bf16.msra.mxu0 %v3493
    %4161 = vmatmul.bf16.gmra.mxu0 %v2453
    %v4162 = vpop.f32.mrf.mxu0
    %v4163 = vadd.f32 %v4150, %v4162
    %v4164 = vpop.f32.mrf.mxu0
    %4165 = vdwg.mxu0
    %4166 = vmatpush.bf16.msra.mxu0 %v3598
    %4167 = vmatpush.bf16.msra.mxu0 %v3591
    %4168 = vmatpush.bf16.msra.mxu0 %v3584
    %4169 = vmatpush.bf16.msra.mxu0 %v3577
    %4170 = vmatpush.bf16.msra.mxu0 %v3570
    %4171 = vmatpush.bf16.msra.mxu0 %v3563
    %4172 = vmatpush.bf16.msra.mxu0 %v3556
    %4173 = vmatpush.bf16.msra.mxu0 %v3549
    %4174 = vmatmul.bf16.gmra.mxu0 %v2454
    %v4175 = vpop.f32.mrf.mxu0
    %v4176 = vadd.f32 %v4163, %v4175
    %v4177 = vpop.f32.mrf.mxu0
    %4178 = vdwg.mxu0
    %4179 = vmatpush.bf16.msra.mxu0 %v3654
    %4180 = vmatpush.bf16.msra.mxu0 %v3647
    %4181 = vmatpush.bf16.msra.mxu0 %v3640
    %4182 = vmatpush.bf16.msra.mxu0 %v3633
    %4183 = vmatpush.bf16.msra.mxu0 %v3626
    %4184 = vmatpush.bf16.msra.mxu0 %v3619
    %4185 = vmatpush.bf16.msra.mxu0 %v3612
    %4186 = vmatpush.bf16.msra.mxu0 %v3605
    %4187 = vmatmul.bf16.gmra.mxu0 %v2455
    %v4188 = vpop.f32.mrf.mxu0
    %v4189 = vadd.f32 %v4176, %v4188
    %v4190 = vpop.f32.mrf.mxu0
    %4191 = vdwg.mxu0
    %4192 = vmatpush.bf16.msra.mxu0 %v3487
    %4193 = vmatpush.bf16.msra.mxu0 %v3480
    %4194 = vmatpush.bf16.msra.mxu0 %v3473
    %4195 = vmatpush.bf16.msra.mxu0 %v3466
    %4196 = vmatpush.bf16.msra.mxu0 %v3459
    %4197 = vmatpush.bf16.msra.mxu0 %v3452
    %4198 = vmatpush.bf16.msra.mxu0 %v3445
    %4199 = vmatpush.bf16.msra.mxu0 %v3438
    %4200 = vmatmul.bf16.gmra.mxu0 %v2452
    %v4201 = vpop.f32.mrf.mxu0
    %v4202 = vadd.f32 %v2720, %v4201
    %v4203 = vpop.f32.mrf.mxu0
    %4204 = vdwg.mxu0
    %4205 = vmatpush.bf16.msra.mxu0 %v3543
    %4206 = vmatpush.bf16.msra.mxu0 %v3536
    %4207 = vmatpush.bf16.msra.mxu0 %v3529
    %4208 = vmatpush.bf16.msra.mxu0 %v3522
    %4209 = vmatpush.bf16.msra.mxu0 %v3515
    %4210 = vmatpush.bf16.msra.mxu0 %v3508
    %4211 = vmatpush.bf16.msra.mxu0 %v3501
    %4212 = vmatpush.bf16.msra.mxu0 %v3494
    %4213 = vmatmul.bf16.gmra.mxu0 %v2453
    %v4214 = vpop.f32.mrf.mxu0
    %v4215 = vadd.f32 %v4202, %v4214
    %v4216 = vpop.f32.mrf.mxu0
    %4217 = vdwg.mxu0
    %4218 = vmatpush.bf16.msra.mxu0 %v3599
    %4219 = vmatpush.bf16.msra.mxu0 %v3592
    %4220 = vmatpush.bf16.msra.mxu0 %v3585
    %4221 = vmatpush.bf16.msra.mxu0 %v3578
    %4222 = vmatpush.bf16.msra.mxu0 %v3571
    %4223 = vmatpush.bf16.msra.mxu0 %v3564
    %4224 = vmatpush.bf16.msra.mxu0 %v3557
    %4225 = vmatpush.bf16.msra.mxu0 %v3550
    %4226 = vmatmul.bf16.gmra.mxu0 %v2454
    %v4227 = vpop.f32.mrf.mxu0
    %v4228 = vadd.f32 %v4215, %v4227
    %v4229 = vpop.f32.mrf.mxu0
    %4230 = vdwg.mxu0
    %4231 = vmatpush.bf16.msra.mxu0 %v3655
    %4232 = vmatpush.bf16.msra.mxu0 %v3648
    %4233 = vmatpush.bf16.msra.mxu0 %v3641
    %4234 = vmatpush.bf16.msra.mxu0 %v3634
    %4235 = vmatpush.bf16.msra.mxu0 %v3627
    %4236 = vmatpush.bf16.msra.mxu0 %v3620
    %4237 = vmatpush.bf16.msra.mxu0 %v3613
    %4238 = vmatpush.bf16.msra.mxu0 %v3606
    %4239 = vmatmul.bf16.gmra.mxu0 %v2455
    %v4240 = vpop.f32.mrf.mxu0
    %v4241 = vadd.f32 %v4228, %v4240
    %v4242 = vpop.f32.mrf.mxu0
    %4243 = vdwg.mxu0
    %v4244 = vxor.u32 %v3929, 2147483648
    %v4245 = vxor.u32 %v3981, 2147483648
    %v4246 = vxor.u32 %v4033, 2147483648
    %v4247 = vxor.u32 %v4085, 2147483648
    %v4248 = vxor.u32 %v4137, 2147483648
    %v4249 = vxor.u32 %v4189, 2147483648
    %v4250 = vxor.u32 %v4241, 2147483648
    %v4251 = vmul.f32 %v4244, 1.442695
    %v4252 = vpow.pop %v4251
    %v4253 = vmul.f32 %v4245, 1.442695
    %v4254 = vpow.pop %v4253
    %v4255 = vmul.f32 %v4246, 1.442695
    %v4256 = vpow.pop %v4255
    %v4257 = vmul.f32 %v4247, 1.442695
    %v4258 = vpow.pop %v4257
    %v4259 = vmul.f32 %v4248, 1.442695
    %v4260 = vpow.pop %v4259
    %v4261 = vmul.f32 %v4249, 1.442695
    %v4262 = vpow.pop %v4261
    %v4263 = vmul.f32 %v4250, 1.442695
    %v4264 = vpow.pop %v4263
    %v4265 = vadd.f32 %v4252, 1.0
    %v4266 = vadd.f32 %v4254, 1.0
    %v4267 = vadd.f32 %v4256, 1.0
    %v4268 = vadd.f32 %v4258, 1.0
    %v4269 = vadd.f32 %v4260, 1.0
    %v4270 = vadd.f32 %v4262, 1.0
    %v4271 = vadd.f32 %v4264, 1.0
    %v4272 = vrcp.pop %v4265
    %v4273 = vmul.f32 %v4265, %v4272
    %v4274 = vsub.f32 1.0, %v4273
    %v4275 = vmul.f32 %v4272, %v4274
    %v4276 = vadd.f32 %v4272, %v4275
    %vm4277 = vweird.f32 %v4265
    %vm4278 = vweird.f32 %v4272
    %vm4279 = vmor %vm4277, %vm4278
    %v4280 = vsel %vm4279, %v4272, %v4276
    %v4281 = vand.u32 2147483647, %v4265
    %vm4282 = vcmp.eq.f32.partialorder %v4281, 8.507059e+37
    %v4283 = vand.u32 %v4265, 2147483648
    %v4284 = vor.u32 1.1754944e-38, %v4283
    %v4285 = vsel %vm4282, %v4284, %v4280
    %v4286 = vmul.f32 1.0, %v4285
    %v4287 = vrcp.pop %v4266
    %v4288 = vmul.f32 %v4266, %v4287
    %v4289 = vsub.f32 1.0, %v4288
    %v4290 = vmul.f32 %v4287, %v4289
    %v4291 = vadd.f32 %v4287, %v4290
    %vm4292 = vweird.f32 %v4266
    %vm4293 = vweird.f32 %v4287
    %vm4294 = vmor %vm4292, %vm4293
    %v4295 = vsel %vm4294, %v4287, %v4291
    %v4296 = vand.u32 2147483647, %v4266
    %vm4297 = vcmp.eq.f32.partialorder %v4296, 8.507059e+37
    %v4298 = vand.u32 %v4266, 2147483648
    %v4299 = vor.u32 1.1754944e-38, %v4298
    %v4300 = vsel %vm4297, %v4299, %v4295
    %v4301 = vmul.f32 1.0, %v4300
    %v4302 = vrcp.pop %v4267
    %v4303 = vmul.f32 %v4267, %v4302
    %v4304 = vsub.f32 1.0, %v4303
    %v4305 = vmul.f32 %v4302, %v4304
    %v4306 = vadd.f32 %v4302, %v4305
    %vm4307 = vweird.f32 %v4267
    %vm4308 = vweird.f32 %v4302
    %vm4309 = vmor %vm4307, %vm4308
    %v4310 = vsel %vm4309, %v4302, %v4306
    %v4311 = vand.u32 2147483647, %v4267
    %vm4312 = vcmp.eq.f32.partialorder %v4311, 8.507059e+37
    %v4313 = vand.u32 %v4267, 2147483648
    %v4314 = vor.u32 1.1754944e-38, %v4313
    %v4315 = vsel %vm4312, %v4314, %v4310
    %v4316 = vmul.f32 1.0, %v4315
    %v4317 = vrcp.pop %v4268
    %v4318 = vmul.f32 %v4268, %v4317
    %v4319 = vsub.f32 1.0, %v4318
    %v4320 = vmul.f32 %v4317, %v4319
    %v4321 = vadd.f32 %v4317, %v4320
    %vm4322 = vweird.f32 %v4268
    %vm4323 = vweird.f32 %v4317
    %vm4324 = vmor %vm4322, %vm4323
    %v4325 = vsel %vm4324, %v4317, %v4321
    %v4326 = vand.u32 2147483647, %v4268
    %vm4327 = vcmp.eq.f32.partialorder %v4326, 8.507059e+37
    %v4328 = vand.u32 %v4268, 2147483648
    %v4329 = vor.u32 1.1754944e-38, %v4328
    %v4330 = vsel %vm4327, %v4329, %v4325
    %v4331 = vmul.f32 1.0, %v4330
    %v4332 = vrcp.pop %v4269
    %v4333 = vmul.f32 %v4269, %v4332
    %v4334 = vsub.f32 1.0, %v4333
    %v4335 = vmul.f32 %v4332, %v4334
    %v4336 = vadd.f32 %v4332, %v4335
    %vm4337 = vweird.f32 %v4269
    %vm4338 = vweird.f32 %v4332
    %vm4339 = vmor %vm4337, %vm4338
    %v4340 = vsel %vm4339, %v4332, %v4336
    %v4341 = vand.u32 2147483647, %v4269
    %vm4342 = vcmp.eq.f32.partialorder %v4341, 8.507059e+37
    %v4343 = vand.u32 %v4269, 2147483648
    %v4344 = vor.u32 1.1754944e-38, %v4343
    %v4345 = vsel %vm4342, %v4344, %v4340
    %v4346 = vmul.f32 1.0, %v4345
    %v4347 = vrcp.pop %v4270
    %v4348 = vmul.f32 %v4270, %v4347
    %v4349 = vsub.f32 1.0, %v4348
    %v4350 = vmul.f32 %v4347, %v4349
    %v4351 = vadd.f32 %v4347, %v4350
    %vm4352 = vweird.f32 %v4270
    %vm4353 = vweird.f32 %v4347
    %vm4354 = vmor %vm4352, %vm4353
    %v4355 = vsel %vm4354, %v4347, %v4351
    %v4356 = vand.u32 2147483647, %v4270
    %vm4357 = vcmp.eq.f32.partialorder %v4356, 8.507059e+37
    %v4358 = vand.u32 %v4270, 2147483648
    %v4359 = vor.u32 1.1754944e-38, %v4358
    %v4360 = vsel %vm4357, %v4359, %v4355
    %v4361 = vmul.f32 1.0, %v4360
    %v4362 = vrcp.pop %v4271
    %v4363 = vmul.f32 %v4271, %v4362
    %v4364 = vsub.f32 1.0, %v4363
    %v4365 = vmul.f32 %v4362, %v4364
    %v4366 = vadd.f32 %v4362, %v4365
    %vm4367 = vweird.f32 %v4271
    %vm4368 = vweird.f32 %v4362
    %vm4369 = vmor %vm4367, %vm4368
    %v4370 = vsel %vm4369, %v4362, %v4366
    %v4371 = vand.u32 2147483647, %v4271
    %vm4372 = vcmp.eq.f32.partialorder %v4371, 8.507059e+37
    %v4373 = vand.u32 %v4271, 2147483648
    %v4374 = vor.u32 1.1754944e-38, %v4373
    %v4375 = vsel %vm4372, %v4374, %v4370
    %v4376 = vmul.f32 1.0, %v4375
    %v4377 = vpack.c.bf16 %v4301, %v4286
    %v4378 = vpack.c.bf16 %v4331, %v4316
    %v4379 = vpack.c.bf16 %v4361, %v4346
    %v4380 = vpack.c.bf16 %v4376, %v4376
    %4381 = vst [vmem:[#allocation11] sm:$0xff] %v4377
    %4382 = vst [vmem:[#allocation11 + $0x8] sm:$0xff] %v4378
    %4383 = vst [vmem:[#allocation11 + $0x10] sm:$0xff] %v4379
    %vm4384 = vcmask 125952
    %4385 = vst.msk [vmem:[#allocation11 + $0x18] sm:$0xf] %vm4384, %v4380
    // Predicated region
    $region62: #{_lambda_.1} parent=1 // pred_check
      _
    $region63: #{_lambda_.1} parent=1 // pred_check_branch
      %4387 = sbr.rel (0) target = $region65
    $region64: #{_lambda_.1} parent=1 // pred_region
      %4389 = vsyncadd [#allocation4], 0
      %s4391 = sshll.u32 [#allocation11], 4
      %s4392 = int_to_ptr.vmem [resolvable:$true] %s4391
      %s4393 = sshll.u32 %s10, 4
      %s4394 = int_to_ptr.hbm [resolvable:$true] %s4393
      %4396 = dma.vmem_to_hbm [thread:$0]  %s4392, 448, %s4394, [#allocation4]
    $region65: #{_lambda_.1} parent=1 // pred_fallthru
      _
    // Predicated region
    $region66: #{_lambda_.1} parent=1 // pred_check
      _
    $region67: #{_lambda_.1} parent=1 // pred_check_branch
      %4398 = sbr.rel (0) target = $region69
    $region68: #{_lambda_.1} parent=1 // pred_region
      _
    $region69: #{_lambda_.1} parent=1 // pred_fallthru
      _
    // Predicated region
    $region70: #{_lambda_.1} parent=1 // pred_check
      _
    $region71: #{_lambda_.1} parent=1 // pred_check_branch
      %4400 = sbr.rel (0) target = $region73
    $region72: #{_lambda_.1} parent=1 // pred_region
      %4402 = dma.done [#allocation4], 448
    $region73: #{_lambda_.1} parent=1 // pred_fallthru
      _
    // Predicated region
    $region74: #{_lambda_.1} parent=1 // pred_check
      _
    $region75: #{_lambda_.1} parent=1 // pred_check_branch
      %4404 = sbr.rel (0) target = $region77
    $region76: #{_lambda_.1} parent=1 // pred_region
      _
    $region77: #{_lambda_.1} parent=1 // pred_fallthru
      _
    %4405 = vsyncpa [#allocation3], 1
    %4406 = vsyncpa [#allocation6], 1
    %4407 = vsyncpa [#allocation9], 1
    %4408 = vsyncpa [#allocation4], 1

</llo_original>
